<compile_context>
chip_gen: v5e
topology: v5e:2x2
jax: 0.10.0
libtpu: 0.0.40
codegen_flags: <defaults>
</compile_context>

<pallas_src>
import math

import jax
import jax.numpy as jnp
from jax.experimental import pallas as pl
from jax.experimental.pallas import tpu as pltpu

SEQ_VOC = "ABCDEFGHIKLMNOPQRSTUVWXYZ"
VOCAB = len(SEQ_VOC)            # 25
D_MODEL = 64
NHEAD = 2
HEAD_DIM = D_MODEL // NHEAD     # 32
NUM_LAYERS = 4
DIM_FF = 32
EPS = 1e-5                      # nn.LayerNorm default

V_EMB_PAD = 32                  # vocab padded for the one-hot embedding matmul
V_OUT_PAD = 128                 # lane-dense logits (sliced back to VOCAB outside)


# ----------------------------- Pallas kernel --------------------------------

def _layer_norm(x, w, b):
    # PyTorch LayerNorm: biased variance over last dim; f32 math.
    mu = jnp.mean(x, axis=-1, keepdims=True)
    var = jnp.mean((x - mu) ** 2, axis=-1, keepdims=True)
    return (x - mu) * jax.lax.rsqrt(var + EPS) * w + b


def transformer_kernel(tok_ref, emb_ref, pe_ref,
                       wqkv_ref, bqkv_ref, ow_ref, ob_ref,
                       n1w_ref, n1b_ref, n2w_ref, n2b_ref,
                       l1w_ref, l1b_ref, l2w_ref, l2b_ref,
                       fnw_ref, fnb_ref, dw_ref, db_ref,
                       o_ref):
    b_tile, seq, v_pad = o_ref.shape          # (B_TILE, S, 128)
    rows = b_tile * seq
    v_emb = emb_ref.shape[0]                  # 32 (padded vocab)

    # ---- fused embedding: one_hot(tokens) @ emb_table + positional encoding
    tok = tok_ref[0]                                          # (rows, 1) int32
    iota = jax.lax.broadcasted_iota(jnp.int32, (rows, v_emb), 1)
    onehot = (tok == iota).astype(jnp.bfloat16)               # 0/1 exact in bf16
    x = jnp.dot(onehot, emb_ref[...],
                preferred_element_type=jnp.float32) + pe_ref[...]   # (rows, D) f32

    for l in range(NUM_LAYERS):
        # ---- multi-head self attention (post-norm encoder layer) ----------
        # One fused QKV matmul per layer; attention scale already folded into
        # the Q columns of wqkv/bqkv on the host.
        xb = x.astype(jnp.bfloat16)
        qkv = jnp.dot(xb, wqkv_ref[l],
                      preferred_element_type=jnp.float32) + bqkv_ref[l]   # (rows, 3D)

        # TODO(synk): for long sequences (S ~ 1k+) on v7x (64 MiB VMEM), tile
        # the score/softmax/context over key blocks (online softmax) instead
        # of materializing full (b_tile, S, S) score tensors.
        ctx = []
        for h in range(NHEAD):
            qh = qkv[:, h * HEAD_DIM:(h + 1) * HEAD_DIM]
            kh = qkv[:, D_MODEL + h * HEAD_DIM: D_MODEL + (h + 1) * HEAD_DIM]
            vh = qkv[:, 2 * D_MODEL + h * HEAD_DIM: 2 * D_MODEL + (h + 1) * HEAD_DIM]
            q3 = qh.reshape(b_tile, seq, HEAD_DIM).astype(jnp.bfloat16)
            k3 = kh.reshape(b_tile, seq, HEAD_DIM).astype(jnp.bfloat16)
            v3 = vh.reshape(b_tile, seq, HEAD_DIM).astype(jnp.bfloat16)

            s = jnp.einsum("bqd,bkd->bqk", q3, k3,
                           preferred_element_type=jnp.float32)        # (B,S,S) f32
            s = s - jnp.max(s, axis=-1, keepdims=True)
            e = jnp.exp(s)
            # approx reciprocal (~1e-3 rel err) is well inside the bf16 matmul
            # error budget; bit-exact f32 parity was intentionally given up.
            p = e * pl.reciprocal(jnp.sum(e, axis=-1, keepdims=True), approx=True)
            o3 = jnp.einsum("bqk,bkd->bqd", p.astype(jnp.bfloat16), v3,
                            preferred_element_type=jnp.float32)       # (B,S,Hd)
            ctx.append(o3)

        # merged output projection: one K=64 matmul for both heads
        o_cat = jnp.concatenate(ctx, axis=-1).reshape(rows, D_MODEL)
        attn = jnp.dot(o_cat.astype(jnp.bfloat16), ow_ref[l],
                       preferred_element_type=jnp.float32) + ob_ref[l]
        x = _layer_norm(x + attn, n1w_ref[l], n1b_ref[l])

        # ---- feed forward ---------------------------------------------------
        xb = x.astype(jnp.bfloat16)
        h1 = jnp.dot(xb, l1w_ref[l],
                     preferred_element_type=jnp.float32) + l1b_ref[l]
        h1 = jnp.maximum(h1, 0.0)                              # relu
        h2 = jnp.dot(h1.astype(jnp.bfloat16), l2w_ref[l],
                     preferred_element_type=jnp.float32) + l2b_ref[l]
        x = _layer_norm(x + h2, n2w_ref[l], n2b_ref[l])

    # ---- final encoder LayerNorm + decoder projection (lane-padded) --------
    x = _layer_norm(x, fnw_ref[...], fnb_ref[...])
    logits = jnp.dot(x.astype(jnp.bfloat16), dw_ref[...],
                     preferred_element_type=jnp.float32) + db_ref[...]
    o_ref[...] = logits.reshape(b_tile, seq, v_pad)


# ----------------------------- host-side helpers ----------------------------

def positional_encoding(seq_len, d_model):
    position = jnp.arange(seq_len, dtype=jnp.float32)[:, None]
    div_term = jnp.exp(
        jnp.arange(0, d_model, 2, dtype=jnp.float32) * (-math.log(10000.0) / d_model))
    ang = position * div_term
    pe = jnp.zeros((seq_len, d_model), jnp.float32)
    pe = pe.at[:, 0::2].set(jnp.sin(ang))
    pe = pe.at[:, 1::2].set(jnp.cos(ang))
    return pe


def init_params(key):
    """Parameters in the native PyTorch layouts of the reference module."""
    ks = jax.random.split(key, 6)

    def nrm(k, shape, scale=0.05):
        return (scale * jax.random.normal(k, shape)).astype(jnp.float32)

    L, D, FF, V = NUM_LAYERS, D_MODEL, DIM_FF, VOCAB
    return {
        "emb": nrm(ks[0], (V, D), 1.0),
        "inw": nrm(ks[1], (L, 3 * D, D)),   # in_proj_weight
        "inb": jnp.zeros((L, 3 * D), jnp.float32),
        "ow":  nrm(ks[2], (L, D, D)),       # out_proj.weight
        "ob":  jnp.zeros((L, D), jnp.float32),
        "n1w": jnp.ones((L, D), jnp.float32), "n1b": jnp.zeros((L, D), jnp.float32),
        "n2w": jnp.ones((L, D), jnp.float32), "n2b": jnp.zeros((L, D), jnp.float32),
        "l1w": nrm(ks[3], (L, FF, D)),      # linear1.weight
        "l1b": jnp.zeros((L, FF), jnp.float32),
        "l2w": nrm(ks[4], (L, D, FF)),      # linear2.weight
        "l2b": jnp.zeros((L, D), jnp.float32),
        "fnw": jnp.ones((D,), jnp.float32), "fnb": jnp.zeros((D,), jnp.float32),
        "dw":  nrm(ks[5], (V, D)),          # decoder.weight
        "db":  jnp.zeros((V,), jnp.float32),
    }


_KERNEL_WEIGHT_ORDER = ["wqkv", "bqkv", "ow", "ob",
                        "n1w", "n1b", "n2w", "n2b",
                        "l1w", "l1b", "l2w", "l2b",
                        "fnw", "fnb", "dw", "db"]


def prepare_weights(params):
    """ONE-TIME host-side layout work (call once, reuse for every forward):
    fuse in_proj into a single (D, 3D) matmul weight with the 1/sqrt(head_dim)
    scale folded into its Q columns, pre-transpose everything to x @ W form,
    pad emb/decoder tables, and cast matmul weights to bf16."""
    L, D, Kd, V = NUM_LAYERS, D_MODEL, HEAD_DIM, VOCAB
    scale = 1.0 / math.sqrt(Kd)

    # fused in_proj: qkv = x @ inw.T + inb, output columns = [Q(0:D) K(D:2D) V(2D:3D)]
    wqkv = jnp.transpose(params["inw"], (0, 2, 1))               # (L, D, 3D)
    bqkv = params["inb"][:, None, :]                             # (L, 1, 3D)
    q_scale = jnp.concatenate(
        [jnp.full((D,), scale, jnp.float32), jnp.ones((2 * D,), jnp.float32)])
    wqkv = wqkv * q_scale[None, None, :]
    bqkv = bqkv * q_scale[None, None, :]

    ow = jnp.transpose(params["ow"], (0, 2, 1))                  # (L, D, D), heads on K

    emb_pad = jnp.zeros((V_EMB_PAD, D), jnp.float32).at[:V].set(params["emb"])
    dw_pad = jnp.zeros((D, V_OUT_PAD), jnp.float32).at[:, :V].set(params["dw"].T)
    db_pad = jnp.zeros((1, V_OUT_PAD), jnp.float32).at[0, :V].set(params["db"])

    bf16 = jnp.bfloat16
    return {
        "emb": emb_pad.astype(bf16),
        "wqkv": wqkv.astype(bf16), "bqkv": bqkv,
        "ow": ow.astype(bf16), "ob": params["ob"][:, None, :],
        "n1w": params["n1w"][:, None, :], "n1b": params["n1b"][:, None, :],
        "n2w": params["n2w"][:, None, :], "n2b": params["n2b"][:, None, :],
        "l1w": params["l1w"].transpose(0, 2, 1).astype(bf16),
        "l1b": params["l1b"][:, None, :],
        "l2w": params["l2w"].transpose(0, 2, 1).astype(bf16),
        "l2b": params["l2b"][:, None, :],
        "fnw": params["fnw"][None, :], "fnb": params["fnb"][None, :],
        "dw": dw_pad.astype(bf16), "db": db_pad,
    }


def _choose_b_tile(batch, seq):
    # Target ~2048 rows per grid step (amortize the ~0.35 us/step overhead and
    # MXU fill/drain), but always keep >= 2 grid steps when batch >= 2 so both
    # v7x TensorCores receive work under "parallel" dimension_semantics.
    target_rows = 2048
    bt = max(1, min(batch, target_rows // max(seq, 1)))
    if batch >= 2:
        bt = min(bt, batch // 2)
    bt = max(bt, 1)
    while batch % bt:
        bt -= 1
    return max(bt, 1)


# ----------------------------- JAX wrapper -----------------------------------

@jax.jit
def protein_transformer_forward(tokens, prepared):
    """tokens: int32 (S, B) categorical protein sequence -> logits (S, B, VOCAB).
    `prepared` must come from prepare_weights() (computed once, outside)."""
    S, B = tokens.shape

    b_tile = _choose_b_tile(B, S)
    n_steps = B // b_tile
    rows = b_tile * S

    # Transpose only the tiny int token matrix (not float activations) and give
    # it a trailing singleton lane so the kernel needs no relayout.
    tokens_blocked = tokens.T.astype(jnp.int32).reshape(n_steps, rows, 1)
    pe_tiled = jnp.tile(positional_encoding(S, D_MODEL), (b_tile, 1))   # (rows, D)

    weights = [prepared[k] for k in _KERNEL_WEIGHT_ORDER]

    def full_spec(a):
        nd = a.ndim
        return pl.BlockSpec(a.shape, lambda b, _nd=nd: (0,) * _nd)

    out = pl.pallas_call(
        transformer_kernel,
        out_shape=jax.ShapeDtypeStruct((B, S, V_OUT_PAD), jnp.float32),
        grid=(n_steps,),
        in_specs=[pl.BlockSpec((1, rows, 1), lambda b: (b, 0, 0)),   # tokens
                  full_spec(prepared["emb"]),
                  full_spec(pe_tiled)]
                 + [full_spec(x) for x in weights],
        out_specs=pl.BlockSpec((b_tile, S, V_OUT_PAD), lambda b: (b, 0, 0)),
        compiler_params=pltpu.CompilerParams(dimension_semantics=("parallel",)),
    )(tokens_blocked, prepared["emb"], pe_tiled, *weights)

    # Slice the lane padding away BEFORE transposing (minimizes the post-kernel
    # copy), then return in the PyTorch (S, B, VOCAB) convention.
    return jnp.transpose(out[:, :, :VOCAB], (1, 0, 2))


# ----------------------------- main ------------------------------------------

if __name__ == "__main__":
    key = jax.random.PRNGKey(0)
    k_tok, k_par = jax.random.split(key)

    S, B = 8, 2
    tokens = jax.random.randint(k_tok, (S, B), 0, VOCAB, dtype=jnp.int32)
    params = init_params(k_par)
    prepared = prepare_weights(params)       # one-time host-side layout work

    logits = protein_transformer_forward(tokens, prepared)
    jax.block_until_ready(logits)

    assert logits.shape == (S, B, VOCAB), logits.shape
    assert logits.dtype == jnp.float32
    assert bool(jnp.all(jnp.isfinite(logits)))
    print("KERNEL_OK")
</pallas_src>

<mosaic_0001>
module attributes {stable_mosaic.version = 11 : i64} {
  func.func @transformer_kernel(%arg0: i32, %arg1: memref<1x8x1xi32, #tpu.memory_space<vmem>>, %arg2: memref<32x64xbf16, #tpu.memory_space<vmem>>, %arg3: memref<8x64xf32, #tpu.memory_space<vmem>>, %arg4: memref<4x64x192xbf16, #tpu.memory_space<vmem>>, %arg5: memref<4x1x192xf32, #tpu.memory_space<vmem>>, %arg6: memref<4x64x64xbf16, #tpu.memory_space<vmem>>, %arg7: memref<4x1x64xf32, #tpu.memory_space<vmem>>, %arg8: memref<4x1x64xf32, #tpu.memory_space<vmem>>, %arg9: memref<4x1x64xf32, #tpu.memory_space<vmem>>, %arg10: memref<4x1x64xf32, #tpu.memory_space<vmem>>, %arg11: memref<4x1x64xf32, #tpu.memory_space<vmem>>, %arg12: memref<4x64x32xbf16, #tpu.memory_space<vmem>>, %arg13: memref<4x1x32xf32, #tpu.memory_space<vmem>>, %arg14: memref<4x32x64xbf16, #tpu.memory_space<vmem>>, %arg15: memref<4x1x64xf32, #tpu.memory_space<vmem>>, %arg16: memref<1x64xf32, #tpu.memory_space<vmem>>, %arg17: memref<1x64xf32, #tpu.memory_space<vmem>>, %arg18: memref<64x128xbf16, #tpu.memory_space<vmem>>, %arg19: memref<1x128xf32, #tpu.memory_space<vmem>>, %arg20: memref<1x8x128xf32, #tpu.memory_space<vmem>>) attributes {dimension_semantics = [#tpu.dimension_semantics<parallel>], iteration_bounds = array<i64: 2>, scalar_prefetch = 0 : i64, scratch_operands = 0 : i64, tpu.core_type = #tpu.core_type<tc>, window_params = [{transform_indices = @transform_0, window_bounds = array<i64: 1, 8, 1>}, {pipeline_mode = #tpu.pipeline_mode<synchronous>, transform_indices = @transform_1, window_bounds = array<i64: 32, 64>}, {pipeline_mode = #tpu.pipeline_mode<synchronous>, transform_indices = @transform_2, window_bounds = array<i64: 8, 64>}, {pipeline_mode = #tpu.pipeline_mode<synchronous>, transform_indices = @transform_3, window_bounds = array<i64: 4, 64, 192>}, {pipeline_mode = #tpu.pipeline_mode<synchronous>, transform_indices = @transform_4, window_bounds = array<i64: 4, 1, 192>}, {pipeline_mode = #tpu.pipeline_mode<synchronous>, transform_indices = @transform_5, window_bounds = array<i64: 4, 64, 64>}, {pipeline_mode = #tpu.pipeline_mode<synchronous>, transform_indices = @transform_6, window_bounds = array<i64: 4, 1, 64>}, {pipeline_mode = #tpu.pipeline_mode<synchronous>, transform_indices = @transform_7, window_bounds = array<i64: 4, 1, 64>}, {pipeline_mode = #tpu.pipeline_mode<synchronous>, transform_indices = @transform_8, window_bounds = array<i64: 4, 1, 64>}, {pipeline_mode = #tpu.pipeline_mode<synchronous>, transform_indices = @transform_9, window_bounds = array<i64: 4, 1, 64>}, {pipeline_mode = #tpu.pipeline_mode<synchronous>, transform_indices = @transform_10, window_bounds = array<i64: 4, 1, 64>}, {pipeline_mode = #tpu.pipeline_mode<synchronous>, transform_indices = @transform_11, window_bounds = array<i64: 4, 64, 32>}, {pipeline_mode = #tpu.pipeline_mode<synchronous>, transform_indices = @transform_12, window_bounds = array<i64: 4, 1, 32>}, {pipeline_mode = #tpu.pipeline_mode<synchronous>, transform_indices = @transform_13, window_bounds = array<i64: 4, 32, 64>}, {pipeline_mode = #tpu.pipeline_mode<synchronous>, transform_indices = @transform_14, window_bounds = array<i64: 4, 1, 64>}, {pipeline_mode = #tpu.pipeline_mode<synchronous>, transform_indices = @transform_15, window_bounds = array<i64: 1, 64>}, {pipeline_mode = #tpu.pipeline_mode<synchronous>, transform_indices = @transform_16, window_bounds = array<i64: 1, 64>}, {pipeline_mode = #tpu.pipeline_mode<synchronous>, transform_indices = @transform_17, window_bounds = array<i64: 64, 128>}, {pipeline_mode = #tpu.pipeline_mode<synchronous>, transform_indices = @transform_18, window_bounds = array<i64: 1, 128>}, {transform_indices = @transform_19, window_bounds = array<i64: 1, 8, 128>}]} {
    %c0 = arith.constant 0 : index
    %c0_0 = arith.constant 0 : index
    %c0_1 = arith.constant 0 : index
    %0 = vector.load %arg1[%c0, %c0_0, %c0_1] : memref<1x8x1xi32, #tpu.memory_space<vmem>>, vector<1x8x1xi32>
    %1 = vector.shape_cast %0 : vector<1x8x1xi32> to vector<8x1xi32>
    %2 = tpu.iota {dimensions = array<i32: 1>} : vector<8x32xi32>
    %3 = vector.broadcast %1 : vector<8x1xi32> to vector<8x32xi32>
    %4 = arith.cmpi eq, %3, %2 : vector<8x32xi32>
    %5 = arith.extui %4 : vector<8x32xi1> to vector<8x32xi32>
    %6 = arith.sitofp %5 : vector<8x32xi32> to vector<8x32xf32>
    %7 = arith.truncf %6 : vector<8x32xf32> to vector<8x32xbf16>
    %c0_2 = arith.constant 0 : index
    %c0_3 = arith.constant 0 : index
    %8 = vector.load %arg2[%c0_2, %c0_3] : memref<32x64xbf16, #tpu.memory_space<vmem>>, vector<32x64xbf16>
    %cst = arith.constant dense<0.000000e+00> : vector<8x64xf32>
    %9 = tpu.matmul %7, %8, %cst {dimension_numbers = #tpu.dot_dimension_numbers<[1], [0], [0], [1], [0, 0, 1, 1], [], []>} : vector<8x32xbf16>, vector<32x64xbf16>, vector<8x64xf32> -> vector<8x64xf32>
    %c0_4 = arith.constant 0 : index
    %c0_5 = arith.constant 0 : index
    %10 = vector.load %arg3[%c0_4, %c0_5] : memref<8x64xf32, #tpu.memory_space<vmem>>, vector<8x64xf32>
    %11 = arith.addf %9, %10 : vector<8x64xf32>
    %12 = arith.truncf %11 : vector<8x64xf32> to vector<8x64xbf16>
    %c0_6 = arith.constant 0 : index
    %c0_7 = arith.constant 0 : index
    %c0_8 = arith.constant 0 : index
    %13 = vector.load %arg4[%c0_6, %c0_7, %c0_8] : memref<4x64x192xbf16, #tpu.memory_space<vmem>>, vector<1x64x192xbf16>
    %14 = vector.shape_cast %13 : vector<1x64x192xbf16> to vector<64x192xbf16>
    %cst_9 = arith.constant dense<0.000000e+00> : vector<8x192xf32>
    %15 = tpu.matmul %12, %14, %cst_9 {dimension_numbers = #tpu.dot_dimension_numbers<[1], [0], [0], [1], [0, 0, 1, 1], [], []>} : vector<8x64xbf16>, vector<64x192xbf16>, vector<8x192xf32> -> vector<8x192xf32>
    %c0_10 = arith.constant 0 : index
    %c0_11 = arith.constant 0 : index
    %c0_12 = arith.constant 0 : index
    %16 = vector.load %arg5[%c0_10, %c0_11, %c0_12] : memref<4x1x192xf32, #tpu.memory_space<vmem>>, vector<1x1x192xf32>
    %17 = vector.shape_cast %16 : vector<1x1x192xf32> to vector<1x192xf32>
    %18 = vector.broadcast %17 : vector<1x192xf32> to vector<8x192xf32>
    %19 = arith.addf %15, %18 : vector<8x192xf32>
    %20 = vector.extract_strided_slice %19 {offsets = [0, 0], sizes = [8, 32], strides = [1, 1]} : vector<8x192xf32> to vector<8x32xf32>
    %21 = vector.extract_strided_slice %19 {offsets = [0, 64], sizes = [8, 32], strides = [1, 1]} : vector<8x192xf32> to vector<8x32xf32>
    %22 = vector.extract_strided_slice %19 {offsets = [0, 128], sizes = [8, 32], strides = [1, 1]} : vector<8x192xf32> to vector<8x32xf32>
    %23 = vector.shape_cast %20 : vector<8x32xf32> to vector<1x8x32xf32>
    %24 = arith.truncf %23 : vector<1x8x32xf32> to vector<1x8x32xbf16>
    %25 = vector.shape_cast %21 : vector<8x32xf32> to vector<1x8x32xf32>
    %26 = arith.truncf %25 : vector<1x8x32xf32> to vector<1x8x32xbf16>
    %27 = vector.shape_cast %22 : vector<8x32xf32> to vector<1x8x32xf32>
    %28 = arith.truncf %27 : vector<1x8x32xf32> to vector<1x8x32xbf16>
    "tpu.trace_start"() <{level = 10 : i32, message = "bqd,bkd->bqk"}> : () -> ()
    %cst_13 = arith.constant dense<0.000000e+00> : vector<1x8x8xf32>
    %29 = tpu.matmul %24, %26, %cst_13 {dimension_numbers = #tpu.dot_dimension_numbers<[2], [2], [1], [1], [0, 0, 0, 1, 1, 1], [0], [0]>} : vector<1x8x32xbf16>, vector<1x8x32xbf16>, vector<1x8x8xf32> -> vector<1x8x8xf32>
    "tpu.trace_stop"() : () -> ()
    %cst_14 = arith.constant dense<0xFF800000> : vector<1x8xf32>
    %30 = vector.multi_reduction <maximumf>, %29, %cst_14 [2] : vector<1x8x8xf32> to vector<1x8xf32>
    %31 = vector.shape_cast %30 : vector<1x8xf32> to vector<1x8x1xf32>
    %32 = vector.broadcast %31 : vector<1x8x1xf32> to vector<1x8x8xf32>
    %33 = arith.subf %29, %32 : vector<1x8x8xf32>
    %34 = math.exp %33 : vector<1x8x8xf32>
    %cst_15 = arith.constant dense<0.000000e+00> : vector<1x8xf32>
    %35 = vector.multi_reduction <add>, %34, %cst_15 [2] : vector<1x8x8xf32> to vector<1x8xf32>
    %36 = vector.shape_cast %35 : vector<1x8xf32> to vector<1x8x1xf32>
    %37 = tpu.reciprocal %36 {approx = true} : vector<1x8x1xf32> -> vector<1x8x1xf32>
    %38 = vector.broadcast %37 : vector<1x8x1xf32> to vector<1x8x8xf32>
    %39 = arith.mulf %34, %38 : vector<1x8x8xf32>
    %40 = arith.truncf %39 : vector<1x8x8xf32> to vector<1x8x8xbf16>
    "tpu.trace_start"() <{level = 10 : i32, message = "bqk,bkd->bqd"}> : () -> ()
    %cst_16 = arith.constant dense<0.000000e+00> : vector<1x8x32xf32>
    %41 = tpu.matmul %40, %28, %cst_16 {dimension_numbers = #tpu.dot_dimension_numbers<[2], [1], [1], [2], [0, 0, 0, 1, 1, 2], [0], [0]>} : vector<1x8x8xbf16>, vector<1x8x32xbf16>, vector<1x8x32xf32> -> vector<1x8x32xf32>
    "tpu.trace_stop"() : () -> ()
    %42 = vector.extract_strided_slice %19 {offsets = [0, 32], sizes = [8, 32], strides = [1, 1]} : vector<8x192xf32> to vector<8x32xf32>
    %43 = vector.extract_strided_slice %19 {offsets = [0, 96], sizes = [8, 32], strides = [1, 1]} : vector<8x192xf32> to vector<8x32xf32>
    %44 = vector.extract_strided_slice %19 {offsets = [0, 160], sizes = [8, 32], strides = [1, 1]} : vector<8x192xf32> to vector<8x32xf32>
    %45 = vector.shape_cast %42 : vector<8x32xf32> to vector<1x8x32xf32>
    %46 = arith.truncf %45 : vector<1x8x32xf32> to vector<1x8x32xbf16>
    %47 = vector.shape_cast %43 : vector<8x32xf32> to vector<1x8x32xf32>
    %48 = arith.truncf %47 : vector<1x8x32xf32> to vector<1x8x32xbf16>
    %49 = vector.shape_cast %44 : vector<8x32xf32> to vector<1x8x32xf32>
    %50 = arith.truncf %49 : vector<1x8x32xf32> to vector<1x8x32xbf16>
    "tpu.trace_start"() <{level = 10 : i32, message = "bqd,bkd->bqk"}> : () -> ()
    %cst_17 = arith.constant dense<0.000000e+00> : vector<1x8x8xf32>
    %51 = tpu.matmul %46, %48, %cst_17 {dimension_numbers = #tpu.dot_dimension_numbers<[2], [2], [1], [1], [0, 0, 0, 1, 1, 1], [0], [0]>} : vector<1x8x32xbf16>, vector<1x8x32xbf16>, vector<1x8x8xf32> -> vector<1x8x8xf32>
    "tpu.trace_stop"() : () -> ()
    %cst_18 = arith.constant dense<0xFF800000> : vector<1x8xf32>
    %52 = vector.multi_reduction <maximumf>, %51, %cst_18 [2] : vector<1x8x8xf32> to vector<1x8xf32>
    %53 = vector.shape_cast %52 : vector<1x8xf32> to vector<1x8x1xf32>
    %54 = vector.broadcast %53 : vector<1x8x1xf32> to vector<1x8x8xf32>
    %55 = arith.subf %51, %54 : vector<1x8x8xf32>
    %56 = math.exp %55 : vector<1x8x8xf32>
    %cst_19 = arith.constant dense<0.000000e+00> : vector<1x8xf32>
    %57 = vector.multi_reduction <add>, %56, %cst_19 [2] : vector<1x8x8xf32> to vector<1x8xf32>
    %58 = vector.shape_cast %57 : vector<1x8xf32> to vector<1x8x1xf32>
    %59 = tpu.reciprocal %58 {approx = true} : vector<1x8x1xf32> -> vector<1x8x1xf32>
    %60 = vector.broadcast %59 : vector<1x8x1xf32> to vector<1x8x8xf32>
    %61 = arith.mulf %56, %60 : vector<1x8x8xf32>
    %62 = arith.truncf %61 : vector<1x8x8xf32> to vector<1x8x8xbf16>
    "tpu.trace_start"() <{level = 10 : i32, message = "bqk,bkd->bqd"}> : () -> ()
    %cst_20 = arith.constant dense<0.000000e+00> : vector<1x8x32xf32>
    %63 = tpu.matmul %62, %50, %cst_20 {dimension_numbers = #tpu.dot_dimension_numbers<[2], [1], [1], [2], [0, 0, 0, 1, 1, 2], [0], [0]>} : vector<1x8x8xbf16>, vector<1x8x32xbf16>, vector<1x8x32xf32> -> vector<1x8x32xf32>
    "tpu.trace_stop"() : () -> ()
    %64 = tpu.concatenate %41, %63 in 2 : vector<1x8x32xf32>, vector<1x8x32xf32> -> vector<1x8x64xf32>
    %65 = vector.shape_cast %64 : vector<1x8x64xf32> to vector<8x64xf32>
    %66 = arith.truncf %65 : vector<8x64xf32> to vector<8x64xbf16>
    %c0_21 = arith.constant 0 : index
    %c0_22 = arith.constant 0 : index
    %c0_23 = arith.constant 0 : index
    %67 = vector.load %arg6[%c0_21, %c0_22, %c0_23] : memref<4x64x64xbf16, #tpu.memory_space<vmem>>, vector<1x64x64xbf16>
    %68 = vector.shape_cast %67 : vector<1x64x64xbf16> to vector<64x64xbf16>
    %cst_24 = arith.constant dense<0.000000e+00> : vector<8x64xf32>
    %69 = tpu.matmul %66, %68, %cst_24 {dimension_numbers = #tpu.dot_dimension_numbers<[1], [0], [0], [1], [0, 0, 1, 1], [], []>} : vector<8x64xbf16>, vector<64x64xbf16>, vector<8x64xf32> -> vector<8x64xf32>
    %c0_25 = arith.constant 0 : index
    %c0_26 = arith.constant 0 : index
    %c0_27 = arith.constant 0 : index
    %70 = vector.load %arg7[%c0_25, %c0_26, %c0_27] : memref<4x1x64xf32, #tpu.memory_space<vmem>>, vector<1x1x64xf32>
    %71 = vector.shape_cast %70 : vector<1x1x64xf32> to vector<1x64xf32>
    %72 = vector.broadcast %71 : vector<1x64xf32> to vector<8x64xf32>
    %73 = arith.addf %69, %72 : vector<8x64xf32>
    %74 = arith.addf %11, %73 : vector<8x64xf32>
    %c0_28 = arith.constant 0 : index
    %c0_29 = arith.constant 0 : index
    %c0_30 = arith.constant 0 : index
    %75 = vector.load %arg8[%c0_28, %c0_29, %c0_30] : memref<4x1x64xf32, #tpu.memory_space<vmem>>, vector<1x1x64xf32>
    %76 = vector.shape_cast %75 : vector<1x1x64xf32> to vector<1x64xf32>
    %c0_31 = arith.constant 0 : index
    %c0_32 = arith.constant 0 : index
    %c0_33 = arith.constant 0 : index
    %77 = vector.load %arg9[%c0_31, %c0_32, %c0_33] : memref<4x1x64xf32, #tpu.memory_space<vmem>>, vector<1x1x64xf32>
    %78 = vector.shape_cast %77 : vector<1x1x64xf32> to vector<1x64xf32>
    %cst_34 = arith.constant dense<0.000000e+00> : vector<8xf32>
    %79 = vector.multi_reduction <add>, %74, %cst_34 [1] : vector<8x64xf32> to vector<8xf32>
    %80 = vector.shape_cast %79 : vector<8xf32> to vector<8x1xf32>
    %cst_35 = arith.constant 6.400000e+01 : f32
    %81 = vector.broadcast %cst_35 : f32 to vector<8x1xf32>
    %82 = arith.divf %80, %81 : vector<8x1xf32>
    %83 = vector.broadcast %82 : vector<8x1xf32> to vector<8x64xf32>
    %84 = arith.subf %74, %83 : vector<8x64xf32>
    %85 = arith.mulf %84, %84 : vector<8x64xf32>
    %cst_36 = arith.constant dense<0.000000e+00> : vector<8xf32>
    %86 = vector.multi_reduction <add>, %85, %cst_36 [1] : vector<8x64xf32> to vector<8xf32>
    %87 = vector.shape_cast %86 : vector<8xf32> to vector<8x1xf32>
    %cst_37 = arith.constant 6.400000e+01 : f32
    %88 = vector.broadcast %cst_37 : f32 to vector<8x1xf32>
    %89 = arith.divf %87, %88 : vector<8x1xf32>
    %90 = vector.broadcast %82 : vector<8x1xf32> to vector<8x64xf32>
    %91 = arith.subf %74, %90 : vector<8x64xf32>
    %cst_38 = arith.constant 9.99999974E-6 : f32
    %92 = vector.broadcast %cst_38 : f32 to vector<8x1xf32>
    %93 = arith.addf %89, %92 : vector<8x1xf32>
    %94 = math.rsqrt %93 : vector<8x1xf32>
    %95 = vector.broadcast %94 : vector<8x1xf32> to vector<8x64xf32>
    %96 = arith.mulf %91, %95 : vector<8x64xf32>
    %97 = vector.broadcast %76 : vector<1x64xf32> to vector<8x64xf32>
    %98 = arith.mulf %96, %97 : vector<8x64xf32>
    %99 = vector.broadcast %78 : vector<1x64xf32> to vector<8x64xf32>
    %100 = arith.addf %98, %99 : vector<8x64xf32>
    %101 = arith.truncf %100 : vector<8x64xf32> to vector<8x64xbf16>
    %c0_39 = arith.constant 0 : index
    %c0_40 = arith.constant 0 : index
    %c0_41 = arith.constant 0 : index
    %102 = vector.load %arg12[%c0_39, %c0_40, %c0_41] : memref<4x64x32xbf16, #tpu.memory_space<vmem>>, vector<1x64x32xbf16>
    %103 = vector.shape_cast %102 : vector<1x64x32xbf16> to vector<64x32xbf16>
    %cst_42 = arith.constant dense<0.000000e+00> : vector<8x32xf32>
    %104 = tpu.matmul %101, %103, %cst_42 {dimension_numbers = #tpu.dot_dimension_numbers<[1], [0], [0], [1], [0, 0, 1, 1], [], []>} : vector<8x64xbf16>, vector<64x32xbf16>, vector<8x32xf32> -> vector<8x32xf32>
    %c0_43 = arith.constant 0 : index
    %c0_44 = arith.constant 0 : index
    %c0_45 = arith.constant 0 : index
    %105 = vector.load %arg13[%c0_43, %c0_44, %c0_45] : memref<4x1x32xf32, #tpu.memory_space<vmem>>, vector<1x1x32xf32>
    %106 = vector.shape_cast %105 : vector<1x1x32xf32> to vector<1x32xf32>
    %107 = vector.broadcast %106 : vector<1x32xf32> to vector<8x32xf32>
    %108 = arith.addf %104, %107 : vector<8x32xf32>
    %cst_46 = arith.constant 0.000000e+00 : f32
    %109 = vector.broadcast %cst_46 : f32 to vector<8x32xf32>
    %110 = arith.maximumf %108, %109 : vector<8x32xf32>
    %111 = arith.truncf %110 : vector<8x32xf32> to vector<8x32xbf16>
    %c0_47 = arith.constant 0 : index
    %c0_48 = arith.constant 0 : index
    %c0_49 = arith.constant 0 : index
    %112 = vector.load %arg14[%c0_47, %c0_48, %c0_49] : memref<4x32x64xbf16, #tpu.memory_space<vmem>>, vector<1x32x64xbf16>
    %113 = vector.shape_cast %112 : vector<1x32x64xbf16> to vector<32x64xbf16>
    %cst_50 = arith.constant dense<0.000000e+00> : vector<8x64xf32>
    %114 = tpu.matmul %111, %113, %cst_50 {dimension_numbers = #tpu.dot_dimension_numbers<[1], [0], [0], [1], [0, 0, 1, 1], [], []>} : vector<8x32xbf16>, vector<32x64xbf16>, vector<8x64xf32> -> vector<8x64xf32>
    %c0_51 = arith.constant 0 : index
    %c0_52 = arith.constant 0 : index
    %c0_53 = arith.constant 0 : index
    %115 = vector.load %arg15[%c0_51, %c0_52, %c0_53] : memref<4x1x64xf32, #tpu.memory_space<vmem>>, vector<1x1x64xf32>
    %116 = vector.shape_cast %115 : vector<1x1x64xf32> to vector<1x64xf32>
    %117 = vector.broadcast %116 : vector<1x64xf32> to vector<8x64xf32>
    %118 = arith.addf %114, %117 : vector<8x64xf32>
    %119 = arith.addf %100, %118 : vector<8x64xf32>
    %c0_54 = arith.constant 0 : index
    %c0_55 = arith.constant 0 : index
    %c0_56 = arith.constant 0 : index
    %120 = vector.load %arg10[%c0_54, %c0_55, %c0_56] : memref<4x1x64xf32, #tpu.memory_space<vmem>>, vector<1x1x64xf32>
    %121 = vector.shape_cast %120 : vector<1x1x64xf32> to vector<1x64xf32>
    %c0_57 = arith.constant 0 : index
    %c0_58 = arith.constant 0 : index
    %c0_59 = arith.constant 0 : index
    %122 = vector.load %arg11[%c0_57, %c0_58, %c0_59] : memref<4x1x64xf32, #tpu.memory_space<vmem>>, vector<1x1x64xf32>
    %123 = vector.shape_cast %122 : vector<1x1x64xf32> to vector<1x64xf32>
    %cst_60 = arith.constant dense<0.000000e+00> : vector<8xf32>
    %124 = vector.multi_reduction <add>, %119, %cst_60 [1] : vector<8x64xf32> to vector<8xf32>
    %125 = vector.shape_cast %124 : vector<8xf32> to vector<8x1xf32>
    %cst_61 = arith.constant 6.400000e+01 : f32
    %126 = vector.broadcast %cst_61 : f32 to vector<8x1xf32>
    %127 = arith.divf %125, %126 : vector<8x1xf32>
    %128 = vector.broadcast %127 : vector<8x1xf32> to vector<8x64xf32>
    %129 = arith.subf %119, %128 : vector<8x64xf32>
    %130 = arith.mulf %129, %129 : vector<8x64xf32>
    %cst_62 = arith.constant dense<0.000000e+00> : vector<8xf32>
    %131 = vector.multi_reduction <add>, %130, %cst_62 [1] : vector<8x64xf32> to vector<8xf32>
    %132 = vector.shape_cast %131 : vector<8xf32> to vector<8x1xf32>
    %cst_63 = arith.constant 6.400000e+01 : f32
    %133 = vector.broadcast %cst_63 : f32 to vector<8x1xf32>
    %134 = arith.divf %132, %133 : vector<8x1xf32>
    %135 = vector.broadcast %127 : vector<8x1xf32> to vector<8x64xf32>
    %136 = arith.subf %119, %135 : vector<8x64xf32>
    %cst_64 = arith.constant 9.99999974E-6 : f32
    %137 = vector.broadcast %cst_64 : f32 to vector<8x1xf32>
    %138 = arith.addf %134, %137 : vector<8x1xf32>
    %139 = math.rsqrt %138 : vector<8x1xf32>
    %140 = vector.broadcast %139 : vector<8x1xf32> to vector<8x64xf32>
    %141 = arith.mulf %136, %140 : vector<8x64xf32>
    %142 = vector.broadcast %121 : vector<1x64xf32> to vector<8x64xf32>
    %143 = arith.mulf %141, %142 : vector<8x64xf32>
    %144 = vector.broadcast %123 : vector<1x64xf32> to vector<8x64xf32>
    %145 = arith.addf %143, %144 : vector<8x64xf32>
    %146 = arith.truncf %145 : vector<8x64xf32> to vector<8x64xbf16>
    %c1 = arith.constant 1 : index
    %c0_65 = arith.constant 0 : index
    %c0_66 = arith.constant 0 : index
    %147 = vector.load %arg4[%c1, %c0_65, %c0_66] : memref<4x64x192xbf16, #tpu.memory_space<vmem>>, vector<1x64x192xbf16>
    %148 = vector.shape_cast %147 : vector<1x64x192xbf16> to vector<64x192xbf16>
    %cst_67 = arith.constant dense<0.000000e+00> : vector<8x192xf32>
    %149 = tpu.matmul %146, %148, %cst_67 {dimension_numbers = #tpu.dot_dimension_numbers<[1], [0], [0], [1], [0, 0, 1, 1], [], []>} : vector<8x64xbf16>, vector<64x192xbf16>, vector<8x192xf32> -> vector<8x192xf32>
    %c1_68 = arith.constant 1 : index
    %c0_69 = arith.constant 0 : index
    %c0_70 = arith.constant 0 : index
    %150 = vector.load %arg5[%c1_68, %c0_69, %c0_70] : memref<4x1x192xf32, #tpu.memory_space<vmem>>, vector<1x1x192xf32>
    %151 = vector.shape_cast %150 : vector<1x1x192xf32> to vector<1x192xf32>
    %152 = vector.broadcast %151 : vector<1x192xf32> to vector<8x192xf32>
    %153 = arith.addf %149, %152 : vector<8x192xf32>
    %154 = vector.extract_strided_slice %153 {offsets = [0, 0], sizes = [8, 32], strides = [1, 1]} : vector<8x192xf32> to vector<8x32xf32>
    %155 = vector.extract_strided_slice %153 {offsets = [0, 64], sizes = [8, 32], strides = [1, 1]} : vector<8x192xf32> to vector<8x32xf32>
    %156 = vector.extract_strided_slice %153 {offsets = [0, 128], sizes = [8, 32], strides = [1, 1]} : vector<8x192xf32> to vector<8x32xf32>
    %157 = vector.shape_cast %154 : vector<8x32xf32> to vector<1x8x32xf32>
    %158 = arith.truncf %157 : vector<1x8x32xf32> to vector<1x8x32xbf16>
    %159 = vector.shape_cast %155 : vector<8x32xf32> to vector<1x8x32xf32>
    %160 = arith.truncf %159 : vector<1x8x32xf32> to vector<1x8x32xbf16>
    %161 = vector.shape_cast %156 : vector<8x32xf32> to vector<1x8x32xf32>
    %162 = arith.truncf %161 : vector<1x8x32xf32> to vector<1x8x32xbf16>
    "tpu.trace_start"() <{level = 10 : i32, message = "bqd,bkd->bqk"}> : () -> ()
    %cst_71 = arith.constant dense<0.000000e+00> : vector<1x8x8xf32>
    %163 = tpu.matmul %158, %160, %cst_71 {dimension_numbers = #tpu.dot_dimension_numbers<[2], [2], [1], [1], [0, 0, 0, 1, 1, 1], [0], [0]>} : vector<1x8x32xbf16>, vector<1x8x32xbf16>, vector<1x8x8xf32> -> vector<1x8x8xf32>
    "tpu.trace_stop"() : () -> ()
    %cst_72 = arith.constant dense<0xFF800000> : vector<1x8xf32>
    %164 = vector.multi_reduction <maximumf>, %163, %cst_72 [2] : vector<1x8x8xf32> to vector<1x8xf32>
    %165 = vector.shape_cast %164 : vector<1x8xf32> to vector<1x8x1xf32>
    %166 = vector.broadcast %165 : vector<1x8x1xf32> to vector<1x8x8xf32>
    %167 = arith.subf %163, %166 : vector<1x8x8xf32>
    %168 = math.exp %167 : vector<1x8x8xf32>
    %cst_73 = arith.constant dense<0.000000e+00> : vector<1x8xf32>
    %169 = vector.multi_reduction <add>, %168, %cst_73 [2] : vector<1x8x8xf32> to vector<1x8xf32>
    %170 = vector.shape_cast %169 : vector<1x8xf32> to vector<1x8x1xf32>
    %171 = tpu.reciprocal %170 {approx = true} : vector<1x8x1xf32> -> vector<1x8x1xf32>
    %172 = vector.broadcast %171 : vector<1x8x1xf32> to vector<1x8x8xf32>
    %173 = arith.mulf %168, %172 : vector<1x8x8xf32>
    %174 = arith.truncf %173 : vector<1x8x8xf32> to vector<1x8x8xbf16>
    "tpu.trace_start"() <{level = 10 : i32, message = "bqk,bkd->bqd"}> : () -> ()
    %cst_74 = arith.constant dense<0.000000e+00> : vector<1x8x32xf32>
    %175 = tpu.matmul %174, %162, %cst_74 {dimension_numbers = #tpu.dot_dimension_numbers<[2], [1], [1], [2], [0, 0, 0, 1, 1, 2], [0], [0]>} : vector<1x8x8xbf16>, vector<1x8x32xbf16>, vector<1x8x32xf32> -> vector<1x8x32xf32>
    "tpu.trace_stop"() : () -> ()
    %176 = vector.extract_strided_slice %153 {offsets = [0, 32], sizes = [8, 32], strides = [1, 1]} : vector<8x192xf32> to vector<8x32xf32>
    %177 = vector.extract_strided_slice %153 {offsets = [0, 96], sizes = [8, 32], strides = [1, 1]} : vector<8x192xf32> to vector<8x32xf32>
    %178 = vector.extract_strided_slice %153 {offsets = [0, 160], sizes = [8, 32], strides = [1, 1]} : vector<8x192xf32> to vector<8x32xf32>
    %179 = vector.shape_cast %176 : vector<8x32xf32> to vector<1x8x32xf32>
    %180 = arith.truncf %179 : vector<1x8x32xf32> to vector<1x8x32xbf16>
    %181 = vector.shape_cast %177 : vector<8x32xf32> to vector<1x8x32xf32>
    %182 = arith.truncf %181 : vector<1x8x32xf32> to vector<1x8x32xbf16>
    %183 = vector.shape_cast %178 : vector<8x32xf32> to vector<1x8x32xf32>
    %184 = arith.truncf %183 : vector<1x8x32xf32> to vector<1x8x32xbf16>
    "tpu.trace_start"() <{level = 10 : i32, message = "bqd,bkd->bqk"}> : () -> ()
    %cst_75 = arith.constant dense<0.000000e+00> : vector<1x8x8xf32>
    %185 = tpu.matmul %180, %182, %cst_75 {dimension_numbers = #tpu.dot_dimension_numbers<[2], [2], [1], [1], [0, 0, 0, 1, 1, 1], [0], [0]>} : vector<1x8x32xbf16>, vector<1x8x32xbf16>, vector<1x8x8xf32> -> vector<1x8x8xf32>
    "tpu.trace_stop"() : () -> ()
    %cst_76 = arith.constant dense<0xFF800000> : vector<1x8xf32>
    %186 = vector.multi_reduction <maximumf>, %185, %cst_76 [2] : vector<1x8x8xf32> to vector<1x8xf32>
    %187 = vector.shape_cast %186 : vector<1x8xf32> to vector<1x8x1xf32>
    %188 = vector.broadcast %187 : vector<1x8x1xf32> to vector<1x8x8xf32>
    %189 = arith.subf %185, %188 : vector<1x8x8xf32>
    %190 = math.exp %189 : vector<1x8x8xf32>
    %cst_77 = arith.constant dense<0.000000e+00> : vector<1x8xf32>
    %191 = vector.multi_reduction <add>, %190, %cst_77 [2] : vector<1x8x8xf32> to vector<1x8xf32>
    %192 = vector.shape_cast %191 : vector<1x8xf32> to vector<1x8x1xf32>
    %193 = tpu.reciprocal %192 {approx = true} : vector<1x8x1xf32> -> vector<1x8x1xf32>
    %194 = vector.broadcast %193 : vector<1x8x1xf32> to vector<1x8x8xf32>
    %195 = arith.mulf %190, %194 : vector<1x8x8xf32>
    %196 = arith.truncf %195 : vector<1x8x8xf32> to vector<1x8x8xbf16>
    "tpu.trace_start"() <{level = 10 : i32, message = "bqk,bkd->bqd"}> : () -> ()
    %cst_78 = arith.constant dense<0.000000e+00> : vector<1x8x32xf32>
    %197 = tpu.matmul %196, %184, %cst_78 {dimension_numbers = #tpu.dot_dimension_numbers<[2], [1], [1], [2], [0, 0, 0, 1, 1, 2], [0], [0]>} : vector<1x8x8xbf16>, vector<1x8x32xbf16>, vector<1x8x32xf32> -> vector<1x8x32xf32>
    "tpu.trace_stop"() : () -> ()
    %198 = tpu.concatenate %175, %197 in 2 : vector<1x8x32xf32>, vector<1x8x32xf32> -> vector<1x8x64xf32>
    %199 = vector.shape_cast %198 : vector<1x8x64xf32> to vector<8x64xf32>
    %200 = arith.truncf %199 : vector<8x64xf32> to vector<8x64xbf16>
    %c1_79 = arith.constant 1 : index
    %c0_80 = arith.constant 0 : index
    %c0_81 = arith.constant 0 : index
    %201 = vector.load %arg6[%c1_79, %c0_80, %c0_81] : memref<4x64x64xbf16, #tpu.memory_space<vmem>>, vector<1x64x64xbf16>
    %202 = vector.shape_cast %201 : vector<1x64x64xbf16> to vector<64x64xbf16>
    %cst_82 = arith.constant dense<0.000000e+00> : vector<8x64xf32>
    %203 = tpu.matmul %200, %202, %cst_82 {dimension_numbers = #tpu.dot_dimension_numbers<[1], [0], [0], [1], [0, 0, 1, 1], [], []>} : vector<8x64xbf16>, vector<64x64xbf16>, vector<8x64xf32> -> vector<8x64xf32>
    %c1_83 = arith.constant 1 : index
    %c0_84 = arith.constant 0 : index
    %c0_85 = arith.constant 0 : index
    %204 = vector.load %arg7[%c1_83, %c0_84, %c0_85] : memref<4x1x64xf32, #tpu.memory_space<vmem>>, vector<1x1x64xf32>
    %205 = vector.shape_cast %204 : vector<1x1x64xf32> to vector<1x64xf32>
    %206 = vector.broadcast %205 : vector<1x64xf32> to vector<8x64xf32>
    %207 = arith.addf %203, %206 : vector<8x64xf32>
    %208 = arith.addf %145, %207 : vector<8x64xf32>
    %c1_86 = arith.constant 1 : index
    %c0_87 = arith.constant 0 : index
    %c0_88 = arith.constant 0 : index
    %209 = vector.load %arg8[%c1_86, %c0_87, %c0_88] : memref<4x1x64xf32, #tpu.memory_space<vmem>>, vector<1x1x64xf32>
    %210 = vector.shape_cast %209 : vector<1x1x64xf32> to vector<1x64xf32>
    %c1_89 = arith.constant 1 : index
    %c0_90 = arith.constant 0 : index
    %c0_91 = arith.constant 0 : index
    %211 = vector.load %arg9[%c1_89, %c0_90, %c0_91] : memref<4x1x64xf32, #tpu.memory_space<vmem>>, vector<1x1x64xf32>
    %212 = vector.shape_cast %211 : vector<1x1x64xf32> to vector<1x64xf32>
    %cst_92 = arith.constant dense<0.000000e+00> : vector<8xf32>
    %213 = vector.multi_reduction <add>, %208, %cst_92 [1] : vector<8x64xf32> to vector<8xf32>
    %214 = vector.shape_cast %213 : vector<8xf32> to vector<8x1xf32>
    %cst_93 = arith.constant 6.400000e+01 : f32
    %215 = vector.broadcast %cst_93 : f32 to vector<8x1xf32>
    %216 = arith.divf %214, %215 : vector<8x1xf32>
    %217 = vector.broadcast %216 : vector<8x1xf32> to vector<8x64xf32>
    %218 = arith.subf %208, %217 : vector<8x64xf32>
    %219 = arith.mulf %218, %218 : vector<8x64xf32>
    %cst_94 = arith.constant dense<0.000000e+00> : vector<8xf32>
    %220 = vector.multi_reduction <add>, %219, %cst_94 [1] : vector<8x64xf32> to vector<8xf32>
    %221 = vector.shape_cast %220 : vector<8xf32> to vector<8x1xf32>
    %cst_95 = arith.constant 6.400000e+01 : f32
    %222 = vector.broadcast %cst_95 : f32 to vector<8x1xf32>
    %223 = arith.divf %221, %222 : vector<8x1xf32>
    %224 = vector.broadcast %216 : vector<8x1xf32> to vector<8x64xf32>
    %225 = arith.subf %208, %224 : vector<8x64xf32>
    %cst_96 = arith.constant 9.99999974E-6 : f32
    %226 = vector.broadcast %cst_96 : f32 to vector<8x1xf32>
    %227 = arith.addf %223, %226 : vector<8x1xf32>
    %228 = math.rsqrt %227 : vector<8x1xf32>
    %229 = vector.broadcast %228 : vector<8x1xf32> to vector<8x64xf32>
    %230 = arith.mulf %225, %229 : vector<8x64xf32>
    %231 = vector.broadcast %210 : vector<1x64xf32> to vector<8x64xf32>
    %232 = arith.mulf %230, %231 : vector<8x64xf32>
    %233 = vector.broadcast %212 : vector<1x64xf32> to vector<8x64xf32>
    %234 = arith.addf %232, %233 : vector<8x64xf32>
    %235 = arith.truncf %234 : vector<8x64xf32> to vector<8x64xbf16>
    %c1_97 = arith.constant 1 : index
    %c0_98 = arith.constant 0 : index
    %c0_99 = arith.constant 0 : index
    %236 = vector.load %arg12[%c1_97, %c0_98, %c0_99] : memref<4x64x32xbf16, #tpu.memory_space<vmem>>, vector<1x64x32xbf16>
    %237 = vector.shape_cast %236 : vector<1x64x32xbf16> to vector<64x32xbf16>
    %cst_100 = arith.constant dense<0.000000e+00> : vector<8x32xf32>
    %238 = tpu.matmul %235, %237, %cst_100 {dimension_numbers = #tpu.dot_dimension_numbers<[1], [0], [0], [1], [0, 0, 1, 1], [], []>} : vector<8x64xbf16>, vector<64x32xbf16>, vector<8x32xf32> -> vector<8x32xf32>
    %c1_101 = arith.constant 1 : index
    %c0_102 = arith.constant 0 : index
    %c0_103 = arith.constant 0 : index
    %239 = vector.load %arg13[%c1_101, %c0_102, %c0_103] : memref<4x1x32xf32, #tpu.memory_space<vmem>>, vector<1x1x32xf32>
    %240 = vector.shape_cast %239 : vector<1x1x32xf32> to vector<1x32xf32>
    %241 = vector.broadcast %240 : vector<1x32xf32> to vector<8x32xf32>
    %242 = arith.addf %238, %241 : vector<8x32xf32>
    %cst_104 = arith.constant 0.000000e+00 : f32
    %243 = vector.broadcast %cst_104 : f32 to vector<8x32xf32>
    %244 = arith.maximumf %242, %243 : vector<8x32xf32>
    %245 = arith.truncf %244 : vector<8x32xf32> to vector<8x32xbf16>
    %c1_105 = arith.constant 1 : index
    %c0_106 = arith.constant 0 : index
    %c0_107 = arith.constant 0 : index
    %246 = vector.load %arg14[%c1_105, %c0_106, %c0_107] : memref<4x32x64xbf16, #tpu.memory_space<vmem>>, vector<1x32x64xbf16>
    %247 = vector.shape_cast %246 : vector<1x32x64xbf16> to vector<32x64xbf16>
    %cst_108 = arith.constant dense<0.000000e+00> : vector<8x64xf32>
    %248 = tpu.matmul %245, %247, %cst_108 {dimension_numbers = #tpu.dot_dimension_numbers<[1], [0], [0], [1], [0, 0, 1, 1], [], []>} : vector<8x32xbf16>, vector<32x64xbf16>, vector<8x64xf32> -> vector<8x64xf32>
    %c1_109 = arith.constant 1 : index
    %c0_110 = arith.constant 0 : index
    %c0_111 = arith.constant 0 : index
    %249 = vector.load %arg15[%c1_109, %c0_110, %c0_111] : memref<4x1x64xf32, #tpu.memory_space<vmem>>, vector<1x1x64xf32>
    %250 = vector.shape_cast %249 : vector<1x1x64xf32> to vector<1x64xf32>
    %251 = vector.broadcast %250 : vector<1x64xf32> to vector<8x64xf32>
    %252 = arith.addf %248, %251 : vector<8x64xf32>
    %253 = arith.addf %234, %252 : vector<8x64xf32>
    %c1_112 = arith.constant 1 : index
    %c0_113 = arith.constant 0 : index
    %c0_114 = arith.constant 0 : index
    %254 = vector.load %arg10[%c1_112, %c0_113, %c0_114] : memref<4x1x64xf32, #tpu.memory_space<vmem>>, vector<1x1x64xf32>
    %255 = vector.shape_cast %254 : vector<1x1x64xf32> to vector<1x64xf32>
    %c1_115 = arith.constant 1 : index
    %c0_116 = arith.constant 0 : index
    %c0_117 = arith.constant 0 : index
    %256 = vector.load %arg11[%c1_115, %c0_116, %c0_117] : memref<4x1x64xf32, #tpu.memory_space<vmem>>, vector<1x1x64xf32>
    %257 = vector.shape_cast %256 : vector<1x1x64xf32> to vector<1x64xf32>
    %cst_118 = arith.constant dense<0.000000e+00> : vector<8xf32>
    %258 = vector.multi_reduction <add>, %253, %cst_118 [1] : vector<8x64xf32> to vector<8xf32>
    %259 = vector.shape_cast %258 : vector<8xf32> to vector<8x1xf32>
    %cst_119 = arith.constant 6.400000e+01 : f32
    %260 = vector.broadcast %cst_119 : f32 to vector<8x1xf32>
    %261 = arith.divf %259, %260 : vector<8x1xf32>
    %262 = vector.broadcast %261 : vector<8x1xf32> to vector<8x64xf32>
    %263 = arith.subf %253, %262 : vector<8x64xf32>
    %264 = arith.mulf %263, %263 : vector<8x64xf32>
    %cst_120 = arith.constant dense<0.000000e+00> : vector<8xf32>
    %265 = vector.multi_reduction <add>, %264, %cst_120 [1] : vector<8x64xf32> to vector<8xf32>
    %266 = vector.shape_cast %265 : vector<8xf32> to vector<8x1xf32>
    %cst_121 = arith.constant 6.400000e+01 : f32
    %267 = vector.broadcast %cst_121 : f32 to vector<8x1xf32>
    %268 = arith.divf %266, %267 : vector<8x1xf32>
    %269 = vector.broadcast %261 : vector<8x1xf32> to vector<8x64xf32>
    %270 = arith.subf %253, %269 : vector<8x64xf32>
    %cst_122 = arith.constant 9.99999974E-6 : f32
    %271 = vector.broadcast %cst_122 : f32 to vector<8x1xf32>
    %272 = arith.addf %268, %271 : vector<8x1xf32>
    %273 = math.rsqrt %272 : vector<8x1xf32>
    %274 = vector.broadcast %273 : vector<8x1xf32> to vector<8x64xf32>
    %275 = arith.mulf %270, %274 : vector<8x64xf32>
    %276 = vector.broadcast %255 : vector<1x64xf32> to vector<8x64xf32>
    %277 = arith.mulf %275, %276 : vector<8x64xf32>
    %278 = vector.broadcast %257 : vector<1x64xf32> to vector<8x64xf32>
    %279 = arith.addf %277, %278 : vector<8x64xf32>
    %280 = arith.truncf %279 : vector<8x64xf32> to vector<8x64xbf16>
    %c2 = arith.constant 2 : index
    %c0_123 = arith.constant 0 : index
    %c0_124 = arith.constant 0 : index
    %281 = vector.load %arg4[%c2, %c0_123, %c0_124] : memref<4x64x192xbf16, #tpu.memory_space<vmem>>, vector<1x64x192xbf16>
    %282 = vector.shape_cast %281 : vector<1x64x192xbf16> to vector<64x192xbf16>
    %cst_125 = arith.constant dense<0.000000e+00> : vector<8x192xf32>
    %283 = tpu.matmul %280, %282, %cst_125 {dimension_numbers = #tpu.dot_dimension_numbers<[1], [0], [0], [1], [0, 0, 1, 1], [], []>} : vector<8x64xbf16>, vector<64x192xbf16>, vector<8x192xf32> -> vector<8x192xf32>
    %c2_126 = arith.constant 2 : index
    %c0_127 = arith.constant 0 : index
    %c0_128 = arith.constant 0 : index
    %284 = vector.load %arg5[%c2_126, %c0_127, %c0_128] : memref<4x1x192xf32, #tpu.memory_space<vmem>>, vector<1x1x192xf32>
    %285 = vector.shape_cast %284 : vector<1x1x192xf32> to vector<1x192xf32>
    %286 = vector.broadcast %285 : vector<1x192xf32> to vector<8x192xf32>
    %287 = arith.addf %283, %286 : vector<8x192xf32>
    %288 = vector.extract_strided_slice %287 {offsets = [0, 0], sizes = [8, 32], strides = [1, 1]} : vector<8x192xf32> to vector<8x32xf32>
    %289 = vector.extract_strided_slice %287 {offsets = [0, 64], sizes = [8, 32], strides = [1, 1]} : vector<8x192xf32> to vector<8x32xf32>
    %290 = vector.extract_strided_slice %287 {offsets = [0, 128], sizes = [8, 32], strides = [1, 1]} : vector<8x192xf32> to vector<8x32xf32>
    %291 = vector.shape_cast %288 : vector<8x32xf32> to vector<1x8x32xf32>
    %292 = arith.truncf %291 : vector<1x8x32xf32> to vector<1x8x32xbf16>
    %293 = vector.shape_cast %289 : vector<8x32xf32> to vector<1x8x32xf32>
    %294 = arith.truncf %293 : vector<1x8x32xf32> to vector<1x8x32xbf16>
    %295 = vector.shape_cast %290 : vector<8x32xf32> to vector<1x8x32xf32>
    %296 = arith.truncf %295 : vector<1x8x32xf32> to vector<1x8x32xbf16>
    "tpu.trace_start"() <{level = 10 : i32, message = "bqd,bkd->bqk"}> : () -> ()
    %cst_129 = arith.constant dense<0.000000e+00> : vector<1x8x8xf32>
    %297 = tpu.matmul %292, %294, %cst_129 {dimension_numbers = #tpu.dot_dimension_numbers<[2], [2], [1], [1], [0, 0, 0, 1, 1, 1], [0], [0]>} : vector<1x8x32xbf16>, vector<1x8x32xbf16>, vector<1x8x8xf32> -> vector<1x8x8xf32>
    "tpu.trace_stop"() : () -> ()
    %cst_130 = arith.constant dense<0xFF800000> : vector<1x8xf32>
    %298 = vector.multi_reduction <maximumf>, %297, %cst_130 [2] : vector<1x8x8xf32> to vector<1x8xf32>
    %299 = vector.shape_cast %298 : vector<1x8xf32> to vector<1x8x1xf32>
    %300 = vector.broadcast %299 : vector<1x8x1xf32> to vector<1x8x8xf32>
    %301 = arith.subf %297, %300 : vector<1x8x8xf32>
    %302 = math.exp %301 : vector<1x8x8xf32>
    %cst_131 = arith.constant dense<0.000000e+00> : vector<1x8xf32>
    %303 = vector.multi_reduction <add>, %302, %cst_131 [2] : vector<1x8x8xf32> to vector<1x8xf32>
    %304 = vector.shape_cast %303 : vector<1x8xf32> to vector<1x8x1xf32>
    %305 = tpu.reciprocal %304 {approx = true} : vector<1x8x1xf32> -> vector<1x8x1xf32>
    %306 = vector.broadcast %305 : vector<1x8x1xf32> to vector<1x8x8xf32>
    %307 = arith.mulf %302, %306 : vector<1x8x8xf32>
    %308 = arith.truncf %307 : vector<1x8x8xf32> to vector<1x8x8xbf16>
    "tpu.trace_start"() <{level = 10 : i32, message = "bqk,bkd->bqd"}> : () -> ()
    %cst_132 = arith.constant dense<0.000000e+00> : vector<1x8x32xf32>
    %309 = tpu.matmul %308, %296, %cst_132 {dimension_numbers = #tpu.dot_dimension_numbers<[2], [1], [1], [2], [0, 0, 0, 1, 1, 2], [0], [0]>} : vector<1x8x8xbf16>, vector<1x8x32xbf16>, vector<1x8x32xf32> -> vector<1x8x32xf32>
    "tpu.trace_stop"() : () -> ()
    %310 = vector.extract_strided_slice %287 {offsets = [0, 32], sizes = [8, 32], strides = [1, 1]} : vector<8x192xf32> to vector<8x32xf32>
    %311 = vector.extract_strided_slice %287 {offsets = [0, 96], sizes = [8, 32], strides = [1, 1]} : vector<8x192xf32> to vector<8x32xf32>
    %312 = vector.extract_strided_slice %287 {offsets = [0, 160], sizes = [8, 32], strides = [1, 1]} : vector<8x192xf32> to vector<8x32xf32>
    %313 = vector.shape_cast %310 : vector<8x32xf32> to vector<1x8x32xf32>
    %314 = arith.truncf %313 : vector<1x8x32xf32> to vector<1x8x32xbf16>
    %315 = vector.shape_cast %311 : vector<8x32xf32> to vector<1x8x32xf32>
    %316 = arith.truncf %315 : vector<1x8x32xf32> to vector<1x8x32xbf16>
    %317 = vector.shape_cast %312 : vector<8x32xf32> to vector<1x8x32xf32>
    %318 = arith.truncf %317 : vector<1x8x32xf32> to vector<1x8x32xbf16>
    "tpu.trace_start"() <{level = 10 : i32, message = "bqd,bkd->bqk"}> : () -> ()
    %cst_133 = arith.constant dense<0.000000e+00> : vector<1x8x8xf32>
    %319 = tpu.matmul %314, %316, %cst_133 {dimension_numbers = #tpu.dot_dimension_numbers<[2], [2], [1], [1], [0, 0, 0, 1, 1, 1], [0], [0]>} : vector<1x8x32xbf16>, vector<1x8x32xbf16>, vector<1x8x8xf32> -> vector<1x8x8xf32>
    "tpu.trace_stop"() : () -> ()
    %cst_134 = arith.constant dense<0xFF800000> : vector<1x8xf32>
    %320 = vector.multi_reduction <maximumf>, %319, %cst_134 [2] : vector<1x8x8xf32> to vector<1x8xf32>
    %321 = vector.shape_cast %320 : vector<1x8xf32> to vector<1x8x1xf32>
    %322 = vector.broadcast %321 : vector<1x8x1xf32> to vector<1x8x8xf32>
    %323 = arith.subf %319, %322 : vector<1x8x8xf32>
    %324 = math.exp %323 : vector<1x8x8xf32>
    %cst_135 = arith.constant dense<0.000000e+00> : vector<1x8xf32>
    %325 = vector.multi_reduction <add>, %324, %cst_135 [2] : vector<1x8x8xf32> to vector<1x8xf32>
    %326 = vector.shape_cast %325 : vector<1x8xf32> to vector<1x8x1xf32>
    %327 = tpu.reciprocal %326 {approx = true} : vector<1x8x1xf32> -> vector<1x8x1xf32>
    %328 = vector.broadcast %327 : vector<1x8x1xf32> to vector<1x8x8xf32>
    %329 = arith.mulf %324, %328 : vector<1x8x8xf32>
    %330 = arith.truncf %329 : vector<1x8x8xf32> to vector<1x8x8xbf16>
    "tpu.trace_start"() <{level = 10 : i32, message = "bqk,bkd->bqd"}> : () -> ()
    %cst_136 = arith.constant dense<0.000000e+00> : vector<1x8x32xf32>
    %331 = tpu.matmul %330, %318, %cst_136 {dimension_numbers = #tpu.dot_dimension_numbers<[2], [1], [1], [2], [0, 0, 0, 1, 1, 2], [0], [0]>} : vector<1x8x8xbf16>, vector<1x8x32xbf16>, vector<1x8x32xf32> -> vector<1x8x32xf32>
    "tpu.trace_stop"() : () -> ()
    %332 = tpu.concatenate %309, %331 in 2 : vector<1x8x32xf32>, vector<1x8x32xf32> -> vector<1x8x64xf32>
    %333 = vector.shape_cast %332 : vector<1x8x64xf32> to vector<8x64xf32>
    %334 = arith.truncf %333 : vector<8x64xf32> to vector<8x64xbf16>
    %c2_137 = arith.constant 2 : index
    %c0_138 = arith.constant 0 : index
    %c0_139 = arith.constant 0 : index
    %335 = vector.load %arg6[%c2_137, %c0_138, %c0_139] : memref<4x64x64xbf16, #tpu.memory_space<vmem>>, vector<1x64x64xbf16>
    %336 = vector.shape_cast %335 : vector<1x64x64xbf16> to vector<64x64xbf16>
    %cst_140 = arith.constant dense<0.000000e+00> : vector<8x64xf32>
    %337 = tpu.matmul %334, %336, %cst_140 {dimension_numbers = #tpu.dot_dimension_numbers<[1], [0], [0], [1], [0, 0, 1, 1], [], []>} : vector<8x64xbf16>, vector<64x64xbf16>, vector<8x64xf32> -> vector<8x64xf32>
    %c2_141 = arith.constant 2 : index
    %c0_142 = arith.constant 0 : index
    %c0_143 = arith.constant 0 : index
    %338 = vector.load %arg7[%c2_141, %c0_142, %c0_143] : memref<4x1x64xf32, #tpu.memory_space<vmem>>, vector<1x1x64xf32>
    %339 = vector.shape_cast %338 : vector<1x1x64xf32> to vector<1x64xf32>
    %340 = vector.broadcast %339 : vector<1x64xf32> to vector<8x64xf32>
    %341 = arith.addf %337, %340 : vector<8x64xf32>
    %342 = arith.addf %279, %341 : vector<8x64xf32>
    %c2_144 = arith.constant 2 : index
    %c0_145 = arith.constant 0 : index
    %c0_146 = arith.constant 0 : index
    %343 = vector.load %arg8[%c2_144, %c0_145, %c0_146] : memref<4x1x64xf32, #tpu.memory_space<vmem>>, vector<1x1x64xf32>
    %344 = vector.shape_cast %343 : vector<1x1x64xf32> to vector<1x64xf32>
    %c2_147 = arith.constant 2 : index
    %c0_148 = arith.constant 0 : index
    %c0_149 = arith.constant 0 : index
    %345 = vector.load %arg9[%c2_147, %c0_148, %c0_149] : memref<4x1x64xf32, #tpu.memory_space<vmem>>, vector<1x1x64xf32>
    %346 = vector.shape_cast %345 : vector<1x1x64xf32> to vector<1x64xf32>
    %cst_150 = arith.constant dense<0.000000e+00> : vector<8xf32>
    %347 = vector.multi_reduction <add>, %342, %cst_150 [1] : vector<8x64xf32> to vector<8xf32>
    %348 = vector.shape_cast %347 : vector<8xf32> to vector<8x1xf32>
    %cst_151 = arith.constant 6.400000e+01 : f32
    %349 = vector.broadcast %cst_151 : f32 to vector<8x1xf32>
    %350 = arith.divf %348, %349 : vector<8x1xf32>
    %351 = vector.broadcast %350 : vector<8x1xf32> to vector<8x64xf32>
    %352 = arith.subf %342, %351 : vector<8x64xf32>
    %353 = arith.mulf %352, %352 : vector<8x64xf32>
    %cst_152 = arith.constant dense<0.000000e+00> : vector<8xf32>
    %354 = vector.multi_reduction <add>, %353, %cst_152 [1] : vector<8x64xf32> to vector<8xf32>
    %355 = vector.shape_cast %354 : vector<8xf32> to vector<8x1xf32>
    %cst_153 = arith.constant 6.400000e+01 : f32
    %356 = vector.broadcast %cst_153 : f32 to vector<8x1xf32>
    %357 = arith.divf %355, %356 : vector<8x1xf32>
    %358 = vector.broadcast %350 : vector<8x1xf32> to vector<8x64xf32>
    %359 = arith.subf %342, %358 : vector<8x64xf32>
    %cst_154 = arith.constant 9.99999974E-6 : f32
    %360 = vector.broadcast %cst_154 : f32 to vector<8x1xf32>
    %361 = arith.addf %357, %360 : vector<8x1xf32>
    %362 = math.rsqrt %361 : vector<8x1xf32>
    %363 = vector.broadcast %362 : vector<8x1xf32> to vector<8x64xf32>
    %364 = arith.mulf %359, %363 : vector<8x64xf32>
    %365 = vector.broadcast %344 : vector<1x64xf32> to vector<8x64xf32>
    %366 = arith.mulf %364, %365 : vector<8x64xf32>
    %367 = vector.broadcast %346 : vector<1x64xf32> to vector<8x64xf32>
    %368 = arith.addf %366, %367 : vector<8x64xf32>
    %369 = arith.truncf %368 : vector<8x64xf32> to vector<8x64xbf16>
    %c2_155 = arith.constant 2 : index
    %c0_156 = arith.constant 0 : index
    %c0_157 = arith.constant 0 : index
    %370 = vector.load %arg12[%c2_155, %c0_156, %c0_157] : memref<4x64x32xbf16, #tpu.memory_space<vmem>>, vector<1x64x32xbf16>
    %371 = vector.shape_cast %370 : vector<1x64x32xbf16> to vector<64x32xbf16>
    %cst_158 = arith.constant dense<0.000000e+00> : vector<8x32xf32>
    %372 = tpu.matmul %369, %371, %cst_158 {dimension_numbers = #tpu.dot_dimension_numbers<[1], [0], [0], [1], [0, 0, 1, 1], [], []>} : vector<8x64xbf16>, vector<64x32xbf16>, vector<8x32xf32> -> vector<8x32xf32>
    %c2_159 = arith.constant 2 : index
    %c0_160 = arith.constant 0 : index
    %c0_161 = arith.constant 0 : index
    %373 = vector.load %arg13[%c2_159, %c0_160, %c0_161] : memref<4x1x32xf32, #tpu.memory_space<vmem>>, vector<1x1x32xf32>
    %374 = vector.shape_cast %373 : vector<1x1x32xf32> to vector<1x32xf32>
    %375 = vector.broadcast %374 : vector<1x32xf32> to vector<8x32xf32>
    %376 = arith.addf %372, %375 : vector<8x32xf32>
    %cst_162 = arith.constant 0.000000e+00 : f32
    %377 = vector.broadcast %cst_162 : f32 to vector<8x32xf32>
    %378 = arith.maximumf %376, %377 : vector<8x32xf32>
    %379 = arith.truncf %378 : vector<8x32xf32> to vector<8x32xbf16>
    %c2_163 = arith.constant 2 : index
    %c0_164 = arith.constant 0 : index
    %c0_165 = arith.constant 0 : index
    %380 = vector.load %arg14[%c2_163, %c0_164, %c0_165] : memref<4x32x64xbf16, #tpu.memory_space<vmem>>, vector<1x32x64xbf16>
    %381 = vector.shape_cast %380 : vector<1x32x64xbf16> to vector<32x64xbf16>
    %cst_166 = arith.constant dense<0.000000e+00> : vector<8x64xf32>
    %382 = tpu.matmul %379, %381, %cst_166 {dimension_numbers = #tpu.dot_dimension_numbers<[1], [0], [0], [1], [0, 0, 1, 1], [], []>} : vector<8x32xbf16>, vector<32x64xbf16>, vector<8x64xf32> -> vector<8x64xf32>
    %c2_167 = arith.constant 2 : index
    %c0_168 = arith.constant 0 : index
    %c0_169 = arith.constant 0 : index
    %383 = vector.load %arg15[%c2_167, %c0_168, %c0_169] : memref<4x1x64xf32, #tpu.memory_space<vmem>>, vector<1x1x64xf32>
    %384 = vector.shape_cast %383 : vector<1x1x64xf32> to vector<1x64xf32>
    %385 = vector.broadcast %384 : vector<1x64xf32> to vector<8x64xf32>
    %386 = arith.addf %382, %385 : vector<8x64xf32>
    %387 = arith.addf %368, %386 : vector<8x64xf32>
    %c2_170 = arith.constant 2 : index
    %c0_171 = arith.constant 0 : index
    %c0_172 = arith.constant 0 : index
    %388 = vector.load %arg10[%c2_170, %c0_171, %c0_172] : memref<4x1x64xf32, #tpu.memory_space<vmem>>, vector<1x1x64xf32>
    %389 = vector.shape_cast %388 : vector<1x1x64xf32> to vector<1x64xf32>
    %c2_173 = arith.constant 2 : index
    %c0_174 = arith.constant 0 : index
    %c0_175 = arith.constant 0 : index
    %390 = vector.load %arg11[%c2_173, %c0_174, %c0_175] : memref<4x1x64xf32, #tpu.memory_space<vmem>>, vector<1x1x64xf32>
    %391 = vector.shape_cast %390 : vector<1x1x64xf32> to vector<1x64xf32>
    %cst_176 = arith.constant dense<0.000000e+00> : vector<8xf32>
    %392 = vector.multi_reduction <add>, %387, %cst_176 [1] : vector<8x64xf32> to vector<8xf32>
    %393 = vector.shape_cast %392 : vector<8xf32> to vector<8x1xf32>
    %cst_177 = arith.constant 6.400000e+01 : f32
    %394 = vector.broadcast %cst_177 : f32 to vector<8x1xf32>
    %395 = arith.divf %393, %394 : vector<8x1xf32>
    %396 = vector.broadcast %395 : vector<8x1xf32> to vector<8x64xf32>
    %397 = arith.subf %387, %396 : vector<8x64xf32>
    %398 = arith.mulf %397, %397 : vector<8x64xf32>
    %cst_178 = arith.constant dense<0.000000e+00> : vector<8xf32>
    %399 = vector.multi_reduction <add>, %398, %cst_178 [1] : vector<8x64xf32> to vector<8xf32>
    %400 = vector.shape_cast %399 : vector<8xf32> to vector<8x1xf32>
    %cst_179 = arith.constant 6.400000e+01 : f32
    %401 = vector.broadcast %cst_179 : f32 to vector<8x1xf32>
    %402 = arith.divf %400, %401 : vector<8x1xf32>
    %403 = vector.broadcast %395 : vector<8x1xf32> to vector<8x64xf32>
    %404 = arith.subf %387, %403 : vector<8x64xf32>
    %cst_180 = arith.constant 9.99999974E-6 : f32
    %405 = vector.broadcast %cst_180 : f32 to vector<8x1xf32>
    %406 = arith.addf %402, %405 : vector<8x1xf32>
    %407 = math.rsqrt %406 : vector<8x1xf32>
    %408 = vector.broadcast %407 : vector<8x1xf32> to vector<8x64xf32>
    %409 = arith.mulf %404, %408 : vector<8x64xf32>
    %410 = vector.broadcast %389 : vector<1x64xf32> to vector<8x64xf32>
    %411 = arith.mulf %409, %410 : vector<8x64xf32>
    %412 = vector.broadcast %391 : vector<1x64xf32> to vector<8x64xf32>
    %413 = arith.addf %411, %412 : vector<8x64xf32>
    %414 = arith.truncf %413 : vector<8x64xf32> to vector<8x64xbf16>
    %c3 = arith.constant 3 : index
    %c0_181 = arith.constant 0 : index
    %c0_182 = arith.constant 0 : index
    %415 = vector.load %arg4[%c3, %c0_181, %c0_182] : memref<4x64x192xbf16, #tpu.memory_space<vmem>>, vector<1x64x192xbf16>
    %416 = vector.shape_cast %415 : vector<1x64x192xbf16> to vector<64x192xbf16>
    %cst_183 = arith.constant dense<0.000000e+00> : vector<8x192xf32>
    %417 = tpu.matmul %414, %416, %cst_183 {dimension_numbers = #tpu.dot_dimension_numbers<[1], [0], [0], [1], [0, 0, 1, 1], [], []>} : vector<8x64xbf16>, vector<64x192xbf16>, vector<8x192xf32> -> vector<8x192xf32>
    %c3_184 = arith.constant 3 : index
    %c0_185 = arith.constant 0 : index
    %c0_186 = arith.constant 0 : index
    %418 = vector.load %arg5[%c3_184, %c0_185, %c0_186] : memref<4x1x192xf32, #tpu.memory_space<vmem>>, vector<1x1x192xf32>
    %419 = vector.shape_cast %418 : vector<1x1x192xf32> to vector<1x192xf32>
    %420 = vector.broadcast %419 : vector<1x192xf32> to vector<8x192xf32>
    %421 = arith.addf %417, %420 : vector<8x192xf32>
    %422 = vector.extract_strided_slice %421 {offsets = [0, 0], sizes = [8, 32], strides = [1, 1]} : vector<8x192xf32> to vector<8x32xf32>
    %423 = vector.extract_strided_slice %421 {offsets = [0, 64], sizes = [8, 32], strides = [1, 1]} : vector<8x192xf32> to vector<8x32xf32>
    %424 = vector.extract_strided_slice %421 {offsets = [0, 128], sizes = [8, 32], strides = [1, 1]} : vector<8x192xf32> to vector<8x32xf32>
    %425 = vector.shape_cast %422 : vector<8x32xf32> to vector<1x8x32xf32>
    %426 = arith.truncf %425 : vector<1x8x32xf32> to vector<1x8x32xbf16>
    %427 = vector.shape_cast %423 : vector<8x32xf32> to vector<1x8x32xf32>
    %428 = arith.truncf %427 : vector<1x8x32xf32> to vector<1x8x32xbf16>
    %429 = vector.shape_cast %424 : vector<8x32xf32> to vector<1x8x32xf32>
    %430 = arith.truncf %429 : vector<1x8x32xf32> to vector<1x8x32xbf16>
    "tpu.trace_start"() <{level = 10 : i32, message = "bqd,bkd->bqk"}> : () -> ()
    %cst_187 = arith.constant dense<0.000000e+00> : vector<1x8x8xf32>
    %431 = tpu.matmul %426, %428, %cst_187 {dimension_numbers = #tpu.dot_dimension_numbers<[2], [2], [1], [1], [0, 0, 0, 1, 1, 1], [0], [0]>} : vector<1x8x32xbf16>, vector<1x8x32xbf16>, vector<1x8x8xf32> -> vector<1x8x8xf32>
    "tpu.trace_stop"() : () -> ()
    %cst_188 = arith.constant dense<0xFF800000> : vector<1x8xf32>
    %432 = vector.multi_reduction <maximumf>, %431, %cst_188 [2] : vector<1x8x8xf32> to vector<1x8xf32>
    %433 = vector.shape_cast %432 : vector<1x8xf32> to vector<1x8x1xf32>
    %434 = vector.broadcast %433 : vector<1x8x1xf32> to vector<1x8x8xf32>
    %435 = arith.subf %431, %434 : vector<1x8x8xf32>
    %436 = math.exp %435 : vector<1x8x8xf32>
    %cst_189 = arith.constant dense<0.000000e+00> : vector<1x8xf32>
    %437 = vector.multi_reduction <add>, %436, %cst_189 [2] : vector<1x8x8xf32> to vector<1x8xf32>
    %438 = vector.shape_cast %437 : vector<1x8xf32> to vector<1x8x1xf32>
    %439 = tpu.reciprocal %438 {approx = true} : vector<1x8x1xf32> -> vector<1x8x1xf32>
    %440 = vector.broadcast %439 : vector<1x8x1xf32> to vector<1x8x8xf32>
    %441 = arith.mulf %436, %440 : vector<1x8x8xf32>
    %442 = arith.truncf %441 : vector<1x8x8xf32> to vector<1x8x8xbf16>
    "tpu.trace_start"() <{level = 10 : i32, message = "bqk,bkd->bqd"}> : () -> ()
    %cst_190 = arith.constant dense<0.000000e+00> : vector<1x8x32xf32>
    %443 = tpu.matmul %442, %430, %cst_190 {dimension_numbers = #tpu.dot_dimension_numbers<[2], [1], [1], [2], [0, 0, 0, 1, 1, 2], [0], [0]>} : vector<1x8x8xbf16>, vector<1x8x32xbf16>, vector<1x8x32xf32> -> vector<1x8x32xf32>
    "tpu.trace_stop"() : () -> ()
    %444 = vector.extract_strided_slice %421 {offsets = [0, 32], sizes = [8, 32], strides = [1, 1]} : vector<8x192xf32> to vector<8x32xf32>
    %445 = vector.extract_strided_slice %421 {offsets = [0, 96], sizes = [8, 32], strides = [1, 1]} : vector<8x192xf32> to vector<8x32xf32>
    %446 = vector.extract_strided_slice %421 {offsets = [0, 160], sizes = [8, 32], strides = [1, 1]} : vector<8x192xf32> to vector<8x32xf32>
    %447 = vector.shape_cast %444 : vector<8x32xf32> to vector<1x8x32xf32>
    %448 = arith.truncf %447 : vector<1x8x32xf32> to vector<1x8x32xbf16>
    %449 = vector.shape_cast %445 : vector<8x32xf32> to vector<1x8x32xf32>
    %450 = arith.truncf %449 : vector<1x8x32xf32> to vector<1x8x32xbf16>
    %451 = vector.shape_cast %446 : vector<8x32xf32> to vector<1x8x32xf32>
    %452 = arith.truncf %451 : vector<1x8x32xf32> to vector<1x8x32xbf16>
    "tpu.trace_start"() <{level = 10 : i32, message = "bqd,bkd->bqk"}> : () -> ()
    %cst_191 = arith.constant dense<0.000000e+00> : vector<1x8x8xf32>
    %453 = tpu.matmul %448, %450, %cst_191 {dimension_numbers = #tpu.dot_dimension_numbers<[2], [2], [1], [1], [0, 0, 0, 1, 1, 1], [0], [0]>} : vector<1x8x32xbf16>, vector<1x8x32xbf16>, vector<1x8x8xf32> -> vector<1x8x8xf32>
    "tpu.trace_stop"() : () -> ()
    %cst_192 = arith.constant dense<0xFF800000> : vector<1x8xf32>
    %454 = vector.multi_reduction <maximumf>, %453, %cst_192 [2] : vector<1x8x8xf32> to vector<1x8xf32>
    %455 = vector.shape_cast %454 : vector<1x8xf32> to vector<1x8x1xf32>
    %456 = vector.broadcast %455 : vector<1x8x1xf32> to vector<1x8x8xf32>
    %457 = arith.subf %453, %456 : vector<1x8x8xf32>
    %458 = math.exp %457 : vector<1x8x8xf32>
    %cst_193 = arith.constant dense<0.000000e+00> : vector<1x8xf32>
    %459 = vector.multi_reduction <add>, %458, %cst_193 [2] : vector<1x8x8xf32> to vector<1x8xf32>
    %460 = vector.shape_cast %459 : vector<1x8xf32> to vector<1x8x1xf32>
    %461 = tpu.reciprocal %460 {approx = true} : vector<1x8x1xf32> -> vector<1x8x1xf32>
    %462 = vector.broadcast %461 : vector<1x8x1xf32> to vector<1x8x8xf32>
    %463 = arith.mulf %458, %462 : vector<1x8x8xf32>
    %464 = arith.truncf %463 : vector<1x8x8xf32> to vector<1x8x8xbf16>
    "tpu.trace_start"() <{level = 10 : i32, message = "bqk,bkd->bqd"}> : () -> ()
    %cst_194 = arith.constant dense<0.000000e+00> : vector<1x8x32xf32>
    %465 = tpu.matmul %464, %452, %cst_194 {dimension_numbers = #tpu.dot_dimension_numbers<[2], [1], [1], [2], [0, 0, 0, 1, 1, 2], [0], [0]>} : vector<1x8x8xbf16>, vector<1x8x32xbf16>, vector<1x8x32xf32> -> vector<1x8x32xf32>
    "tpu.trace_stop"() : () -> ()
    %466 = tpu.concatenate %443, %465 in 2 : vector<1x8x32xf32>, vector<1x8x32xf32> -> vector<1x8x64xf32>
    %467 = vector.shape_cast %466 : vector<1x8x64xf32> to vector<8x64xf32>
    %468 = arith.truncf %467 : vector<8x64xf32> to vector<8x64xbf16>
    %c3_195 = arith.constant 3 : index
    %c0_196 = arith.constant 0 : index
    %c0_197 = arith.constant 0 : index
    %469 = vector.load %arg6[%c3_195, %c0_196, %c0_197] : memref<4x64x64xbf16, #tpu.memory_space<vmem>>, vector<1x64x64xbf16>
    %470 = vector.shape_cast %469 : vector<1x64x64xbf16> to vector<64x64xbf16>
    %cst_198 = arith.constant dense<0.000000e+00> : vector<8x64xf32>
    %471 = tpu.matmul %468, %470, %cst_198 {dimension_numbers = #tpu.dot_dimension_numbers<[1], [0], [0], [1], [0, 0, 1, 1], [], []>} : vector<8x64xbf16>, vector<64x64xbf16>, vector<8x64xf32> -> vector<8x64xf32>
    %c3_199 = arith.constant 3 : index
    %c0_200 = arith.constant 0 : index
    %c0_201 = arith.constant 0 : index
    %472 = vector.load %arg7[%c3_199, %c0_200, %c0_201] : memref<4x1x64xf32, #tpu.memory_space<vmem>>, vector<1x1x64xf32>
    %473 = vector.shape_cast %472 : vector<1x1x64xf32> to vector<1x64xf32>
    %474 = vector.broadcast %473 : vector<1x64xf32> to vector<8x64xf32>
    %475 = arith.addf %471, %474 : vector<8x64xf32>
    %476 = arith.addf %413, %475 : vector<8x64xf32>
    %c3_202 = arith.constant 3 : index
    %c0_203 = arith.constant 0 : index
    %c0_204 = arith.constant 0 : index
    %477 = vector.load %arg8[%c3_202, %c0_203, %c0_204] : memref<4x1x64xf32, #tpu.memory_space<vmem>>, vector<1x1x64xf32>
    %478 = vector.shape_cast %477 : vector<1x1x64xf32> to vector<1x64xf32>
    %c3_205 = arith.constant 3 : index
    %c0_206 = arith.constant 0 : index
    %c0_207 = arith.constant 0 : index
    %479 = vector.load %arg9[%c3_205, %c0_206, %c0_207] : memref<4x1x64xf32, #tpu.memory_space<vmem>>, vector<1x1x64xf32>
    %480 = vector.shape_cast %479 : vector<1x1x64xf32> to vector<1x64xf32>
    %cst_208 = arith.constant dense<0.000000e+00> : vector<8xf32>
    %481 = vector.multi_reduction <add>, %476, %cst_208 [1] : vector<8x64xf32> to vector<8xf32>
    %482 = vector.shape_cast %481 : vector<8xf32> to vector<8x1xf32>
    %cst_209 = arith.constant 6.400000e+01 : f32
    %483 = vector.broadcast %cst_209 : f32 to vector<8x1xf32>
    %484 = arith.divf %482, %483 : vector<8x1xf32>
    %485 = vector.broadcast %484 : vector<8x1xf32> to vector<8x64xf32>
    %486 = arith.subf %476, %485 : vector<8x64xf32>
    %487 = arith.mulf %486, %486 : vector<8x64xf32>
    %cst_210 = arith.constant dense<0.000000e+00> : vector<8xf32>
    %488 = vector.multi_reduction <add>, %487, %cst_210 [1] : vector<8x64xf32> to vector<8xf32>
    %489 = vector.shape_cast %488 : vector<8xf32> to vector<8x1xf32>
    %cst_211 = arith.constant 6.400000e+01 : f32
    %490 = vector.broadcast %cst_211 : f32 to vector<8x1xf32>
    %491 = arith.divf %489, %490 : vector<8x1xf32>
    %492 = vector.broadcast %484 : vector<8x1xf32> to vector<8x64xf32>
    %493 = arith.subf %476, %492 : vector<8x64xf32>
    %cst_212 = arith.constant 9.99999974E-6 : f32
    %494 = vector.broadcast %cst_212 : f32 to vector<8x1xf32>
    %495 = arith.addf %491, %494 : vector<8x1xf32>
    %496 = math.rsqrt %495 : vector<8x1xf32>
    %497 = vector.broadcast %496 : vector<8x1xf32> to vector<8x64xf32>
    %498 = arith.mulf %493, %497 : vector<8x64xf32>
    %499 = vector.broadcast %478 : vector<1x64xf32> to vector<8x64xf32>
    %500 = arith.mulf %498, %499 : vector<8x64xf32>
    %501 = vector.broadcast %480 : vector<1x64xf32> to vector<8x64xf32>
    %502 = arith.addf %500, %501 : vector<8x64xf32>
    %503 = arith.truncf %502 : vector<8x64xf32> to vector<8x64xbf16>
    %c3_213 = arith.constant 3 : index
    %c0_214 = arith.constant 0 : index
    %c0_215 = arith.constant 0 : index
    %504 = vector.load %arg12[%c3_213, %c0_214, %c0_215] : memref<4x64x32xbf16, #tpu.memory_space<vmem>>, vector<1x64x32xbf16>
    %505 = vector.shape_cast %504 : vector<1x64x32xbf16> to vector<64x32xbf16>
    %cst_216 = arith.constant dense<0.000000e+00> : vector<8x32xf32>
    %506 = tpu.matmul %503, %505, %cst_216 {dimension_numbers = #tpu.dot_dimension_numbers<[1], [0], [0], [1], [0, 0, 1, 1], [], []>} : vector<8x64xbf16>, vector<64x32xbf16>, vector<8x32xf32> -> vector<8x32xf32>
    %c3_217 = arith.constant 3 : index
    %c0_218 = arith.constant 0 : index
    %c0_219 = arith.constant 0 : index
    %507 = vector.load %arg13[%c3_217, %c0_218, %c0_219] : memref<4x1x32xf32, #tpu.memory_space<vmem>>, vector<1x1x32xf32>
    %508 = vector.shape_cast %507 : vector<1x1x32xf32> to vector<1x32xf32>
    %509 = vector.broadcast %508 : vector<1x32xf32> to vector<8x32xf32>
    %510 = arith.addf %506, %509 : vector<8x32xf32>
    %cst_220 = arith.constant 0.000000e+00 : f32
    %511 = vector.broadcast %cst_220 : f32 to vector<8x32xf32>
    %512 = arith.maximumf %510, %511 : vector<8x32xf32>
    %513 = arith.truncf %512 : vector<8x32xf32> to vector<8x32xbf16>
    %c3_221 = arith.constant 3 : index
    %c0_222 = arith.constant 0 : index
    %c0_223 = arith.constant 0 : index
    %514 = vector.load %arg14[%c3_221, %c0_222, %c0_223] : memref<4x32x64xbf16, #tpu.memory_space<vmem>>, vector<1x32x64xbf16>
    %515 = vector.shape_cast %514 : vector<1x32x64xbf16> to vector<32x64xbf16>
    %cst_224 = arith.constant dense<0.000000e+00> : vector<8x64xf32>
    %516 = tpu.matmul %513, %515, %cst_224 {dimension_numbers = #tpu.dot_dimension_numbers<[1], [0], [0], [1], [0, 0, 1, 1], [], []>} : vector<8x32xbf16>, vector<32x64xbf16>, vector<8x64xf32> -> vector<8x64xf32>
    %c3_225 = arith.constant 3 : index
    %c0_226 = arith.constant 0 : index
    %c0_227 = arith.constant 0 : index
    %517 = vector.load %arg15[%c3_225, %c0_226, %c0_227] : memref<4x1x64xf32, #tpu.memory_space<vmem>>, vector<1x1x64xf32>
    %518 = vector.shape_cast %517 : vector<1x1x64xf32> to vector<1x64xf32>
    %519 = vector.broadcast %518 : vector<1x64xf32> to vector<8x64xf32>
    %520 = arith.addf %516, %519 : vector<8x64xf32>
    %521 = arith.addf %502, %520 : vector<8x64xf32>
    %c3_228 = arith.constant 3 : index
    %c0_229 = arith.constant 0 : index
    %c0_230 = arith.constant 0 : index
    %522 = vector.load %arg10[%c3_228, %c0_229, %c0_230] : memref<4x1x64xf32, #tpu.memory_space<vmem>>, vector<1x1x64xf32>
    %523 = vector.shape_cast %522 : vector<1x1x64xf32> to vector<1x64xf32>
    %c3_231 = arith.constant 3 : index
    %c0_232 = arith.constant 0 : index
    %c0_233 = arith.constant 0 : index
    %524 = vector.load %arg11[%c3_231, %c0_232, %c0_233] : memref<4x1x64xf32, #tpu.memory_space<vmem>>, vector<1x1x64xf32>
    %525 = vector.shape_cast %524 : vector<1x1x64xf32> to vector<1x64xf32>
    %cst_234 = arith.constant dense<0.000000e+00> : vector<8xf32>
    %526 = vector.multi_reduction <add>, %521, %cst_234 [1] : vector<8x64xf32> to vector<8xf32>
    %527 = vector.shape_cast %526 : vector<8xf32> to vector<8x1xf32>
    %cst_235 = arith.constant 6.400000e+01 : f32
    %528 = vector.broadcast %cst_235 : f32 to vector<8x1xf32>
    %529 = arith.divf %527, %528 : vector<8x1xf32>
    %530 = vector.broadcast %529 : vector<8x1xf32> to vector<8x64xf32>
    %531 = arith.subf %521, %530 : vector<8x64xf32>
    %532 = arith.mulf %531, %531 : vector<8x64xf32>
    %cst_236 = arith.constant dense<0.000000e+00> : vector<8xf32>
    %533 = vector.multi_reduction <add>, %532, %cst_236 [1] : vector<8x64xf32> to vector<8xf32>
    %534 = vector.shape_cast %533 : vector<8xf32> to vector<8x1xf32>
    %cst_237 = arith.constant 6.400000e+01 : f32
    %535 = vector.broadcast %cst_237 : f32 to vector<8x1xf32>
    %536 = arith.divf %534, %535 : vector<8x1xf32>
    %537 = vector.broadcast %529 : vector<8x1xf32> to vector<8x64xf32>
    %538 = arith.subf %521, %537 : vector<8x64xf32>
    %cst_238 = arith.constant 9.99999974E-6 : f32
    %539 = vector.broadcast %cst_238 : f32 to vector<8x1xf32>
    %540 = arith.addf %536, %539 : vector<8x1xf32>
    %541 = math.rsqrt %540 : vector<8x1xf32>
    %542 = vector.broadcast %541 : vector<8x1xf32> to vector<8x64xf32>
    %543 = arith.mulf %538, %542 : vector<8x64xf32>
    %544 = vector.broadcast %523 : vector<1x64xf32> to vector<8x64xf32>
    %545 = arith.mulf %543, %544 : vector<8x64xf32>
    %546 = vector.broadcast %525 : vector<1x64xf32> to vector<8x64xf32>
    %547 = arith.addf %545, %546 : vector<8x64xf32>
    %c0_239 = arith.constant 0 : index
    %c0_240 = arith.constant 0 : index
    %548 = vector.load %arg16[%c0_239, %c0_240] : memref<1x64xf32, #tpu.memory_space<vmem>>, vector<1x64xf32>
    %c0_241 = arith.constant 0 : index
    %c0_242 = arith.constant 0 : index
    %549 = vector.load %arg17[%c0_241, %c0_242] : memref<1x64xf32, #tpu.memory_space<vmem>>, vector<1x64xf32>
    %cst_243 = arith.constant dense<0.000000e+00> : vector<8xf32>
    %550 = vector.multi_reduction <add>, %547, %cst_243 [1] : vector<8x64xf32> to vector<8xf32>
    %551 = vector.shape_cast %550 : vector<8xf32> to vector<8x1xf32>
    %cst_244 = arith.constant 6.400000e+01 : f32
    %552 = vector.broadcast %cst_244 : f32 to vector<8x1xf32>
    %553 = arith.divf %551, %552 : vector<8x1xf32>
    %554 = vector.broadcast %553 : vector<8x1xf32> to vector<8x64xf32>
    %555 = arith.subf %547, %554 : vector<8x64xf32>
    %556 = arith.mulf %555, %555 : vector<8x64xf32>
    %cst_245 = arith.constant dense<0.000000e+00> : vector<8xf32>
    %557 = vector.multi_reduction <add>, %556, %cst_245 [1] : vector<8x64xf32> to vector<8xf32>
    %558 = vector.shape_cast %557 : vector<8xf32> to vector<8x1xf32>
    %cst_246 = arith.constant 6.400000e+01 : f32
    %559 = vector.broadcast %cst_246 : f32 to vector<8x1xf32>
    %560 = arith.divf %558, %559 : vector<8x1xf32>
    %561 = vector.broadcast %553 : vector<8x1xf32> to vector<8x64xf32>
    %562 = arith.subf %547, %561 : vector<8x64xf32>
    %cst_247 = arith.constant 9.99999974E-6 : f32
    %563 = vector.broadcast %cst_247 : f32 to vector<8x1xf32>
    %564 = arith.addf %560, %563 : vector<8x1xf32>
    %565 = math.rsqrt %564 : vector<8x1xf32>
    %566 = vector.broadcast %565 : vector<8x1xf32> to vector<8x64xf32>
    %567 = arith.mulf %562, %566 : vector<8x64xf32>
    %568 = vector.broadcast %548 : vector<1x64xf32> to vector<8x64xf32>
    %569 = arith.mulf %567, %568 : vector<8x64xf32>
    %570 = vector.broadcast %549 : vector<1x64xf32> to vector<8x64xf32>
    %571 = arith.addf %569, %570 : vector<8x64xf32>
    %572 = arith.truncf %571 : vector<8x64xf32> to vector<8x64xbf16>
    %c0_248 = arith.constant 0 : index
    %c0_249 = arith.constant 0 : index
    %573 = vector.load %arg18[%c0_248, %c0_249] : memref<64x128xbf16, #tpu.memory_space<vmem>>, vector<64x128xbf16>
    %cst_250 = arith.constant dense<0.000000e+00> : vector<8x128xf32>
    %574 = tpu.matmul %572, %573, %cst_250 {dimension_numbers = #tpu.dot_dimension_numbers<[1], [0], [0], [1], [0, 0, 1, 1], [], []>} : vector<8x64xbf16>, vector<64x128xbf16>, vector<8x128xf32> -> vector<8x128xf32>
    %c0_251 = arith.constant 0 : index
    %c0_252 = arith.constant 0 : index
    %575 = vector.load %arg19[%c0_251, %c0_252] : memref<1x128xf32, #tpu.memory_space<vmem>>, vector<1x128xf32>
    %576 = vector.broadcast %575 : vector<1x128xf32> to vector<8x128xf32>
    %577 = arith.addf %574, %576 : vector<8x128xf32>
    %578 = vector.shape_cast %577 : vector<8x128xf32> to vector<1x8x128xf32>
    %c0_253 = arith.constant 0 : index
    %c0_254 = arith.constant 0 : index
    %c0_255 = arith.constant 0 : index
    %579 = vector.load %arg20[%c0_253, %c0_254, %c0_255] : memref<1x8x128xf32, #tpu.memory_space<vmem>>, vector<1x8x128xf32>
    tpu.vector_store %arg20[%c0_253, %c0_254, %c0_255], %578 {strides = array<i32>} : memref<1x8x128xf32, #tpu.memory_space<vmem>>, vector<1x8x128xf32>,
    return
  }
  func.func @transform_0(%arg0: i32) -> (i32, i32, i32) {
    %c0_i32 = arith.constant 0 : i32
    %c0_i32_0 = arith.constant 0 : i32
    %c0_i32_1 = arith.constant 0 : i32
    return %arg0, %c0_i32, %c0_i32_0 : i32, i32, i32
  }
  func.func @transform_1(%arg0: i32) -> (i32, i32) {
    %c0_i32 = arith.constant 0 : i32
    %c0_i32_0 = arith.constant 0 : i32
    %c0_i32_1 = arith.constant 0 : i32
    return %c0_i32, %c0_i32_0 : i32, i32
  }
  func.func @transform_2(%arg0: i32) -> (i32, i32) {
    %c0_i32 = arith.constant 0 : i32
    %c0_i32_0 = arith.constant 0 : i32
    %c0_i32_1 = arith.constant 0 : i32
    return %c0_i32, %c0_i32_0 : i32, i32
  }
  func.func @transform_3(%arg0: i32) -> (i32, i32, i32) {
    %c0_i32 = arith.constant 0 : i32
    %c0_i32_0 = arith.constant 0 : i32
    %c0_i32_1 = arith.constant 0 : i32
    %c0_i32_2 = arith.constant 0 : i32
    return %c0_i32, %c0_i32_0, %c0_i32_1 : i32, i32, i32
  }
  func.func @transform_4(%arg0: i32) -> (i32, i32, i32) {
    %c0_i32 = arith.constant 0 : i32
    %c0_i32_0 = arith.constant 0 : i32
    %c0_i32_1 = arith.constant 0 : i32
    %c0_i32_2 = arith.constant 0 : i32
    return %c0_i32, %c0_i32_0, %c0_i32_1 : i32, i32, i32
  }
  func.func @transform_5(%arg0: i32) -> (i32, i32, i32) {
    %c0_i32 = arith.constant 0 : i32
    %c0_i32_0 = arith.constant 0 : i32
    %c0_i32_1 = arith.constant 0 : i32
    %c0_i32_2 = arith.constant 0 : i32
    return %c0_i32, %c0_i32_0, %c0_i32_1 : i32, i32, i32
  }
  func.func @transform_6(%arg0: i32) -> (i32, i32, i32) {
    %c0_i32 = arith.constant 0 : i32
    %c0_i32_0 = arith.constant 0 : i32
    %c0_i32_1 = arith.constant 0 : i32
    %c0_i32_2 = arith.constant 0 : i32
    return %c0_i32, %c0_i32_0, %c0_i32_1 : i32, i32, i32
  }
  func.func @transform_7(%arg0: i32) -> (i32, i32, i32) {
    %c0_i32 = arith.constant 0 : i32
    %c0_i32_0 = arith.constant 0 : i32
    %c0_i32_1 = arith.constant 0 : i32
    %c0_i32_2 = arith.constant 0 : i32
    return %c0_i32, %c0_i32_0, %c0_i32_1 : i32, i32, i32
  }
  func.func @transform_8(%arg0: i32) -> (i32, i32, i32) {
    %c0_i32 = arith.constant 0 : i32
    %c0_i32_0 = arith.constant 0 : i32
    %c0_i32_1 = arith.constant 0 : i32
    %c0_i32_2 = arith.constant 0 : i32
    return %c0_i32, %c0_i32_0, %c0_i32_1 : i32, i32, i32
  }
  func.func @transform_9(%arg0: i32) -> (i32, i32, i32) {
    %c0_i32 = arith.constant 0 : i32
    %c0_i32_0 = arith.constant 0 : i32
    %c0_i32_1 = arith.constant 0 : i32
    %c0_i32_2 = arith.constant 0 : i32
    return %c0_i32, %c0_i32_0, %c0_i32_1 : i32, i32, i32
  }
  func.func @transform_10(%arg0: i32) -> (i32, i32, i32) {
    %c0_i32 = arith.constant 0 : i32
    %c0_i32_0 = arith.constant 0 : i32
    %c0_i32_1 = arith.constant 0 : i32
    %c0_i32_2 = arith.constant 0 : i32
    return %c0_i32, %c0_i32_0, %c0_i32_1 : i32, i32, i32
  }
  func.func @transform_11(%arg0: i32) -> (i32, i32, i32) {
    %c0_i32 = arith.constant 0 : i32
    %c0_i32_0 = arith.constant 0 : i32
    %c0_i32_1 = arith.constant 0 : i32
    %c0_i32_2 = arith.constant 0 : i32
    return %c0_i32, %c0_i32_0, %c0_i32_1 : i32, i32, i32
  }
  func.func @transform_12(%arg0: i32) -> (i32, i32, i32) {
    %c0_i32 = arith.constant 0 : i32
    %c0_i32_0 = arith.constant 0 : i32
    %c0_i32_1 = arith.constant 0 : i32
    %c0_i32_2 = arith.constant 0 : i32
    return %c0_i32, %c0_i32_0, %c0_i32_1 : i32, i32, i32
  }
  func.func @transform_13(%arg0: i32) -> (i32, i32, i32) {
    %c0_i32 = arith.constant 0 : i32
    %c0_i32_0 = arith.constant 0 : i32
    %c0_i32_1 = arith.constant 0 : i32
    %c0_i32_2 = arith.constant 0 : i32
    return %c0_i32, %c0_i32_0, %c0_i32_1 : i32, i32, i32
  }
  func.func @transform_14(%arg0: i32) -> (i32, i32, i32) {
    %c0_i32 = arith.constant 0 : i32
    %c0_i32_0 = arith.constant 0 : i32
    %c0_i32_1 = arith.constant 0 : i32
    %c0_i32_2 = arith.constant 0 : i32
    return %c0_i32, %c0_i32_0, %c0_i32_1 : i32, i32, i32
  }
  func.func @transform_15(%arg0: i32) -> (i32, i32) {
    %c0_i32 = arith.constant 0 : i32
    %c0_i32_0 = arith.constant 0 : i32
    %c0_i32_1 = arith.constant 0 : i32
    return %c0_i32, %c0_i32_0 : i32, i32
  }
  func.func @transform_16(%arg0: i32) -> (i32, i32) {
    %c0_i32 = arith.constant 0 : i32
    %c0_i32_0 = arith.constant 0 : i32
    %c0_i32_1 = arith.constant 0 : i32
    return %c0_i32, %c0_i32_0 : i32, i32
  }
  func.func @transform_17(%arg0: i32) -> (i32, i32) {
    %c0_i32 = arith.constant 0 : i32
    %c0_i32_0 = arith.constant 0 : i32
    %c0_i32_1 = arith.constant 0 : i32
    return %c0_i32, %c0_i32_0 : i32, i32
  }
  func.func @transform_18(%arg0: i32) -> (i32, i32) {
    %c0_i32 = arith.constant 0 : i32
    %c0_i32_0 = arith.constant 0 : i32
    %c0_i32_1 = arith.constant 0 : i32
    return %c0_i32, %c0_i32_0 : i32, i32
  }
  func.func @transform_19(%arg0: i32) -> (i32, i32, i32) {
    %c0_i32 = arith.constant 0 : i32
    %c0_i32_0 = arith.constant 0 : i32
    %c0_i32_1 = arith.constant 0 : i32
    return %arg0, %c0_i32, %c0_i32_0 : i32, i32, i32
  }
}

</mosaic_0001>

<llo_original>
// kernel: protein_transformer_forward.1
$region0: #{protein_transformer_forward.1}
  #allocation0 [shape = 'u32[]', space=smem, size = 0x4, offset = 0x4, fixed_abs, tag = 'smem constant byte address 0x4 - core index']
  #allocation1 [shape = 'u32[72,128]{1,0:T(1,128)}', space=vmem, size = 0x9000, scoped, tag = 'internal scratch']
  %s0 = inlined_call_operand.vmem [shape: s32[2,8,1], index: 0, kind: input, shape index: {}]
  %s1 = inlined_call_operand.vmem [shape: bf16[32,64], index: 1, kind: input, shape index: {}]
  %s2 = inlined_call_operand.vmem [shape: f32[8,64], index: 2, kind: input, shape index: {}]
  %s3 = inlined_call_operand.vmem [shape: bf16[4,64,192], index: 3, kind: input, shape index: {}]
  %s4 = inlined_call_operand.vmem [shape: f32[4,1,192], index: 4, kind: input, shape index: {}]
  %s5 = inlined_call_operand.hbm [shape: bf16[4,64,64], index: 5, kind: input, shape index: {}]
  %s6 = inlined_call_operand.vmem [shape: f32[4,1,64], index: 6, kind: input, shape index: {}]
  %s7 = inlined_call_operand.vmem [shape: f32[4,1,64], index: 7, kind: input, shape index: {}]
  %s8 = inlined_call_operand.vmem [shape: f32[4,1,64], index: 8, kind: input, shape index: {}]
  %s9 = inlined_call_operand.vmem [shape: f32[4,1,64], index: 9, kind: input, shape index: {}]
  %s10 = inlined_call_operand.hbm [shape: f32[4,1,64], index: 10, kind: input, shape index: {}]
  %s11 = inlined_call_operand.vmem [shape: bf16[4,64,32], index: 11, kind: input, shape index: {}]
  %s12 = inlined_call_operand.hbm [shape: f32[4,1,32], index: 12, kind: input, shape index: {}]
  %s13 = inlined_call_operand.vmem [shape: bf16[4,32,64], index: 13, kind: input, shape index: {}]
  %s14 = inlined_call_operand.hbm [shape: f32[4,1,64], index: 14, kind: input, shape index: {}]
  %s15 = inlined_call_operand.vmem [shape: f32[1,64], index: 15, kind: input, shape index: {}]
  %s16 = inlined_call_operand.hbm [shape: f32[1,64], index: 16, kind: input, shape index: {}]
  %s17 = inlined_call_operand.hbm [shape: bf16[64,128], index: 17, kind: input, shape index: {}]
  %s18 = inlined_call_operand.hbm [shape: f32[1,128], index: 18, kind: input, shape index: {}]
  %s19 = inlined_call_operand.vmem [shape: f32[2,8,128], index: 19, kind: output, shape index: {}]
  %s20 = sld [smem:[#allocation0]]
  $region137: #{protein_transformer_forward.1} parent=0
    _
  %s22 = ssub.s32 1, %s20
  %s23 = scalar_select 0, %s22, %s20
  $region1: #{protein_transformer_forward.1} parent=0
    #allocation2 [shape = 'u8[65536]{0}', space=vmem, size = 0x10000, scoped, tag = 'input window, operand 5, single buffered']
    #allocation3 [shape = 's32[2]{0}', space=sflag, size = 0x8, scoped, tag = 'scoped memory for protein_transformer_forward.1']
    #allocation4 [shape = 'u8[2048]{0}', space=vmem, size = 0x800, scoped, tag = 'input window, operand 10, single buffered']
    #allocation5 [shape = 's32[1]{0}', space=sflag, size = 0x4, scoped, tag = 'scoped memory for protein_transformer_forward.1']
    #allocation6 [shape = 'u8[2048]{0}', space=vmem, size = 0x800, scoped, tag = 'input window, operand 12, single buffered']
    #allocation7 [shape = 'u8[2048]{0}', space=vmem, size = 0x800, scoped, tag = 'input window, operand 14, single buffered']
    #allocation8 [shape = 's32[1]{0}', space=sflag, size = 0x4, scoped, tag = 'scoped memory for protein_transformer_forward.1']
    #allocation9 [shape = 'u8[512]{0}', space=vmem, size = 0x400, scoped, tag = 'input window, operand 16, single buffered']
    #allocation10 [shape = 'u8[16384]{0}', space=vmem, size = 0x4000, scoped, tag = 'input window, operand 17, single buffered']
    #allocation11 [shape = 's32[1]{0}', space=sflag, size = 0x4, scoped, tag = 'scoped memory for protein_transformer_forward.1']
    #allocation12 [shape = 'u8[512]{0}', space=vmem, size = 0x400, scoped, tag = 'input window, operand 18, single buffered']
    %24 = vsyncpa [#allocation3], 0
    %25 = vsyncpa [#allocation5], 0
    %26 = vsyncpa [#allocation8], 0
    %27 = vsyncpa [#allocation11], 0
    loop: start=0, step=1, limit=4
    $region2: #{protein_transformer_forward.1} parent=1 // loop_pre_header
      _
    $region3: #{protein_transformer_forward.1} parent=1 // loop_header
      %s29 = sphi 0, %s33
      %p30 = scmp.ge.s32.totalorder %s29, 4
      %s39 = sphi 0, %s41
      %s42 = sphi 0, %s39
      %s43 = sphi 0, %s42
      %s59 = sphi 0, %s43
      %s63 = sphi 0, %s63
      %s65 = sphi 0, %s63
      %s66 = sphi 0, %s65
      %s80 = sphi 0, %s66
      %s84 = sphi 0, %s84
      %s86 = sphi 0, %s84
      %s87 = sphi 0, %s86
      %s101 = sphi 0, %s87
      %s105 = sphi 0, %s105
      %s107 = sphi 0, %s105
      %s108 = sphi 0, %s107
      %s122 = sphi 0, %s108
      %s126 = sphi 0, %s126
      %s128 = sphi 0, %s126
      %s129 = sphi 0, %s128
      %s143 = sphi 0, %s129
      %s147 = sphi 0, %s147
      %s149 = sphi 0, %s147
      %s150 = sphi 0, %s149
      %s164 = sphi 0, %s150
      %s168 = sphi 0, %s168
      %s170 = sphi 0, %s168
      %s171 = sphi 0, %s170
      %s185 = sphi 0, %s171
      %s189 = sphi 0, %s189
      %s191 = sphi 0, %s189
      %s192 = sphi 0, %s191
      %s206 = sphi 0, %s192
      %s210 = sphi 0, %s210
      %s212 = sphi 0, %s210
      %s213 = sphi 0, %s212
      %s227 = sphi 0, %s213
      %s231 = sphi 0, %s231
      %s233 = sphi 0, %s231
      %s234 = sphi 0, %s233
      %s248 = sphi 0, %s234
      %s252 = sphi 0, %s252
      %s254 = sphi 0, %s252
      %s255 = sphi 0, %s254
      %s269 = sphi 0, %s255
      %s273 = sphi 0, %s273
      %s275 = sphi 0, %s273
      %s276 = sphi 0, %s275
      %s290 = sphi 0, %s276
      %s294 = sphi 0, %s294
      %s296 = sphi 0, %s294
      %s297 = sphi 0, %s296
      %s311 = sphi 0, %s297
      %s315 = sphi 0, %s315
      %s317 = sphi 0, %s315
      %s318 = sphi 0, %s317
      %s332 = sphi 0, %s318
      %s336 = sphi 0, %s336
      %s338 = sphi 0, %s336
      %s339 = sphi 0, %s338
      %s353 = sphi 0, %s339
      %s357 = sphi 0, %s357
      %s359 = sphi 0, %s357
      %s360 = sphi 0, %s359
      %s374 = sphi 0, %s360
      %s378 = sphi 0, %s378
      %s380 = sphi 0, %s378
      %s381 = sphi 0, %s380
      %s395 = sphi 0, %s381
      %s399 = sphi 0, %s399
      %s401 = sphi 0, %s399
      %s402 = sphi 0, %s401
      %s416 = sphi 0, %s402
      %s420 = sphi 0, %s420
      %s422 = sphi 0, %s420
      %s423 = sphi 0, %s422
      %s437 = sphi 0, %s423
      %s443 = sphi 0, %s445
      %s446 = sphi 0, %s443
      %s447 = sphi 0, %s446
      %s463 = sphi 0, %s447
    $region4: #{protein_transformer_forward.1} parent=1 // loop_header_branch
      %32 = sbr.rel (%p30) target = $region8
    $region5: #{protein_transformer_forward.1} parent=1 // loop_body
      %s34 = ssub.s32 %s29, 1
      %s35 = ssub.s32 %s29, 2
      %s36 = sadd.s32 %s29, 1
      %s37 = ssub.s32 %s29, %s36
      %p38 = scmp.eq.s32.totalorder %s37, 0
      %s40 = sadd.s32 %s39, 1
      %s41 = scalar_select %p38, %s39, %s40
      %p44 = pneg %p38
      %p45 = scmp.eq.s32.totalorder %s29, 1
      %p46 = por %p44, %p45
      %p47 = scmp.ne.s32.totalorder %s39, %s42
      %p48 = scmp.eq.s32.totalorder %s29, 0
      %p49 = por %p47, %p48
      %p50 = scmp.ne.s32.totalorder %s39, %s42
      %p51 = scmp.eq.s32.totalorder %s34, 1
      %p52 = por %p50, %p51
      %p53 = scmp.ne.s32.totalorder %s42, %s43
      %p54 = scmp.eq.s32.totalorder %s34, 0
      %p55 = por %p53, %p54
      %p56 = scmp.ne.s32.totalorder %s42, %s43
      %p57 = scmp.eq.s32.totalorder %s35, 1
      %p58 = por %p56, %p57
      %p60 = scmp.ne.s32.totalorder %s43, %s59
      %p61 = scmp.eq.s32.totalorder %s35, 0
      %p62 = por %p60, %p61
      %s64 = sadd.s32 %s63, 1
      %p67 = scmp.eq.s32.totalorder %s29, 1
      %p68 = scmp.ne.s32.totalorder %s63, %s65
      %p69 = scmp.eq.s32.totalorder %s29, 0
      %p70 = por %p68, %p69
      %p71 = scmp.ne.s32.totalorder %s63, %s65
      %p72 = scmp.eq.s32.totalorder %s34, 1
      %p73 = por %p71, %p72
      %p74 = scmp.ne.s32.totalorder %s65, %s66
      %p75 = scmp.eq.s32.totalorder %s34, 0
      %p76 = por %p74, %p75
      %p77 = scmp.ne.s32.totalorder %s65, %s66
      %p78 = scmp.eq.s32.totalorder %s35, 1
      %p79 = por %p77, %p78
      %p81 = scmp.ne.s32.totalorder %s66, %s80
      %p82 = scmp.eq.s32.totalorder %s35, 0
      %p83 = por %p81, %p82
      %s85 = sadd.s32 %s84, 1
      %p88 = scmp.eq.s32.totalorder %s29, 1
      %p89 = scmp.ne.s32.totalorder %s84, %s86
      %p90 = scmp.eq.s32.totalorder %s29, 0
      %p91 = por %p89, %p90
      %p92 = scmp.ne.s32.totalorder %s84, %s86
      %p93 = scmp.eq.s32.totalorder %s34, 1
      %p94 = por %p92, %p93
      %p95 = scmp.ne.s32.totalorder %s86, %s87
      %p96 = scmp.eq.s32.totalorder %s34, 0
      %p97 = por %p95, %p96
      %p98 = scmp.ne.s32.totalorder %s86, %s87
      %p99 = scmp.eq.s32.totalorder %s35, 1
      %p100 = por %p98, %p99
      %p102 = scmp.ne.s32.totalorder %s87, %s101
      %p103 = scmp.eq.s32.totalorder %s35, 0
      %p104 = por %p102, %p103
      %s106 = sadd.s32 %s105, 1
      %p109 = scmp.eq.s32.totalorder %s29, 1
      %p110 = scmp.ne.s32.totalorder %s105, %s107
      %p111 = scmp.eq.s32.totalorder %s29, 0
      %p112 = por %p110, %p111
      %p113 = scmp.ne.s32.totalorder %s105, %s107
      %p114 = scmp.eq.s32.totalorder %s34, 1
      %p115 = por %p113, %p114
      %p116 = scmp.ne.s32.totalorder %s107, %s108
      %p117 = scmp.eq.s32.totalorder %s34, 0
      %p118 = por %p116, %p117
      %p119 = scmp.ne.s32.totalorder %s107, %s108
      %p120 = scmp.eq.s32.totalorder %s35, 1
      %p121 = por %p119, %p120
      %p123 = scmp.ne.s32.totalorder %s108, %s122
      %p124 = scmp.eq.s32.totalorder %s35, 0
      %p125 = por %p123, %p124
      %s127 = sadd.s32 %s126, 1
      %p130 = scmp.eq.s32.totalorder %s29, 1
      %p131 = scmp.ne.s32.totalorder %s126, %s128
      %p132 = scmp.eq.s32.totalorder %s29, 0
      %p133 = por %p131, %p132
      %p134 = scmp.ne.s32.totalorder %s126, %s128
      %p135 = scmp.eq.s32.totalorder %s34, 1
      %p136 = por %p134, %p135
      %p137 = scmp.ne.s32.totalorder %s128, %s129
      %p138 = scmp.eq.s32.totalorder %s34, 0
      %p139 = por %p137, %p138
      %p140 = scmp.ne.s32.totalorder %s128, %s129
      %p141 = scmp.eq.s32.totalorder %s35, 1
      %p142 = por %p140, %p141
      %p144 = scmp.ne.s32.totalorder %s129, %s143
      %p145 = scmp.eq.s32.totalorder %s35, 0
      %p146 = por %p144, %p145
      %s148 = sadd.s32 %s147, 1
      %p151 = scmp.eq.s32.totalorder %s29, 1
      %p152 = scmp.ne.s32.totalorder %s147, %s149
      %p153 = scmp.eq.s32.totalorder %s29, 0
      %p154 = por %p152, %p153
      %p155 = scmp.ne.s32.totalorder %s147, %s149
      %p156 = scmp.eq.s32.totalorder %s34, 1
      %p157 = por %p155, %p156
      %p158 = scmp.ne.s32.totalorder %s149, %s150
      %p159 = scmp.eq.s32.totalorder %s34, 0
      %p160 = por %p158, %p159
      %p161 = scmp.ne.s32.totalorder %s149, %s150
      %p162 = scmp.eq.s32.totalorder %s35, 1
      %p163 = por %p161, %p162
      %p165 = scmp.ne.s32.totalorder %s150, %s164
      %p166 = scmp.eq.s32.totalorder %s35, 0
      %p167 = por %p165, %p166
      %s169 = sadd.s32 %s168, 1
      %p172 = scmp.eq.s32.totalorder %s29, 1
      %p173 = scmp.ne.s32.totalorder %s168, %s170
      %p174 = scmp.eq.s32.totalorder %s29, 0
      %p175 = por %p173, %p174
      %p176 = scmp.ne.s32.totalorder %s168, %s170
      %p177 = scmp.eq.s32.totalorder %s34, 1
      %p178 = por %p176, %p177
      %p179 = scmp.ne.s32.totalorder %s170, %s171
      %p180 = scmp.eq.s32.totalorder %s34, 0
      %p181 = por %p179, %p180
      %p182 = scmp.ne.s32.totalorder %s170, %s171
      %p183 = scmp.eq.s32.totalorder %s35, 1
      %p184 = por %p182, %p183
      %p186 = scmp.ne.s32.totalorder %s171, %s185
      %p187 = scmp.eq.s32.totalorder %s35, 0
      %p188 = por %p186, %p187
      %s190 = sadd.s32 %s189, 1
      %p193 = scmp.eq.s32.totalorder %s29, 1
      %p194 = scmp.ne.s32.totalorder %s189, %s191
      %p195 = scmp.eq.s32.totalorder %s29, 0
      %p196 = por %p194, %p195
      %p197 = scmp.ne.s32.totalorder %s189, %s191
      %p198 = scmp.eq.s32.totalorder %s34, 1
      %p199 = por %p197, %p198
      %p200 = scmp.ne.s32.totalorder %s191, %s192
      %p201 = scmp.eq.s32.totalorder %s34, 0
      %p202 = por %p200, %p201
      %p203 = scmp.ne.s32.totalorder %s191, %s192
      %p204 = scmp.eq.s32.totalorder %s35, 1
      %p205 = por %p203, %p204
      %p207 = scmp.ne.s32.totalorder %s192, %s206
      %p208 = scmp.eq.s32.totalorder %s35, 0
      %p209 = por %p207, %p208
      %s211 = sadd.s32 %s210, 1
      %p214 = scmp.eq.s32.totalorder %s29, 1
      %p215 = scmp.ne.s32.totalorder %s210, %s212
      %p216 = scmp.eq.s32.totalorder %s29, 0
      %p217 = por %p215, %p216
      %p218 = scmp.ne.s32.totalorder %s210, %s212
      %p219 = scmp.eq.s32.totalorder %s34, 1
      %p220 = por %p218, %p219
      %p221 = scmp.ne.s32.totalorder %s212, %s213
      %p222 = scmp.eq.s32.totalorder %s34, 0
      %p223 = por %p221, %p222
      %p224 = scmp.ne.s32.totalorder %s212, %s213
      %p225 = scmp.eq.s32.totalorder %s35, 1
      %p226 = por %p224, %p225
      %p228 = scmp.ne.s32.totalorder %s213, %s227
      %p229 = scmp.eq.s32.totalorder %s35, 0
      %p230 = por %p228, %p229
      %s232 = sadd.s32 %s231, 1
      %p235 = scmp.eq.s32.totalorder %s29, 1
      %p236 = scmp.ne.s32.totalorder %s231, %s233
      %p237 = scmp.eq.s32.totalorder %s29, 0
      %p238 = por %p236, %p237
      %p239 = scmp.ne.s32.totalorder %s231, %s233
      %p240 = scmp.eq.s32.totalorder %s34, 1
      %p241 = por %p239, %p240
      %p242 = scmp.ne.s32.totalorder %s233, %s234
      %p243 = scmp.eq.s32.totalorder %s34, 0
      %p244 = por %p242, %p243
      %p245 = scmp.ne.s32.totalorder %s233, %s234
      %p246 = scmp.eq.s32.totalorder %s35, 1
      %p247 = por %p245, %p246
      %p249 = scmp.ne.s32.totalorder %s234, %s248
      %p250 = scmp.eq.s32.totalorder %s35, 0
      %p251 = por %p249, %p250
      %s253 = sadd.s32 %s252, 1
      %p256 = scmp.eq.s32.totalorder %s29, 1
      %p257 = scmp.ne.s32.totalorder %s252, %s254
      %p258 = scmp.eq.s32.totalorder %s29, 0
      %p259 = por %p257, %p258
      %p260 = scmp.ne.s32.totalorder %s252, %s254
      %p261 = scmp.eq.s32.totalorder %s34, 1
      %p262 = por %p260, %p261
      %p263 = scmp.ne.s32.totalorder %s254, %s255
      %p264 = scmp.eq.s32.totalorder %s34, 0
      %p265 = por %p263, %p264
      %p266 = scmp.ne.s32.totalorder %s254, %s255
      %p267 = scmp.eq.s32.totalorder %s35, 1
      %p268 = por %p266, %p267
      %p270 = scmp.ne.s32.totalorder %s255, %s269
      %p271 = scmp.eq.s32.totalorder %s35, 0
      %p272 = por %p270, %p271
      %s274 = sadd.s32 %s273, 1
      %p277 = scmp.eq.s32.totalorder %s29, 1
      %p278 = scmp.ne.s32.totalorder %s273, %s275
      %p279 = scmp.eq.s32.totalorder %s29, 0
      %p280 = por %p278, %p279
      %p281 = scmp.ne.s32.totalorder %s273, %s275
      %p282 = scmp.eq.s32.totalorder %s34, 1
      %p283 = por %p281, %p282
      %p284 = scmp.ne.s32.totalorder %s275, %s276
      %p285 = scmp.eq.s32.totalorder %s34, 0
      %p286 = por %p284, %p285
      %p287 = scmp.ne.s32.totalorder %s275, %s276
      %p288 = scmp.eq.s32.totalorder %s35, 1
      %p289 = por %p287, %p288
      %p291 = scmp.ne.s32.totalorder %s276, %s290
      %p292 = scmp.eq.s32.totalorder %s35, 0
      %p293 = por %p291, %p292
      %s295 = sadd.s32 %s294, 1
      %p298 = scmp.eq.s32.totalorder %s29, 1
      %p299 = scmp.ne.s32.totalorder %s294, %s296
      %p300 = scmp.eq.s32.totalorder %s29, 0
      %p301 = por %p299, %p300
      %p302 = scmp.ne.s32.totalorder %s294, %s296
      %p303 = scmp.eq.s32.totalorder %s34, 1
      %p304 = por %p302, %p303
      %p305 = scmp.ne.s32.totalorder %s296, %s297
      %p306 = scmp.eq.s32.totalorder %s34, 0
      %p307 = por %p305, %p306
      %p308 = scmp.ne.s32.totalorder %s296, %s297
      %p309 = scmp.eq.s32.totalorder %s35, 1
      %p310 = por %p308, %p309
      %p312 = scmp.ne.s32.totalorder %s297, %s311
      %p313 = scmp.eq.s32.totalorder %s35, 0
      %p314 = por %p312, %p313
      %s316 = sadd.s32 %s315, 1
      %p319 = scmp.eq.s32.totalorder %s29, 1
      %p320 = scmp.ne.s32.totalorder %s315, %s317
      %p321 = scmp.eq.s32.totalorder %s29, 0
      %p322 = por %p320, %p321
      %p323 = scmp.ne.s32.totalorder %s315, %s317
      %p324 = scmp.eq.s32.totalorder %s34, 1
      %p325 = por %p323, %p324
      %p326 = scmp.ne.s32.totalorder %s317, %s318
      %p327 = scmp.eq.s32.totalorder %s34, 0
      %p328 = por %p326, %p327
      %p329 = scmp.ne.s32.totalorder %s317, %s318
      %p330 = scmp.eq.s32.totalorder %s35, 1
      %p331 = por %p329, %p330
      %p333 = scmp.ne.s32.totalorder %s318, %s332
      %p334 = scmp.eq.s32.totalorder %s35, 0
      %p335 = por %p333, %p334
      %s337 = sadd.s32 %s336, 1
      %p340 = scmp.eq.s32.totalorder %s29, 1
      %p341 = scmp.ne.s32.totalorder %s336, %s338
      %p342 = scmp.eq.s32.totalorder %s29, 0
      %p343 = por %p341, %p342
      %p344 = scmp.ne.s32.totalorder %s336, %s338
      %p345 = scmp.eq.s32.totalorder %s34, 1
      %p346 = por %p344, %p345
      %p347 = scmp.ne.s32.totalorder %s338, %s339
      %p348 = scmp.eq.s32.totalorder %s34, 0
      %p349 = por %p347, %p348
      %p350 = scmp.ne.s32.totalorder %s338, %s339
      %p351 = scmp.eq.s32.totalorder %s35, 1
      %p352 = por %p350, %p351
      %p354 = scmp.ne.s32.totalorder %s339, %s353
      %p355 = scmp.eq.s32.totalorder %s35, 0
      %p356 = por %p354, %p355
      %s358 = sadd.s32 %s357, 1
      %p361 = scmp.eq.s32.totalorder %s29, 1
      %p362 = scmp.ne.s32.totalorder %s357, %s359
      %p363 = scmp.eq.s32.totalorder %s29, 0
      %p364 = por %p362, %p363
      %p365 = scmp.ne.s32.totalorder %s357, %s359
      %p366 = scmp.eq.s32.totalorder %s34, 1
      %p367 = por %p365, %p366
      %p368 = scmp.ne.s32.totalorder %s359, %s360
      %p369 = scmp.eq.s32.totalorder %s34, 0
      %p370 = por %p368, %p369
      %p371 = scmp.ne.s32.totalorder %s359, %s360
      %p372 = scmp.eq.s32.totalorder %s35, 1
      %p373 = por %p371, %p372
      %p375 = scmp.ne.s32.totalorder %s360, %s374
      %p376 = scmp.eq.s32.totalorder %s35, 0
      %p377 = por %p375, %p376
      %s379 = sadd.s32 %s378, 1
      %p382 = scmp.eq.s32.totalorder %s29, 1
      %p383 = scmp.ne.s32.totalorder %s378, %s380
      %p384 = scmp.eq.s32.totalorder %s29, 0
      %p385 = por %p383, %p384
      %p386 = scmp.ne.s32.totalorder %s378, %s380
      %p387 = scmp.eq.s32.totalorder %s34, 1
      %p388 = por %p386, %p387
      %p389 = scmp.ne.s32.totalorder %s380, %s381
      %p390 = scmp.eq.s32.totalorder %s34, 0
      %p391 = por %p389, %p390
      %p392 = scmp.ne.s32.totalorder %s380, %s381
      %p393 = scmp.eq.s32.totalorder %s35, 1
      %p394 = por %p392, %p393
      %p396 = scmp.ne.s32.totalorder %s381, %s395
      %p397 = scmp.eq.s32.totalorder %s35, 0
      %p398 = por %p396, %p397
      %s400 = sadd.s32 %s399, 1
      %p403 = scmp.eq.s32.totalorder %s29, 1
      %p404 = scmp.ne.s32.totalorder %s399, %s401
      %p405 = scmp.eq.s32.totalorder %s29, 0
      %p406 = por %p404, %p405
      %p407 = scmp.ne.s32.totalorder %s399, %s401
      %p408 = scmp.eq.s32.totalorder %s34, 1
      %p409 = por %p407, %p408
      %p410 = scmp.ne.s32.totalorder %s401, %s402
      %p411 = scmp.eq.s32.totalorder %s34, 0
      %p412 = por %p410, %p411
      %p413 = scmp.ne.s32.totalorder %s401, %s402
      %p414 = scmp.eq.s32.totalorder %s35, 1
      %p415 = por %p413, %p414
      %p417 = scmp.ne.s32.totalorder %s402, %s416
      %p418 = scmp.eq.s32.totalorder %s35, 0
      %p419 = por %p417, %p418
      %s421 = sadd.s32 %s420, 1
      %p424 = scmp.eq.s32.totalorder %s29, 1
      %p425 = scmp.ne.s32.totalorder %s420, %s422
      %p426 = scmp.eq.s32.totalorder %s29, 0
      %p427 = por %p425, %p426
      %p428 = scmp.ne.s32.totalorder %s420, %s422
      %p429 = scmp.eq.s32.totalorder %s34, 1
      %p430 = por %p428, %p429
      %p431 = scmp.ne.s32.totalorder %s422, %s423
      %p432 = scmp.eq.s32.totalorder %s34, 0
      %p433 = por %p431, %p432
      %p434 = scmp.ne.s32.totalorder %s422, %s423
      %p435 = scmp.eq.s32.totalorder %s35, 1
      %p436 = por %p434, %p435
      %p438 = scmp.ne.s32.totalorder %s423, %s437
      %p439 = scmp.eq.s32.totalorder %s35, 0
      %p440 = por %p438, %p439
      %s441 = ssub.s32 %s29, %s36
      %p442 = scmp.eq.s32.totalorder %s441, 0
      %s444 = sadd.s32 %s443, 1
      %s445 = scalar_select %p442, %s443, %s444
      %p448 = pneg %p442
      %p449 = scmp.eq.s32.totalorder %s29, 1
      %p450 = por %p448, %p449
      %p451 = scmp.ne.s32.totalorder %s443, %s446
      %p452 = scmp.eq.s32.totalorder %s29, 0
      %p453 = por %p451, %p452
      %p454 = scmp.ne.s32.totalorder %s443, %s446
      %p455 = scmp.eq.s32.totalorder %s34, 1
      %p456 = por %p454, %p455
      %p457 = scmp.ne.s32.totalorder %s446, %s447
      %p458 = scmp.eq.s32.totalorder %s34, 0
      %p459 = por %p457, %p458
      %p460 = scmp.ne.s32.totalorder %s446, %s447
      %p461 = scmp.eq.s32.totalorder %s35, 1
      %p462 = por %p460, %p461
      %p464 = scmp.ne.s32.totalorder %s447, %s463
      %p465 = scmp.eq.s32.totalorder %s35, 0
      %p466 = por %p464, %p465
      %p467 = scmp.le.s32.totalorder 1, %s29
      %p468 = scmp.lt.s32.totalorder %s29, 3
      %p469 = pnand %p467, %p468
      %p470 = pneg %p469
      // Predicated region
      $region9: #{protein_transformer_forward.1} parent=5 // pred_check
        _
      $region10: #{protein_transformer_forward.1} parent=5 // pred_check_branch
        %472 = sbr.rel (%p469) target = $region12
      $region11: #{protein_transformer_forward.1} parent=5 // pred_region
        %s473 = ssub.s32 %s29, 1
        // Predicated region
        $region13: #{protein_transformer_forward.1} parent=11 // pred_check
          %p474 = pneg %p76
        $region14: #{protein_transformer_forward.1} parent=11 // pred_check_branch
          %476 = sbr.rel (%p474) target = $region16
        $region15: #{protein_transformer_forward.1} parent=11 // pred_region
          _
        $region16: #{protein_transformer_forward.1} parent=11 // pred_fallthru
          _
        // Predicated region
        $region17: #{protein_transformer_forward.1} parent=11 // pred_check
          %p477 = pneg %p97
        $region18: #{protein_transformer_forward.1} parent=11 // pred_check_branch
          %479 = sbr.rel (%p477) target = $region20
        $region19: #{protein_transformer_forward.1} parent=11 // pred_region
          _
        $region20: #{protein_transformer_forward.1} parent=11 // pred_fallthru
          _
        // Predicated region
        $region21: #{protein_transformer_forward.1} parent=11 // pred_check
          %p480 = pneg %p118
        $region22: #{protein_transformer_forward.1} parent=11 // pred_check_branch
          %482 = sbr.rel (%p480) target = $region24
        $region23: #{protein_transformer_forward.1} parent=11 // pred_region
          _
        $region24: #{protein_transformer_forward.1} parent=11 // pred_fallthru
          _
        // Predicated region
        $region25: #{protein_transformer_forward.1} parent=11 // pred_check
          %p483 = pneg %p139
        $region26: #{protein_transformer_forward.1} parent=11 // pred_check_branch
          %485 = sbr.rel (%p483) target = $region28
        $region27: #{protein_transformer_forward.1} parent=11 // pred_region
          _
        $region28: #{protein_transformer_forward.1} parent=11 // pred_fallthru
          _
        // Predicated region
        $region29: #{protein_transformer_forward.1} parent=11 // pred_check
          %p486 = pneg %p160
        $region30: #{protein_transformer_forward.1} parent=11 // pred_check_branch
          %488 = sbr.rel (%p486) target = $region32
        $region31: #{protein_transformer_forward.1} parent=11 // pred_region
          %490 = vsyncadd [#allocation3], 0
          %s491 = sshll.u32 %s5, 4
          %s492 = int_to_ptr.hbm [resolvable:$true] %s491
          %s493 = sshll.u32 [#allocation2], 4
          %s494 = int_to_ptr.vmem [resolvable:$true] %s493
          %499 = dma.hbm_to_vmem [thread:$0]  %s492, 2048, %s494, [#allocation3], 64, 64, 4
        $region32: #{protein_transformer_forward.1} parent=11 // pred_fallthru
          _
        // Predicated region
        $region33: #{protein_transformer_forward.1} parent=11 // pred_check
          %p500 = pneg %p181
        $region34: #{protein_transformer_forward.1} parent=11 // pred_check_branch
          %502 = sbr.rel (%p500) target = $region36
        $region35: #{protein_transformer_forward.1} parent=11 // pred_region
          _
        $region36: #{protein_transformer_forward.1} parent=11 // pred_fallthru
          _
        // Predicated region
        $region37: #{protein_transformer_forward.1} parent=11 // pred_check
          %p503 = pneg %p202
        $region38: #{protein_transformer_forward.1} parent=11 // pred_check_branch
          %505 = sbr.rel (%p503) target = $region40
        $region39: #{protein_transformer_forward.1} parent=11 // pred_region
          _
        $region40: #{protein_transformer_forward.1} parent=11 // pred_fallthru
          _
        // Predicated region
        $region41: #{protein_transformer_forward.1} parent=11 // pred_check
          %p506 = pneg %p223
        $region42: #{protein_transformer_forward.1} parent=11 // pred_check_branch
          %508 = sbr.rel (%p506) target = $region44
        $region43: #{protein_transformer_forward.1} parent=11 // pred_region
          _
        $region44: #{protein_transformer_forward.1} parent=11 // pred_fallthru
          _
        // Predicated region
        $region45: #{protein_transformer_forward.1} parent=11 // pred_check
          %p509 = pneg %p244
        $region46: #{protein_transformer_forward.1} parent=11 // pred_check_branch
          %511 = sbr.rel (%p509) target = $region48
        $region47: #{protein_transformer_forward.1} parent=11 // pred_region
          _
        $region48: #{protein_transformer_forward.1} parent=11 // pred_fallthru
          _
        // Predicated region
        $region49: #{protein_transformer_forward.1} parent=11 // pred_check
          %p512 = pneg %p265
        $region50: #{protein_transformer_forward.1} parent=11 // pred_check_branch
          %514 = sbr.rel (%p512) target = $region52
        $region51: #{protein_transformer_forward.1} parent=11 // pred_region
          %516 = vsyncadd [#allocation5], 0
          %s517 = sshll.u32 %s10, 4
          %s518 = int_to_ptr.hbm [resolvable:$true] %s517
          %s519 = sshll.u32 [#allocation4], 4
          %s520 = int_to_ptr.vmem [resolvable:$true] %s519
          %525 = dma.hbm_to_vmem [thread:$0]  %s518, 64, %s520, [#allocation5], 16, 16, 1
        $region52: #{protein_transformer_forward.1} parent=11 // pred_fallthru
          _
        // Predicated region
        $region53: #{protein_transformer_forward.1} parent=11 // pred_check
          %p526 = pneg %p286
        $region54: #{protein_transformer_forward.1} parent=11 // pred_check_branch
          %528 = sbr.rel (%p526) target = $region56
        $region55: #{protein_transformer_forward.1} parent=11 // pred_region
          _
        $region56: #{protein_transformer_forward.1} parent=11 // pred_fallthru
          _
        // Predicated region
        $region57: #{protein_transformer_forward.1} parent=11 // pred_check
          %p529 = pneg %p307
        $region58: #{protein_transformer_forward.1} parent=11 // pred_check_branch
          %531 = sbr.rel (%p529) target = $region60
        $region59: #{protein_transformer_forward.1} parent=11 // pred_region
          %533 = vsyncadd [#allocation5], 0
          %s534 = sshll.u32 %s12, 4
          %s535 = int_to_ptr.hbm [resolvable:$true] %s534
          %s536 = sshll.u32 [#allocation6], 4
          %s537 = int_to_ptr.vmem [resolvable:$true] %s536
          %542 = dma.hbm_to_vmem [thread:$0]  %s535, 64, %s537, [#allocation5], 16, 16, 1
        $region60: #{protein_transformer_forward.1} parent=11 // pred_fallthru
          _
        // Predicated region
        $region61: #{protein_transformer_forward.1} parent=11 // pred_check
          %p543 = pneg %p328
        $region62: #{protein_transformer_forward.1} parent=11 // pred_check_branch
          %545 = sbr.rel (%p543) target = $region64
        $region63: #{protein_transformer_forward.1} parent=11 // pred_region
          _
        $region64: #{protein_transformer_forward.1} parent=11 // pred_fallthru
          _
        // Predicated region
        $region65: #{protein_transformer_forward.1} parent=11 // pred_check
          %p546 = pneg %p349
        $region66: #{protein_transformer_forward.1} parent=11 // pred_check_branch
          %548 = sbr.rel (%p546) target = $region68
        $region67: #{protein_transformer_forward.1} parent=11 // pred_region
          %550 = vsyncadd [#allocation8], 0
          %s551 = sshll.u32 %s14, 4
          %s552 = int_to_ptr.hbm [resolvable:$true] %s551
          %s553 = sshll.u32 [#allocation7], 4
          %s554 = int_to_ptr.vmem [resolvable:$true] %s553
          %559 = dma.hbm_to_vmem [thread:$0]  %s552, 64, %s554, [#allocation8], 16, 16, 1
        $region68: #{protein_transformer_forward.1} parent=11 // pred_fallthru
          _
        // Predicated region
        $region69: #{protein_transformer_forward.1} parent=11 // pred_check
          %p560 = pneg %p370
        $region70: #{protein_transformer_forward.1} parent=11 // pred_check_branch
          %562 = sbr.rel (%p560) target = $region72
        $region71: #{protein_transformer_forward.1} parent=11 // pred_region
          _
        $region72: #{protein_transformer_forward.1} parent=11 // pred_fallthru
          _
        // Predicated region
        $region73: #{protein_transformer_forward.1} parent=11 // pred_check
          %p563 = pneg %p391
        $region74: #{protein_transformer_forward.1} parent=11 // pred_check_branch
          %565 = sbr.rel (%p563) target = $region76
        $region75: #{protein_transformer_forward.1} parent=11 // pred_region
          %567 = vsyncadd [#allocation8], 0
          %s569 = sshll.u32 %s16, 4
          %s570 = int_to_ptr.hbm [resolvable:$true] %s569
          %s571 = sshll.u32 [#allocation9], 4
          %s572 = int_to_ptr.vmem [resolvable:$true] %s571
          %574 = dma.hbm_to_vmem [thread:$0]  %s570, 16, %s572, [#allocation8]
        $region76: #{protein_transformer_forward.1} parent=11 // pred_fallthru
          _
        // Predicated region
        $region77: #{protein_transformer_forward.1} parent=11 // pred_check
          %p575 = pneg %p412
        $region78: #{protein_transformer_forward.1} parent=11 // pred_check_branch
          %577 = sbr.rel (%p575) target = $region80
        $region79: #{protein_transformer_forward.1} parent=11 // pred_region
          %579 = vsyncadd [#allocation11], 0
          %s580 = sshll.u32 %s17, 4
          %s581 = int_to_ptr.hbm [resolvable:$true] %s580
          %s582 = sshll.u32 [#allocation10], 4
          %s583 = int_to_ptr.vmem [resolvable:$true] %s582
          %588 = dma.hbm_to_vmem [thread:$0]  %s581, 512, %s583, [#allocation11], 64, 64, 4
        $region80: #{protein_transformer_forward.1} parent=11 // pred_fallthru
          _
        // Predicated region
        $region81: #{protein_transformer_forward.1} parent=11 // pred_check
          %p589 = pneg %p433
        $region82: #{protein_transformer_forward.1} parent=11 // pred_check_branch
          %591 = sbr.rel (%p589) target = $region84
        $region83: #{protein_transformer_forward.1} parent=11 // pred_region
          %593 = vsyncadd [#allocation11], 0
          %s595 = sshll.u32 %s18, 4
          %s596 = int_to_ptr.hbm [resolvable:$true] %s595
          %s597 = sshll.u32 [#allocation12], 4
          %s598 = int_to_ptr.vmem [resolvable:$true] %s597
          %600 = dma.hbm_to_vmem [thread:$0]  %s596, 16, %s598, [#allocation11]
        $region84: #{protein_transformer_forward.1} parent=11 // pred_fallthru
          _
      $region12: #{protein_transformer_forward.1} parent=5 // pred_fallthru
        _
      %p601 = scmp.lt.s32.totalorder %s29, 2
      // Predicated region
      $region85: #{protein_transformer_forward.1} parent=5 // pred_check
        %p602 = pneg %p601
      $region86: #{protein_transformer_forward.1} parent=5 // pred_check_branch
        %604 = sbr.rel (%p602) target = $region88
      $region87: #{protein_transformer_forward.1} parent=5 // pred_region
        // Predicated region
        $region89: #{protein_transformer_forward.1} parent=87 // pred_check
          %p605 = pneg %p49
        $region90: #{protein_transformer_forward.1} parent=87 // pred_check_branch
          %607 = sbr.rel (%p605) target = $region92
        $region91: #{protein_transformer_forward.1} parent=87 // pred_region
          %p608 = scmp.lt.s32.totalorder %s29, 1
          %s609 = scalar_select %p608, %s29, 1
          %s610 = smul.addr %s609, 8
          %s611 = scalar_lea.vmem %s0, %s610
        $region92: #{protein_transformer_forward.1} parent=87 // pred_fallthru
          _
      $region88: #{protein_transformer_forward.1} parent=5 // pred_fallthru
        _
      %p612 = scmp.le.s32.totalorder 1, %s29
      %p613 = scmp.lt.s32.totalorder %s29, 3
      %p614 = pnand %p612, %p613
      %p615 = pneg %p614
      // Predicated region
      $region93: #{protein_transformer_forward.1} parent=5 // pred_check
        _
      $region94: #{protein_transformer_forward.1} parent=5 // pred_check_branch
        %617 = sbr.rel (%p614) target = $region96
      $region95: #{protein_transformer_forward.1} parent=5 // pred_region
        %s618 = ssub.s32 %s29, 1
        // Predicated region
        $region97: #{protein_transformer_forward.1} parent=95 // pred_check
          %p619 = pneg %p160
        $region98: #{protein_transformer_forward.1} parent=95 // pred_check_branch
          %621 = sbr.rel (%p619) target = $region100
        $region99: #{protein_transformer_forward.1} parent=95 // pred_region
          %623 = dma.done [#allocation3], 2048
        $region100: #{protein_transformer_forward.1} parent=95 // pred_fallthru
          _
        // Predicated region
        $region101: #{protein_transformer_forward.1} parent=95 // pred_check
          %p624 = pneg %p265
        $region102: #{protein_transformer_forward.1} parent=95 // pred_check_branch
          %626 = sbr.rel (%p624) target = $region104
        $region103: #{protein_transformer_forward.1} parent=95 // pred_region
          %628 = dma.done [#allocation5], 64
        $region104: #{protein_transformer_forward.1} parent=95 // pred_fallthru
          _
        // Predicated region
        $region105: #{protein_transformer_forward.1} parent=95 // pred_check
          %p629 = pneg %p307
        $region106: #{protein_transformer_forward.1} parent=95 // pred_check_branch
          %631 = sbr.rel (%p629) target = $region108
        $region107: #{protein_transformer_forward.1} parent=95 // pred_region
          %633 = dma.done [#allocation5], 64
        $region108: #{protein_transformer_forward.1} parent=95 // pred_fallthru
          _
        // Predicated region
        $region109: #{protein_transformer_forward.1} parent=95 // pred_check
          %p634 = pneg %p349
        $region110: #{protein_transformer_forward.1} parent=95 // pred_check_branch
          %636 = sbr.rel (%p634) target = $region112
        $region111: #{protein_transformer_forward.1} parent=95 // pred_region
          %638 = dma.done [#allocation8], 64
        $region112: #{protein_transformer_forward.1} parent=95 // pred_fallthru
          _
        // Predicated region
        $region113: #{protein_transformer_forward.1} parent=95 // pred_check
          %p639 = pneg %p391
        $region114: #{protein_transformer_forward.1} parent=95 // pred_check_branch
          %641 = sbr.rel (%p639) target = $region116
        $region115: #{protein_transformer_forward.1} parent=95 // pred_region
          %643 = dma.done [#allocation8], 16
        $region116: #{protein_transformer_forward.1} parent=95 // pred_fallthru
          _
        // Predicated region
        $region117: #{protein_transformer_forward.1} parent=95 // pred_check
          %p644 = pneg %p412
        $region118: #{protein_transformer_forward.1} parent=95 // pred_check_branch
          %646 = sbr.rel (%p644) target = $region120
        $region119: #{protein_transformer_forward.1} parent=95 // pred_region
          %648 = dma.done [#allocation11], 512
        $region120: #{protein_transformer_forward.1} parent=95 // pred_fallthru
          _
        // Predicated region
        $region121: #{protein_transformer_forward.1} parent=95 // pred_check
          %p649 = pneg %p433
        $region122: #{protein_transformer_forward.1} parent=95 // pred_check_branch
          %651 = sbr.rel (%p649) target = $region124
        $region123: #{protein_transformer_forward.1} parent=95 // pred_region
          %653 = dma.done [#allocation11], 16
        $region124: #{protein_transformer_forward.1} parent=95 // pred_fallthru
          _
        %p654 = scmp.lt.s32.totalorder %s34, 1
        %s655 = scalar_select %p654, %s34, 1
        %s656 = smul.addr %s655, 8
        %s657 = scalar_lea.vmem %s0, %s656
        %p658 = pneg %p55
        %p659 = pneg %p52
        %p660 = pneg %p76
        %p661 = pneg %p73
        %p662 = pneg %p97
        %p663 = pneg %p94
        %p664 = pneg %p118
        %p665 = pneg %p115
        %p666 = pneg %p139
        %p667 = pneg %p136
        %p668 = pneg %p160
        %p669 = pneg %p157
        %p670 = pneg %p181
        %p671 = pneg %p178
        %p672 = pneg %p202
        %p673 = pneg %p199
        %p674 = pneg %p223
        %p675 = pneg %p220
        %p676 = pneg %p244
        %p677 = pneg %p241
        %p678 = pneg %p265
        %p679 = pneg %p262
        %p680 = pneg %p286
        %p681 = pneg %p283
        %p682 = pneg %p307
        %p683 = pneg %p304
        %p684 = pneg %p328
        %p685 = pneg %p325
        %p686 = pneg %p349
        %p687 = pneg %p346
        %p688 = pneg %p370
        %p689 = pneg %p367
        %p690 = pneg %p391
        %p691 = pneg %p388
        %p692 = pneg %p412
        %p693 = pneg %p409
        %p694 = pneg %p433
        %p695 = pneg %p430
        %p696 = pneg %p459
        %p697 = pneg %p456
        %p698 = scmp.lt.s32.totalorder %s34, 1
        %s699 = scalar_select %p698, %s34, 1
        %s700 = smul.addr %s699, 8
        %s701 = scalar_lea.vmem %s19, %s700
        %p702 = scmp.lt.s32.totalorder %s34, 1
        %s703 = scalar_select %p702, %s34, 1
        %s704 = smul.addr %s703, 8
        %s705 = scalar_lea.vmem %s0, %s704
        %p706 = scmp.lt.s32.totalorder %s34, 1
        %s707 = scalar_select %p706, %s34, 1
        %s708 = smul.addr %s707, 8
        %s709 = scalar_lea.vmem %s19, %s708
        %v711 = vld [vmem:[%s705] sm:$0xff]
        %v712 = vlaneseq
        %v713 = vand.u32 %v712, 127
        %714 = vset.pattern.permute.xlu0 0
        %715 = vperm.xlu0 %714, %v711
        %v716 = vpop.permute.xlu0 %715
        %vm717 = vcmp.eq.s32.totalorder %v716, %v713
        %v718 = vsel %vm717, 1, 0
        %v719 = vcvt.s32.f32 %v718
        %v720 = vpack.c.bf16 %v719, %v719
        %v721 = vld [vmem:[%s1] sm:$0xf]
        %v722 = vld [vmem:[%s1 + $0x4] sm:$0xf]
        %v723 = vld [vmem:[%s1 + $0x8] sm:$0xf]
        %v724 = vld [vmem:[%s1 + $0xc] sm:$0xf]
        %v725 = vld [vmem:[%s2] sm:$0xff]
        %v730 = vunpack.c.l.b16 %v721
        %v731 = vunpack.c.l.b16 %v722
        %v732 = vunpack.c.l.b16 %v723
        %v733 = vunpack.c.l.b16 %v724
        %v734 = vpack.c.b16 %v731, %v730
        %v735 = vpack.c.b16 %v733, %v732
        %vm738 = vcmask 261120
        %v740 = vsel %vm738, %v720, 0
        %742 = vmatpush.bf16.msra.mxu0 0
        %743 = vmatpush.bf16.msra.mxu0 0
        %744 = vmatpush.bf16.msra.mxu0 0
        %745 = vmatpush.bf16.msra.mxu0 0
        %746 = vmatpush.bf16.msra.mxu0 0
        %747 = vmatpush.bf16.msra.mxu0 0
        %748 = vmatpush.bf16.msra.mxu0 %v735
        %749 = vmatpush.bf16.msra.mxu0 %v734
        %750 = vmatmul.bf16.gmra.mxu0 %v740
        %v751 = vpop.f32.mrf.mxu0
        %v752 = vadd.f32 %v725, %v751
        %v753 = vpop.f32.mrf.mxu0
        %754 = vdwg.mxu0
        %v755 = vpack.c.bf16 %v752, %v752
        %v756 = vld [vmem:[%s3] sm:$0xff]
        %v757 = vld [vmem:[%s3 + $0x8] sm:$0xff]
        %v758 = vld [vmem:[%s3 + $0x10] sm:$0xff]
        %v759 = vld [vmem:[%s3 + $0x18] sm:$0xff]
        %v760 = vld [vmem:[%s3 + $0x20] sm:$0xff]
        %v761 = vld [vmem:[%s3 + $0x28] sm:$0xff]
        %v762 = vld [vmem:[%s3 + $0x30] sm:$0xff]
        %v763 = vld [vmem:[%s3 + $0x38] sm:$0xff]
        %v764 = vld [vmem:[%s4] sm:$0x3]
        %v766 = vperm.slane %v764, 0
        %v767 = vperm.slane %v764, 1
        %v778 = vunpack.c.l.b16 %v756
        %v779 = vunpack.c.h.b16 %v756
        %v780 = vunpack.c.l.b16 %v757
        %v781 = vunpack.c.h.b16 %v757
        %v782 = vunpack.c.l.b16 %v758
        %v783 = vunpack.c.h.b16 %v758
        %v784 = vunpack.c.l.b16 %v759
        %v785 = vunpack.c.h.b16 %v759
        %v786 = vunpack.c.l.b16 %v760
        %v787 = vunpack.c.h.b16 %v760
        %v788 = vunpack.c.l.b16 %v761
        %v789 = vunpack.c.h.b16 %v761
        %v790 = vunpack.c.l.b16 %v762
        %v791 = vunpack.c.h.b16 %v762
        %v792 = vunpack.c.l.b16 %v763
        %v793 = vunpack.c.h.b16 %v763
        %v794 = vpack.c.b16 %v780, %v778
        %v795 = vpack.c.b16 %v781, %v779
        %v796 = vpack.c.b16 %v784, %v782
        %v797 = vpack.c.b16 %v785, %v783
        %v798 = vpack.c.b16 %v788, %v786
        %v799 = vpack.c.b16 %v789, %v787
        %v800 = vpack.c.b16 %v792, %v790
        %v801 = vpack.c.b16 %v793, %v791
        %vm810 = vcmask 523264
        %v812 = vsel %vm810, %v755, 0
        %814 = vmatpush.bf16.msra.mxu0 0
        %815 = vmatpush.bf16.msra.mxu0 0
        %816 = vmatpush.bf16.msra.mxu0 0
        %817 = vmatpush.bf16.msra.mxu0 0
        %818 = vmatpush.bf16.msra.mxu0 %v800
        %819 = vmatpush.bf16.msra.mxu0 %v798
        %820 = vmatpush.bf16.msra.mxu0 %v796
        %821 = vmatpush.bf16.msra.mxu0 %v794
        %822 = vmatmul.bf16.gmra.mxu0 %v812
        %v823 = vpop.f32.mrf.mxu0
        %v824 = vadd.f32 %v766, %v823
        %v825 = vpop.f32.mrf.mxu0
        %826 = vdwg.mxu0
        %827 = vmatpush.bf16.msra.mxu0 0
        %828 = vmatpush.bf16.msra.mxu0 0
        %829 = vmatpush.bf16.msra.mxu0 0
        %830 = vmatpush.bf16.msra.mxu0 0
        %831 = vmatpush.bf16.msra.mxu0 %v801
        %832 = vmatpush.bf16.msra.mxu0 %v799
        %833 = vmatpush.bf16.msra.mxu0 %v797
        %834 = vmatpush.bf16.msra.mxu0 %v795
        %835 = vmatmul.bf16.gmra.mxu0 %v812
        %v836 = vpop.f32.mrf.mxu0
        %v837 = vadd.f32 %v767, %v836
        %v838 = vpop.f32.mrf.mxu0
        %839 = vdwg.mxu0
        %v840 = vpack.c.bf16 %v824, %v824
        %v841 = vpack.c.bf16 %v837, %v837
        %v843 = vunpack.c.l.b16 %v840
        %v844 = vpack.c.b16 %v843, %v843
        %845 = vrot.lane.b32.xlu0 %v844, 64
        %v846 = vpop.permute.xlu0 %845
        %v848 = vsel %vm738, %v840, 0
        %v851 = vsel %vm738, %v846, 0
        %853 = vmatpush.bf16.xpose.msra.mxu0 0
        %854 = vmatpush.bf16.xpose.msra.mxu0 0
        %855 = vmatpush.bf16.xpose.msra.mxu0 0
        %856 = vmatpush.bf16.xpose.msra.mxu0 0
        %857 = vmatpush.bf16.xpose.msra.mxu0 0
        %858 = vmatpush.bf16.xpose.msra.mxu0 0
        %859 = vmatpush.bf16.xpose.msra.mxu0 0
        %860 = vmatpush.bf16.xpose.msra.mxu0 %v851
        %861 = vmatmul.bf16.gmra.mxu0 %v848
        %v862 = vpop.f32.mrf.mxu0
        %v863 = vadd.f32 0.0, %v862
        %v864 = vpop.f32.mrf.mxu0
        %865 = vdwg.mxu0
        %vm866 = vcmask 64512
        %v867 = vsel %vm866, %v863, -inf
        %868 = vmax.xlane.f32.xlu0 %v867
        %v869 = vpop.xlane.xlu0 %868
        %v870 = vsub.f32 %v863, %v869
        %v871 = vmul.f32 %v870, 1.442695
        %v872 = vpow.pop %v871
        %v873 = vsel %vm866, %v872, 0.0
        %874 = vadd.xlane.f32.xlu0 %v873
        %v875 = vpop.xlane.xlu0 %874
        %v876 = vrcp.pop %v875
        %v877 = vmul.f32 %v872, %v876
        %v878 = vpack.c.bf16 %v877, %v877
        %v880 = vsel %vm866, %v878, 0
        %vm882 = vcmask 1043456
        %v884 = vsel %vm882, %v841, 0
        %886 = vmatpush.bf16.msra.mxu0 0
        %887 = vmatpush.bf16.msra.mxu0 0
        %888 = vmatpush.bf16.msra.mxu0 0
        %889 = vmatpush.bf16.msra.mxu0 0
        %890 = vmatpush.bf16.msra.mxu0 0
        %891 = vmatpush.bf16.msra.mxu0 0
        %892 = vmatpush.bf16.msra.mxu0 0
        %893 = vmatpush.bf16.msra.mxu0 %v884
        %894 = vmatmul.bf16.gmra.mxu0 %v880
        %v895 = vpop.f32.mrf.mxu0
        %v896 = vadd.f32 0.0, %v895
        %v897 = vpop.f32.mrf.mxu0
        %898 = vdwg.mxu0
        %899 = vrot.lane.b32.xlu0 %v844, 96
        %v900 = vpop.permute.xlu0 %899
        %901 = vrot.lane.b32.xlu0 %v844, 32
        %v902 = vpop.permute.xlu0 %901
        %v904 = vsel %vm738, %v900, 0
        %v907 = vsel %vm738, %v902, 0
        %909 = vmatpush.bf16.xpose.msra.mxu0 0
        %910 = vmatpush.bf16.xpose.msra.mxu0 0
        %911 = vmatpush.bf16.xpose.msra.mxu0 0
        %912 = vmatpush.bf16.xpose.msra.mxu0 0
        %913 = vmatpush.bf16.xpose.msra.mxu0 0
        %914 = vmatpush.bf16.xpose.msra.mxu0 0
        %915 = vmatpush.bf16.xpose.msra.mxu0 0
        %916 = vmatpush.bf16.xpose.msra.mxu0 %v907
        %917 = vmatmul.bf16.gmra.mxu0 %v904
        %v918 = vpop.f32.mrf.mxu0
        %v919 = vadd.f32 0.0, %v918
        %v920 = vpop.f32.mrf.mxu0
        %921 = vdwg.mxu0
        %v922 = vsel %vm866, %v919, -inf
        %923 = vmax.xlane.f32.xlu0 %v922
        %v924 = vpop.xlane.xlu0 %923
        %v925 = vsub.f32 %v919, %v924
        %v926 = vmul.f32 %v925, 1.442695
        %v927 = vpow.pop %v926
        %v928 = vsel %vm866, %v927, 0.0
        %929 = vadd.xlane.f32.xlu0 %v928
        %v930 = vpop.xlane.xlu0 %929
        %v931 = vrcp.pop %v930
        %v932 = vmul.f32 %v927, %v931
        %v933 = vpack.c.bf16 %v932, %v932
        %v935 = vunpack.c.l.b16 %v841
        %v936 = vpack.c.b16 %v935, %v935
        %937 = vrot.lane.b32.xlu0 %v936, 96
        %v938 = vpop.permute.xlu0 %937
        %v940 = vsel %vm866, %v933, 0
        %v943 = vsel %vm882, %v938, 0
        %945 = vmatpush.bf16.msra.mxu0 0
        %946 = vmatpush.bf16.msra.mxu0 0
        %947 = vmatpush.bf16.msra.mxu0 0
        %948 = vmatpush.bf16.msra.mxu0 0
        %949 = vmatpush.bf16.msra.mxu0 0
        %950 = vmatpush.bf16.msra.mxu0 0
        %951 = vmatpush.bf16.msra.mxu0 0
        %952 = vmatpush.bf16.msra.mxu0 %v943
        %953 = vmatmul.bf16.gmra.mxu0 %v940
        %v954 = vpop.f32.mrf.mxu0
        %v955 = vadd.f32 0.0, %v954
        %v956 = vpop.f32.mrf.mxu0
        %957 = vdwg.mxu0
        %959 = vrot.lane.b32.xlu0 %v955, 32
        %v960 = vpop.permute.xlu0 %959
        %v962 = vsel %vm738, %v896, %v960
        %v963 = vpack.c.bf16 %v962, %v962
        %v964 = vld [vmem:[#allocation2] sm:$0xf]
        %v965 = vld [vmem:[#allocation2 + $0x4] sm:$0xf]
        %v966 = vld [vmem:[#allocation2 + $0x8] sm:$0xf]
        %v967 = vld [vmem:[#allocation2 + $0xc] sm:$0xf]
        %v968 = vld [vmem:[#allocation2 + $0x10] sm:$0xf]
        %v969 = vld [vmem:[#allocation2 + $0x14] sm:$0xf]
        %v970 = vld [vmem:[#allocation2 + $0x18] sm:$0xf]
        %v971 = vld [vmem:[#allocation2 + $0x1c] sm:$0xf]
        %v972 = vld [vmem:[%s6] sm:$0x1]
        %v974 = vperm.slane %v972, 0
        %v984 = vunpack.c.l.b16 %v964
        %v985 = vunpack.c.l.b16 %v965
        %v986 = vunpack.c.l.b16 %v966
        %v987 = vunpack.c.l.b16 %v967
        %v988 = vunpack.c.l.b16 %v968
        %v989 = vunpack.c.l.b16 %v969
        %v990 = vunpack.c.l.b16 %v970
        %v991 = vunpack.c.l.b16 %v971
        %v992 = vpack.c.b16 %v985, %v984
        %v993 = vpack.c.b16 %v987, %v986
        %v994 = vpack.c.b16 %v989, %v988
        %v995 = vpack.c.b16 %v991, %v990
        %v1001 = vsel %vm810, %v963, 0
        %1003 = vmatpush.bf16.msra.mxu0 0
        %1004 = vmatpush.bf16.msra.mxu0 0
        %1005 = vmatpush.bf16.msra.mxu0 0
        %1006 = vmatpush.bf16.msra.mxu0 0
        %1007 = vmatpush.bf16.msra.mxu0 %v995
        %1008 = vmatpush.bf16.msra.mxu0 %v994
        %1009 = vmatpush.bf16.msra.mxu0 %v993
        %1010 = vmatpush.bf16.msra.mxu0 %v992
        %1011 = vmatmul.bf16.gmra.mxu0 %v1001
        %v1012 = vpop.f32.mrf.mxu0
        %v1013 = vadd.f32 %v974, %v1012
        %v1014 = vpop.f32.mrf.mxu0
        %1015 = vdwg.mxu0
        %v1016 = vadd.f32 %v752, %v1013
        %v1017 = vld [vmem:[%s7] sm:$0x1]
        %v1018 = vld [vmem:[%s8] sm:$0x1]
        %v1019 = vsel %vm810, %v1016, 0.0
        %1020 = vadd.xlane.f32.xlu0 %v1019
        %v1021 = vpop.xlane.xlu0 %1020
        %v1022 = vrcp.pop 64.0
        %v1023 = vmul.f32 64.0, %v1022
        %v1024 = vsub.f32 1.0, %v1023
        %v1025 = vmul.f32 %v1022, %v1024
        %v1026 = vadd.f32 %v1022, %v1025
        %vm1027 = vweird.f32 %v1022
        %v1028 = vsel %vm1027, %v1022, %v1026
        %v1029 = vmul.f32 %v1021, %v1028
        %v1030 = vsub.f32 %v1016, %v1029
        %v1031 = vmul.f32 %v1030, %v1030
        %v1032 = vsel %vm810, %v1031, 0.0
        %1033 = vadd.xlane.f32.xlu0 %v1032
        %v1034 = vpop.xlane.xlu0 %1033
        %v1035 = vmul.f32 %v1034, %v1028
        %v1036 = vadd.f32 %v1035, 1e-05
        %v1037 = vrsqrt.pop %v1036
        %v1038 = vmul.f32 %v1037, %v1036
        %v1039 = vmul.f32 %v1038, %v1037
        %v1040 = vmul.f32 0.5, %v1039
        %v1041 = vsub.f32 1.5, %v1040
        %v1042 = vmul.f32 %v1037, %v1041
        %vm1043 = vweird.f32 %v1036
        %vm1044 = vweird.f32 %v1037
        %vm1045 = vmor %vm1043, %vm1044
        %v1046 = vsel %vm1045, %v1037, %v1042
        %v1047 = vmul.f32 %v1030, %v1046
        %v1049 = vperm.slane %v1017, 0
        %v1051 = vmul.f32 %v1047, %v1049
        %v1053 = vperm.slane %v1018, 0
        %v1055 = vadd.f32 %v1051, %v1053
        %v1056 = vpack.c.bf16 %v1055, %v1055
        %v1057 = vld [vmem:[%s11] sm:$0xf]
        %v1058 = vld [vmem:[%s11 + $0x4] sm:$0xf]
        %v1059 = vld [vmem:[%s11 + $0x8] sm:$0xf]
        %v1060 = vld [vmem:[%s11 + $0xc] sm:$0xf]
        %v1061 = vld [vmem:[%s11 + $0x10] sm:$0xf]
        %v1062 = vld [vmem:[%s11 + $0x14] sm:$0xf]
        %v1063 = vld [vmem:[%s11 + $0x18] sm:$0xf]
        %v1064 = vld [vmem:[%s11 + $0x1c] sm:$0xf]
        %v1065 = vld [vmem:[#allocation6] sm:$0x1]
        %v1067 = vperm.slane %v1065, 0
        %v1077 = vunpack.c.l.b16 %v1057
        %v1078 = vunpack.c.l.b16 %v1058
        %v1079 = vunpack.c.l.b16 %v1059
        %v1080 = vunpack.c.l.b16 %v1060
        %v1081 = vunpack.c.l.b16 %v1061
        %v1082 = vunpack.c.l.b16 %v1062
        %v1083 = vunpack.c.l.b16 %v1063
        %v1084 = vunpack.c.l.b16 %v1064
        %v1085 = vpack.c.b16 %v1078, %v1077
        %v1086 = vpack.c.b16 %v1080, %v1079
        %v1087 = vpack.c.b16 %v1082, %v1081
        %v1088 = vpack.c.b16 %v1084, %v1083
        %v1094 = vsel %vm810, %v1056, 0
        %1096 = vmatpush.bf16.msra.mxu0 0
        %1097 = vmatpush.bf16.msra.mxu0 0
        %1098 = vmatpush.bf16.msra.mxu0 0
        %1099 = vmatpush.bf16.msra.mxu0 0
        %1100 = vmatpush.bf16.msra.mxu0 %v1088
        %1101 = vmatpush.bf16.msra.mxu0 %v1087
        %1102 = vmatpush.bf16.msra.mxu0 %v1086
        %1103 = vmatpush.bf16.msra.mxu0 %v1085
        %1104 = vmatmul.bf16.gmra.mxu0 %v1094
        %v1105 = vpop.f32.mrf.mxu0
        %v1106 = vadd.f32 %v1067, %v1105
        %v1107 = vpop.f32.mrf.mxu0
        %1108 = vdwg.mxu0
        %v1109 = vmax.f32 %v1106, 0.0
        %v1110 = vpack.c.bf16 %v1109, %v1109
        %v1111 = vld [vmem:[%s13] sm:$0xf]
        %v1112 = vld [vmem:[%s13 + $0x4] sm:$0xf]
        %v1113 = vld [vmem:[%s13 + $0x8] sm:$0xf]
        %v1114 = vld [vmem:[%s13 + $0xc] sm:$0xf]
        %v1115 = vld [vmem:[#allocation7] sm:$0x1]
        %v1117 = vperm.slane %v1115, 0
        %v1123 = vunpack.c.l.b16 %v1111
        %v1124 = vunpack.c.l.b16 %v1112
        %v1125 = vunpack.c.l.b16 %v1113
        %v1126 = vunpack.c.l.b16 %v1114
        %v1127 = vpack.c.b16 %v1124, %v1123
        %v1128 = vpack.c.b16 %v1126, %v1125
        %v1132 = vsel %vm738, %v1110, 0
        %1134 = vmatpush.bf16.msra.mxu0 0
        %1135 = vmatpush.bf16.msra.mxu0 0
        %1136 = vmatpush.bf16.msra.mxu0 0
        %1137 = vmatpush.bf16.msra.mxu0 0
        %1138 = vmatpush.bf16.msra.mxu0 0
        %1139 = vmatpush.bf16.msra.mxu0 0
        %1140 = vmatpush.bf16.msra.mxu0 %v1128
        %1141 = vmatpush.bf16.msra.mxu0 %v1127
        %1142 = vmatmul.bf16.gmra.mxu0 %v1132
        %v1143 = vpop.f32.mrf.mxu0
        %v1144 = vadd.f32 %v1117, %v1143
        %v1145 = vpop.f32.mrf.mxu0
        %1146 = vdwg.mxu0
        %v1147 = vadd.f32 %v1055, %v1144
        %v1148 = vld [vmem:[%s9] sm:$0x1]
        %v1149 = vld [vmem:[#allocation4] sm:$0x1]
        %v1150 = vsel %vm810, %v1147, 0.0
        %1151 = vadd.xlane.f32.xlu0 %v1150
        %v1152 = vpop.xlane.xlu0 %1151
        %v1153 = vmul.f32 %v1152, %v1028
        %v1154 = vsub.f32 %v1147, %v1153
        %v1155 = vmul.f32 %v1154, %v1154
        %v1156 = vsel %vm810, %v1155, 0.0
        %1157 = vadd.xlane.f32.xlu0 %v1156
        %v1158 = vpop.xlane.xlu0 %1157
        %v1159 = vmul.f32 %v1158, %v1028
        %v1160 = vadd.f32 %v1159, 1e-05
        %v1161 = vrsqrt.pop %v1160
        %v1162 = vmul.f32 %v1161, %v1160
        %v1163 = vmul.f32 %v1162, %v1161
        %v1164 = vmul.f32 0.5, %v1163
        %v1165 = vsub.f32 1.5, %v1164
        %v1166 = vmul.f32 %v1161, %v1165
        %vm1167 = vweird.f32 %v1160
        %vm1168 = vweird.f32 %v1161
        %vm1169 = vmor %vm1167, %vm1168
        %v1170 = vsel %vm1169, %v1161, %v1166
        %v1171 = vmul.f32 %v1154, %v1170
        %v1173 = vperm.slane %v1148, 0
        %v1175 = vmul.f32 %v1171, %v1173
        %v1177 = vperm.slane %v1149, 0
        %v1179 = vadd.f32 %v1175, %v1177
        %v1180 = vpack.c.bf16 %v1179, %v1179
        %s1181 = scalar_lea.vmem %s3, 64
        %v1182 = vld [vmem:[%s1181] sm:$0xff]
        %v1183 = vld [vmem:[%s1181 + $0x8] sm:$0xff]
        %v1184 = vld [vmem:[%s1181 + $0x10] sm:$0xff]
        %v1185 = vld [vmem:[%s1181 + $0x18] sm:$0xff]
        %v1186 = vld [vmem:[%s1181 + $0x20] sm:$0xff]
        %v1187 = vld [vmem:[%s1181 + $0x28] sm:$0xff]
        %v1188 = vld [vmem:[%s1181 + $0x30] sm:$0xff]
        %v1189 = vld [vmem:[%s1181 + $0x38] sm:$0xff]
        %s1190 = scalar_lea.vmem %s4, 2
        %v1191 = vld [vmem:[%s1190] sm:$0x3]
        %v1193 = vperm.slane %v1191, 0
        %v1194 = vperm.slane %v1191, 1
        %v1205 = vunpack.c.l.b16 %v1182
        %v1206 = vunpack.c.h.b16 %v1182
        %v1207 = vunpack.c.l.b16 %v1183
        %v1208 = vunpack.c.h.b16 %v1183
        %v1209 = vunpack.c.l.b16 %v1184
        %v1210 = vunpack.c.h.b16 %v1184
        %v1211 = vunpack.c.l.b16 %v1185
        %v1212 = vunpack.c.h.b16 %v1185
        %v1213 = vunpack.c.l.b16 %v1186
        %v1214 = vunpack.c.h.b16 %v1186
        %v1215 = vunpack.c.l.b16 %v1187
        %v1216 = vunpack.c.h.b16 %v1187
        %v1217 = vunpack.c.l.b16 %v1188
        %v1218 = vunpack.c.h.b16 %v1188
        %v1219 = vunpack.c.l.b16 %v1189
        %v1220 = vunpack.c.h.b16 %v1189
        %v1221 = vpack.c.b16 %v1207, %v1205
        %v1222 = vpack.c.b16 %v1208, %v1206
        %v1223 = vpack.c.b16 %v1211, %v1209
        %v1224 = vpack.c.b16 %v1212, %v1210
        %v1225 = vpack.c.b16 %v1215, %v1213
        %v1226 = vpack.c.b16 %v1216, %v1214
        %v1227 = vpack.c.b16 %v1219, %v1217
        %v1228 = vpack.c.b16 %v1220, %v1218
        %v1238 = vsel %vm810, %v1180, 0
        %1240 = vmatpush.bf16.msra.mxu0 0
        %1241 = vmatpush.bf16.msra.mxu0 0
        %1242 = vmatpush.bf16.msra.mxu0 0
        %1243 = vmatpush.bf16.msra.mxu0 0
        %1244 = vmatpush.bf16.msra.mxu0 %v1227
        %1245 = vmatpush.bf16.msra.mxu0 %v1225
        %1246 = vmatpush.bf16.msra.mxu0 %v1223
        %1247 = vmatpush.bf16.msra.mxu0 %v1221
        %1248 = vmatmul.bf16.gmra.mxu0 %v1238
        %v1249 = vpop.f32.mrf.mxu0
        %v1250 = vadd.f32 %v1193, %v1249
        %v1251 = vpop.f32.mrf.mxu0
        %1252 = vdwg.mxu0
        %1253 = vmatpush.bf16.msra.mxu0 0
        %1254 = vmatpush.bf16.msra.mxu0 0
        %1255 = vmatpush.bf16.msra.mxu0 0
        %1256 = vmatpush.bf16.msra.mxu0 0
        %1257 = vmatpush.bf16.msra.mxu0 %v1228
        %1258 = vmatpush.bf16.msra.mxu0 %v1226
        %1259 = vmatpush.bf16.msra.mxu0 %v1224
        %1260 = vmatpush.bf16.msra.mxu0 %v1222
        %1261 = vmatmul.bf16.gmra.mxu0 %v1238
        %v1262 = vpop.f32.mrf.mxu0
        %v1263 = vadd.f32 %v1194, %v1262
        %v1264 = vpop.f32.mrf.mxu0
        %1265 = vdwg.mxu0
        %v1266 = vpack.c.bf16 %v1250, %v1250
        %v1267 = vpack.c.bf16 %v1263, %v1263
        %v1269 = vunpack.c.l.b16 %v1266
        %v1270 = vpack.c.b16 %v1269, %v1269
        %1271 = vrot.lane.b32.xlu0 %v1270, 64
        %v1272 = vpop.permute.xlu0 %1271
        %v1274 = vsel %vm738, %v1266, 0
        %v1277 = vsel %vm738, %v1272, 0
        %1279 = vmatpush.bf16.xpose.msra.mxu0 0
        %1280 = vmatpush.bf16.xpose.msra.mxu0 0
        %1281 = vmatpush.bf16.xpose.msra.mxu0 0
        %1282 = vmatpush.bf16.xpose.msra.mxu0 0
        %1283 = vmatpush.bf16.xpose.msra.mxu0 0
        %1284 = vmatpush.bf16.xpose.msra.mxu0 0
        %1285 = vmatpush.bf16.xpose.msra.mxu0 0
        %1286 = vmatpush.bf16.xpose.msra.mxu0 %v1277
        %1287 = vmatmul.bf16.gmra.mxu0 %v1274
        %v1288 = vpop.f32.mrf.mxu0
        %v1289 = vadd.f32 0.0, %v1288
        %v1290 = vpop.f32.mrf.mxu0
        %1291 = vdwg.mxu0
        %v1292 = vsel %vm866, %v1289, -inf
        %1293 = vmax.xlane.f32.xlu0 %v1292
        %v1294 = vpop.xlane.xlu0 %1293
        %v1295 = vsub.f32 %v1289, %v1294
        %v1296 = vmul.f32 %v1295, 1.442695
        %v1297 = vpow.pop %v1296
        %v1298 = vsel %vm866, %v1297, 0.0
        %1299 = vadd.xlane.f32.xlu0 %v1298
        %v1300 = vpop.xlane.xlu0 %1299
        %v1301 = vrcp.pop %v1300
        %v1302 = vmul.f32 %v1297, %v1301
        %v1303 = vpack.c.bf16 %v1302, %v1302
        %v1305 = vsel %vm866, %v1303, 0
        %v1308 = vsel %vm882, %v1267, 0
        %1310 = vmatpush.bf16.msra.mxu0 0
        %1311 = vmatpush.bf16.msra.mxu0 0
        %1312 = vmatpush.bf16.msra.mxu0 0
        %1313 = vmatpush.bf16.msra.mxu0 0
        %1314 = vmatpush.bf16.msra.mxu0 0
        %1315 = vmatpush.bf16.msra.mxu0 0
        %1316 = vmatpush.bf16.msra.mxu0 0
        %1317 = vmatpush.bf16.msra.mxu0 %v1308
        %1318 = vmatmul.bf16.gmra.mxu0 %v1305
        %v1319 = vpop.f32.mrf.mxu0
        %v1320 = vadd.f32 0.0, %v1319
        %v1321 = vpop.f32.mrf.mxu0
        %1322 = vdwg.mxu0
        %1323 = vrot.lane.b32.xlu0 %v1270, 96
        %v1324 = vpop.permute.xlu0 %1323
        %1325 = vrot.lane.b32.xlu0 %v1270, 32
        %v1326 = vpop.permute.xlu0 %1325
        %v1328 = vsel %vm738, %v1324, 0
        %v1331 = vsel %vm738, %v1326, 0
        %1333 = vmatpush.bf16.xpose.msra.mxu0 0
        %1334 = vmatpush.bf16.xpose.msra.mxu0 0
        %1335 = vmatpush.bf16.xpose.msra.mxu0 0
        %1336 = vmatpush.bf16.xpose.msra.mxu0 0
        %1337 = vmatpush.bf16.xpose.msra.mxu0 0
        %1338 = vmatpush.bf16.xpose.msra.mxu0 0
        %1339 = vmatpush.bf16.xpose.msra.mxu0 0
        %1340 = vmatpush.bf16.xpose.msra.mxu0 %v1331
        %1341 = vmatmul.bf16.gmra.mxu0 %v1328
        %v1342 = vpop.f32.mrf.mxu0
        %v1343 = vadd.f32 0.0, %v1342
        %v1344 = vpop.f32.mrf.mxu0
        %1345 = vdwg.mxu0
        %v1346 = vsel %vm866, %v1343, -inf
        %1347 = vmax.xlane.f32.xlu0 %v1346
        %v1348 = vpop.xlane.xlu0 %1347
        %v1349 = vsub.f32 %v1343, %v1348
        %v1350 = vmul.f32 %v1349, 1.442695
        %v1351 = vpow.pop %v1350
        %v1352 = vsel %vm866, %v1351, 0.0
        %1353 = vadd.xlane.f32.xlu0 %v1352
        %v1354 = vpop.xlane.xlu0 %1353
        %v1355 = vrcp.pop %v1354
        %v1356 = vmul.f32 %v1351, %v1355
        %v1357 = vpack.c.bf16 %v1356, %v1356
        %v1359 = vunpack.c.l.b16 %v1267
        %v1360 = vpack.c.b16 %v1359, %v1359
        %1361 = vrot.lane.b32.xlu0 %v1360, 96
        %v1362 = vpop.permute.xlu0 %1361
        %v1364 = vsel %vm866, %v1357, 0
        %v1367 = vsel %vm882, %v1362, 0
        %1369 = vmatpush.bf16.msra.mxu0 0
        %1370 = vmatpush.bf16.msra.mxu0 0
        %1371 = vmatpush.bf16.msra.mxu0 0
        %1372 = vmatpush.bf16.msra.mxu0 0
        %1373 = vmatpush.bf16.msra.mxu0 0
        %1374 = vmatpush.bf16.msra.mxu0 0
        %1375 = vmatpush.bf16.msra.mxu0 0
        %1376 = vmatpush.bf16.msra.mxu0 %v1367
        %1377 = vmatmul.bf16.gmra.mxu0 %v1364
        %v1378 = vpop.f32.mrf.mxu0
        %v1379 = vadd.f32 0.0, %v1378
        %v1380 = vpop.f32.mrf.mxu0
        %1381 = vdwg.mxu0
        %1383 = vrot.lane.b32.xlu0 %v1379, 32
        %v1384 = vpop.permute.xlu0 %1383
        %v1386 = vsel %vm738, %v1320, %v1384
        %v1387 = vpack.c.bf16 %v1386, %v1386
        %s1388 = scalar_lea.vmem [#allocation2], 32
        %v1389 = vld [vmem:[%s1388] sm:$0xf]
        %v1390 = vld [vmem:[%s1388 + $0x4] sm:$0xf]
        %v1391 = vld [vmem:[%s1388 + $0x8] sm:$0xf]
        %v1392 = vld [vmem:[%s1388 + $0xc] sm:$0xf]
        %v1393 = vld [vmem:[%s1388 + $0x10] sm:$0xf]
        %v1394 = vld [vmem:[%s1388 + $0x14] sm:$0xf]
        %v1395 = vld [vmem:[%s1388 + $0x18] sm:$0xf]
        %v1396 = vld [vmem:[%s1388 + $0x1c] sm:$0xf]
        %s1397 = scalar_lea.vmem %s6, 1
        %v1398 = vld [vmem:[%s1397] sm:$0x1]
        %v1400 = vperm.slane %v1398, 0
        %v1410 = vunpack.c.l.b16 %v1389
        %v1411 = vunpack.c.l.b16 %v1390
        %v1412 = vunpack.c.l.b16 %v1391
        %v1413 = vunpack.c.l.b16 %v1392
        %v1414 = vunpack.c.l.b16 %v1393
        %v1415 = vunpack.c.l.b16 %v1394
        %v1416 = vunpack.c.l.b16 %v1395
        %v1417 = vunpack.c.l.b16 %v1396
        %v1418 = vpack.c.b16 %v1411, %v1410
        %v1419 = vpack.c.b16 %v1413, %v1412
        %v1420 = vpack.c.b16 %v1415, %v1414
        %v1421 = vpack.c.b16 %v1417, %v1416
        %v1427 = vsel %vm810, %v1387, 0
        %1429 = vmatpush.bf16.msra.mxu0 0
        %1430 = vmatpush.bf16.msra.mxu0 0
        %1431 = vmatpush.bf16.msra.mxu0 0
        %1432 = vmatpush.bf16.msra.mxu0 0
        %1433 = vmatpush.bf16.msra.mxu0 %v1421
        %1434 = vmatpush.bf16.msra.mxu0 %v1420
        %1435 = vmatpush.bf16.msra.mxu0 %v1419
        %1436 = vmatpush.bf16.msra.mxu0 %v1418
        %1437 = vmatmul.bf16.gmra.mxu0 %v1427
        %v1438 = vpop.f32.mrf.mxu0
        %v1439 = vadd.f32 %v1400, %v1438
        %v1440 = vpop.f32.mrf.mxu0
        %1441 = vdwg.mxu0
        %v1442 = vadd.f32 %v1179, %v1439
        %s1443 = scalar_lea.vmem %s7, 1
        %v1444 = vld [vmem:[%s1443] sm:$0x1]
        %s1445 = scalar_lea.vmem %s8, 1
        %v1446 = vld [vmem:[%s1445] sm:$0x1]
        %v1447 = vsel %vm810, %v1442, 0.0
        %1448 = vadd.xlane.f32.xlu0 %v1447
        %v1449 = vpop.xlane.xlu0 %1448
        %v1450 = vmul.f32 %v1449, %v1028
        %v1451 = vsub.f32 %v1442, %v1450
        %v1452 = vmul.f32 %v1451, %v1451
        %v1453 = vsel %vm810, %v1452, 0.0
        %1454 = vadd.xlane.f32.xlu0 %v1453
        %v1455 = vpop.xlane.xlu0 %1454
        %v1456 = vmul.f32 %v1455, %v1028
        %v1457 = vadd.f32 %v1456, 1e-05
        %v1458 = vrsqrt.pop %v1457
        %v1459 = vmul.f32 %v1458, %v1457
        %v1460 = vmul.f32 %v1459, %v1458
        %v1461 = vmul.f32 0.5, %v1460
        %v1462 = vsub.f32 1.5, %v1461
        %v1463 = vmul.f32 %v1458, %v1462
        %vm1464 = vweird.f32 %v1457
        %vm1465 = vweird.f32 %v1458
        %vm1466 = vmor %vm1464, %vm1465
        %v1467 = vsel %vm1466, %v1458, %v1463
        %v1468 = vmul.f32 %v1451, %v1467
        %v1470 = vperm.slane %v1444, 0
        %v1472 = vmul.f32 %v1468, %v1470
        %v1474 = vperm.slane %v1446, 0
        %v1476 = vadd.f32 %v1472, %v1474
        %v1477 = vpack.c.bf16 %v1476, %v1476
        %s1478 = scalar_lea.vmem %s11, 32
        %v1479 = vld [vmem:[%s1478] sm:$0xf]
        %v1480 = vld [vmem:[%s1478 + $0x4] sm:$0xf]
        %v1481 = vld [vmem:[%s1478 + $0x8] sm:$0xf]
        %v1482 = vld [vmem:[%s1478 + $0xc] sm:$0xf]
        %v1483 = vld [vmem:[%s1478 + $0x10] sm:$0xf]
        %v1484 = vld [vmem:[%s1478 + $0x14] sm:$0xf]
        %v1485 = vld [vmem:[%s1478 + $0x18] sm:$0xf]
        %v1486 = vld [vmem:[%s1478 + $0x1c] sm:$0xf]
        %s1487 = scalar_lea.vmem [#allocation6], 1
        %v1488 = vld [vmem:[%s1487] sm:$0x1]
        %v1490 = vperm.slane %v1488, 0
        %v1500 = vunpack.c.l.b16 %v1479
        %v1501 = vunpack.c.l.b16 %v1480
        %v1502 = vunpack.c.l.b16 %v1481
        %v1503 = vunpack.c.l.b16 %v1482
        %v1504 = vunpack.c.l.b16 %v1483
        %v1505 = vunpack.c.l.b16 %v1484
        %v1506 = vunpack.c.l.b16 %v1485
        %v1507 = vunpack.c.l.b16 %v1486
        %v1508 = vpack.c.b16 %v1501, %v1500
        %v1509 = vpack.c.b16 %v1503, %v1502
        %v1510 = vpack.c.b16 %v1505, %v1504
        %v1511 = vpack.c.b16 %v1507, %v1506
        %v1517 = vsel %vm810, %v1477, 0
        %1519 = vmatpush.bf16.msra.mxu0 0
        %1520 = vmatpush.bf16.msra.mxu0 0
        %1521 = vmatpush.bf16.msra.mxu0 0
        %1522 = vmatpush.bf16.msra.mxu0 0
        %1523 = vmatpush.bf16.msra.mxu0 %v1511
        %1524 = vmatpush.bf16.msra.mxu0 %v1510
        %1525 = vmatpush.bf16.msra.mxu0 %v1509
        %1526 = vmatpush.bf16.msra.mxu0 %v1508
        %1527 = vmatmul.bf16.gmra.mxu0 %v1517
        %v1528 = vpop.f32.mrf.mxu0
        %v1529 = vadd.f32 %v1490, %v1528
        %v1530 = vpop.f32.mrf.mxu0
        %1531 = vdwg.mxu0
        %v1532 = vmax.f32 %v1529, 0.0
        %v1533 = vpack.c.bf16 %v1532, %v1532
        %s1534 = scalar_lea.vmem %s13, 16
        %v1535 = vld [vmem:[%s1534] sm:$0xf]
        %v1536 = vld [vmem:[%s1534 + $0x4] sm:$0xf]
        %v1537 = vld [vmem:[%s1534 + $0x8] sm:$0xf]
        %v1538 = vld [vmem:[%s1534 + $0xc] sm:$0xf]
        %s1539 = scalar_lea.vmem [#allocation7], 1
        %v1540 = vld [vmem:[%s1539] sm:$0x1]
        %v1542 = vperm.slane %v1540, 0
        %v1548 = vunpack.c.l.b16 %v1535
        %v1549 = vunpack.c.l.b16 %v1536
        %v1550 = vunpack.c.l.b16 %v1537
        %v1551 = vunpack.c.l.b16 %v1538
        %v1552 = vpack.c.b16 %v1549, %v1548
        %v1553 = vpack.c.b16 %v1551, %v1550
        %v1557 = vsel %vm738, %v1533, 0
        %1559 = vmatpush.bf16.msra.mxu0 0
        %1560 = vmatpush.bf16.msra.mxu0 0
        %1561 = vmatpush.bf16.msra.mxu0 0
        %1562 = vmatpush.bf16.msra.mxu0 0
        %1563 = vmatpush.bf16.msra.mxu0 0
        %1564 = vmatpush.bf16.msra.mxu0 0
        %1565 = vmatpush.bf16.msra.mxu0 %v1553
        %1566 = vmatpush.bf16.msra.mxu0 %v1552
        %1567 = vmatmul.bf16.gmra.mxu0 %v1557
        %v1568 = vpop.f32.mrf.mxu0
        %v1569 = vadd.f32 %v1542, %v1568
        %v1570 = vpop.f32.mrf.mxu0
        %1571 = vdwg.mxu0
        %v1572 = vadd.f32 %v1476, %v1569
        %s1573 = scalar_lea.vmem %s9, 1
        %v1574 = vld [vmem:[%s1573] sm:$0x1]
        %s1575 = scalar_lea.vmem [#allocation4], 1
        %v1576 = vld [vmem:[%s1575] sm:$0x1]
        %v1577 = vsel %vm810, %v1572, 0.0
        %1578 = vadd.xlane.f32.xlu0 %v1577
        %v1579 = vpop.xlane.xlu0 %1578
        %v1580 = vmul.f32 %v1579, %v1028
        %v1581 = vsub.f32 %v1572, %v1580
        %v1582 = vmul.f32 %v1581, %v1581
        %v1583 = vsel %vm810, %v1582, 0.0
        %1584 = vadd.xlane.f32.xlu0 %v1583
        %v1585 = vpop.xlane.xlu0 %1584
        %v1586 = vmul.f32 %v1585, %v1028
        %v1587 = vadd.f32 %v1586, 1e-05
        %v1588 = vrsqrt.pop %v1587
        %v1589 = vmul.f32 %v1588, %v1587
        %v1590 = vmul.f32 %v1589, %v1588
        %v1591 = vmul.f32 0.5, %v1590
        %v1592 = vsub.f32 1.5, %v1591
        %v1593 = vmul.f32 %v1588, %v1592
        %vm1594 = vweird.f32 %v1587
        %vm1595 = vweird.f32 %v1588
        %vm1596 = vmor %vm1594, %vm1595
        %v1597 = vsel %vm1596, %v1588, %v1593
        %v1598 = vmul.f32 %v1581, %v1597
        %v1600 = vperm.slane %v1574, 0
        %v1602 = vmul.f32 %v1598, %v1600
        %v1604 = vperm.slane %v1576, 0
        %v1606 = vadd.f32 %v1602, %v1604
        %v1607 = vpack.c.bf16 %v1606, %v1606
        %s1608 = scalar_lea.vmem %s3, 128
        %v1609 = vld [vmem:[%s1608] sm:$0xff]
        %v1610 = vld [vmem:[%s1608 + $0x8] sm:$0xff]
        %v1611 = vld [vmem:[%s1608 + $0x10] sm:$0xff]
        %v1612 = vld [vmem:[%s1608 + $0x18] sm:$0xff]
        %v1613 = vld [vmem:[%s1608 + $0x20] sm:$0xff]
        %v1614 = vld [vmem:[%s1608 + $0x28] sm:$0xff]
        %v1615 = vld [vmem:[%s1608 + $0x30] sm:$0xff]
        %v1616 = vld [vmem:[%s1608 + $0x38] sm:$0xff]
        %s1617 = scalar_lea.vmem %s4, 4
        %v1618 = vld [vmem:[%s1617] sm:$0x3]
        %v1620 = vperm.slane %v1618, 0
        %v1621 = vperm.slane %v1618, 1
        %v1632 = vunpack.c.l.b16 %v1609
        %v1633 = vunpack.c.h.b16 %v1609
        %v1634 = vunpack.c.l.b16 %v1610
        %v1635 = vunpack.c.h.b16 %v1610
        %v1636 = vunpack.c.l.b16 %v1611
        %v1637 = vunpack.c.h.b16 %v1611
        %v1638 = vunpack.c.l.b16 %v1612
        %v1639 = vunpack.c.h.b16 %v1612
        %v1640 = vunpack.c.l.b16 %v1613
        %v1641 = vunpack.c.h.b16 %v1613
        %v1642 = vunpack.c.l.b16 %v1614
        %v1643 = vunpack.c.h.b16 %v1614
        %v1644 = vunpack.c.l.b16 %v1615
        %v1645 = vunpack.c.h.b16 %v1615
        %v1646 = vunpack.c.l.b16 %v1616
        %v1647 = vunpack.c.h.b16 %v1616
        %v1648 = vpack.c.b16 %v1634, %v1632
        %v1649 = vpack.c.b16 %v1635, %v1633
        %v1650 = vpack.c.b16 %v1638, %v1636
        %v1651 = vpack.c.b16 %v1639, %v1637
        %v1652 = vpack.c.b16 %v1642, %v1640
        %v1653 = vpack.c.b16 %v1643, %v1641
        %v1654 = vpack.c.b16 %v1646, %v1644
        %v1655 = vpack.c.b16 %v1647, %v1645
        %v1665 = vsel %vm810, %v1607, 0
        %1667 = vmatpush.bf16.msra.mxu0 0
        %1668 = vmatpush.bf16.msra.mxu0 0
        %1669 = vmatpush.bf16.msra.mxu0 0
        %1670 = vmatpush.bf16.msra.mxu0 0
        %1671 = vmatpush.bf16.msra.mxu0 %v1654
        %1672 = vmatpush.bf16.msra.mxu0 %v1652
        %1673 = vmatpush.bf16.msra.mxu0 %v1650
        %1674 = vmatpush.bf16.msra.mxu0 %v1648
        %1675 = vmatmul.bf16.gmra.mxu0 %v1665
        %v1676 = vpop.f32.mrf.mxu0
        %v1677 = vadd.f32 %v1620, %v1676
        %v1678 = vpop.f32.mrf.mxu0
        %1679 = vdwg.mxu0
        %1680 = vmatpush.bf16.msra.mxu0 0
        %1681 = vmatpush.bf16.msra.mxu0 0
        %1682 = vmatpush.bf16.msra.mxu0 0
        %1683 = vmatpush.bf16.msra.mxu0 0
        %1684 = vmatpush.bf16.msra.mxu0 %v1655
        %1685 = vmatpush.bf16.msra.mxu0 %v1653
        %1686 = vmatpush.bf16.msra.mxu0 %v1651
        %1687 = vmatpush.bf16.msra.mxu0 %v1649
        %1688 = vmatmul.bf16.gmra.mxu0 %v1665
        %v1689 = vpop.f32.mrf.mxu0
        %v1690 = vadd.f32 %v1621, %v1689
        %v1691 = vpop.f32.mrf.mxu0
        %1692 = vdwg.mxu0
        %v1693 = vpack.c.bf16 %v1677, %v1677
        %v1694 = vpack.c.bf16 %v1690, %v1690
        %v1696 = vunpack.c.l.b16 %v1693
        %v1697 = vpack.c.b16 %v1696, %v1696
        %1698 = vrot.lane.b32.xlu0 %v1697, 64
        %v1699 = vpop.permute.xlu0 %1698
        %v1701 = vsel %vm738, %v1693, 0
        %v1704 = vsel %vm738, %v1699, 0
        %1706 = vmatpush.bf16.xpose.msra.mxu0 0
        %1707 = vmatpush.bf16.xpose.msra.mxu0 0
        %1708 = vmatpush.bf16.xpose.msra.mxu0 0
        %1709 = vmatpush.bf16.xpose.msra.mxu0 0
        %1710 = vmatpush.bf16.xpose.msra.mxu0 0
        %1711 = vmatpush.bf16.xpose.msra.mxu0 0
        %1712 = vmatpush.bf16.xpose.msra.mxu0 0
        %1713 = vmatpush.bf16.xpose.msra.mxu0 %v1704
        %1714 = vmatmul.bf16.gmra.mxu0 %v1701
        %v1715 = vpop.f32.mrf.mxu0
        %v1716 = vadd.f32 0.0, %v1715
        %v1717 = vpop.f32.mrf.mxu0
        %1718 = vdwg.mxu0
        %v1719 = vsel %vm866, %v1716, -inf
        %1720 = vmax.xlane.f32.xlu0 %v1719
        %v1721 = vpop.xlane.xlu0 %1720
        %v1722 = vsub.f32 %v1716, %v1721
        %v1723 = vmul.f32 %v1722, 1.442695
        %v1724 = vpow.pop %v1723
        %v1725 = vsel %vm866, %v1724, 0.0
        %1726 = vadd.xlane.f32.xlu0 %v1725
        %v1727 = vpop.xlane.xlu0 %1726
        %v1728 = vrcp.pop %v1727
        %v1729 = vmul.f32 %v1724, %v1728
        %v1730 = vpack.c.bf16 %v1729, %v1729
        %v1732 = vsel %vm866, %v1730, 0
        %v1735 = vsel %vm882, %v1694, 0
        %1737 = vmatpush.bf16.msra.mxu0 0
        %1738 = vmatpush.bf16.msra.mxu0 0
        %1739 = vmatpush.bf16.msra.mxu0 0
        %1740 = vmatpush.bf16.msra.mxu0 0
        %1741 = vmatpush.bf16.msra.mxu0 0
        %1742 = vmatpush.bf16.msra.mxu0 0
        %1743 = vmatpush.bf16.msra.mxu0 0
        %1744 = vmatpush.bf16.msra.mxu0 %v1735
        %1745 = vmatmul.bf16.gmra.mxu0 %v1732
        %v1746 = vpop.f32.mrf.mxu0
        %v1747 = vadd.f32 0.0, %v1746
        %v1748 = vpop.f32.mrf.mxu0
        %1749 = vdwg.mxu0
        %1750 = vrot.lane.b32.xlu0 %v1697, 96
        %v1751 = vpop.permute.xlu0 %1750
        %1752 = vrot.lane.b32.xlu0 %v1697, 32
        %v1753 = vpop.permute.xlu0 %1752
        %v1755 = vsel %vm738, %v1751, 0
        %v1758 = vsel %vm738, %v1753, 0
        %1760 = vmatpush.bf16.xpose.msra.mxu0 0
        %1761 = vmatpush.bf16.xpose.msra.mxu0 0
        %1762 = vmatpush.bf16.xpose.msra.mxu0 0
        %1763 = vmatpush.bf16.xpose.msra.mxu0 0
        %1764 = vmatpush.bf16.xpose.msra.mxu0 0
        %1765 = vmatpush.bf16.xpose.msra.mxu0 0
        %1766 = vmatpush.bf16.xpose.msra.mxu0 0
        %1767 = vmatpush.bf16.xpose.msra.mxu0 %v1758
        %1768 = vmatmul.bf16.gmra.mxu0 %v1755
        %v1769 = vpop.f32.mrf.mxu0
        %v1770 = vadd.f32 0.0, %v1769
        %v1771 = vpop.f32.mrf.mxu0
        %1772 = vdwg.mxu0
        %v1773 = vsel %vm866, %v1770, -inf
        %1774 = vmax.xlane.f32.xlu0 %v1773
        %v1775 = vpop.xlane.xlu0 %1774
        %v1776 = vsub.f32 %v1770, %v1775
        %v1777 = vmul.f32 %v1776, 1.442695
        %v1778 = vpow.pop %v1777
        %v1779 = vsel %vm866, %v1778, 0.0
        %1780 = vadd.xlane.f32.xlu0 %v1779
        %v1781 = vpop.xlane.xlu0 %1780
        %v1782 = vrcp.pop %v1781
        %v1783 = vmul.f32 %v1778, %v1782
        %v1784 = vpack.c.bf16 %v1783, %v1783
        %v1786 = vunpack.c.l.b16 %v1694
        %v1787 = vpack.c.b16 %v1786, %v1786
        %1788 = vrot.lane.b32.xlu0 %v1787, 96
        %v1789 = vpop.permute.xlu0 %1788
        %v1791 = vsel %vm866, %v1784, 0
        %v1794 = vsel %vm882, %v1789, 0
        %1796 = vmatpush.bf16.msra.mxu0 0
        %1797 = vmatpush.bf16.msra.mxu0 0
        %1798 = vmatpush.bf16.msra.mxu0 0
        %1799 = vmatpush.bf16.msra.mxu0 0
        %1800 = vmatpush.bf16.msra.mxu0 0
        %1801 = vmatpush.bf16.msra.mxu0 0
        %1802 = vmatpush.bf16.msra.mxu0 0
        %1803 = vmatpush.bf16.msra.mxu0 %v1794
        %1804 = vmatmul.bf16.gmra.mxu0 %v1791
        %v1805 = vpop.f32.mrf.mxu0
        %v1806 = vadd.f32 0.0, %v1805
        %v1807 = vpop.f32.mrf.mxu0
        %1808 = vdwg.mxu0
        %1810 = vrot.lane.b32.xlu0 %v1806, 32
        %v1811 = vpop.permute.xlu0 %1810
        %v1813 = vsel %vm738, %v1747, %v1811
        %v1814 = vpack.c.bf16 %v1813, %v1813
        %s1815 = scalar_lea.vmem [#allocation2], 64
        %v1816 = vld [vmem:[%s1815] sm:$0xf]
        %v1817 = vld [vmem:[%s1815 + $0x4] sm:$0xf]
        %v1818 = vld [vmem:[%s1815 + $0x8] sm:$0xf]
        %v1819 = vld [vmem:[%s1815 + $0xc] sm:$0xf]
        %v1820 = vld [vmem:[%s1815 + $0x10] sm:$0xf]
        %v1821 = vld [vmem:[%s1815 + $0x14] sm:$0xf]
        %v1822 = vld [vmem:[%s1815 + $0x18] sm:$0xf]
        %v1823 = vld [vmem:[%s1815 + $0x1c] sm:$0xf]
        %s1824 = scalar_lea.vmem %s6, 2
        %v1825 = vld [vmem:[%s1824] sm:$0x1]
        %v1827 = vperm.slane %v1825, 0
        %v1837 = vunpack.c.l.b16 %v1816
        %v1838 = vunpack.c.l.b16 %v1817
        %v1839 = vunpack.c.l.b16 %v1818
        %v1840 = vunpack.c.l.b16 %v1819
        %v1841 = vunpack.c.l.b16 %v1820
        %v1842 = vunpack.c.l.b16 %v1821
        %v1843 = vunpack.c.l.b16 %v1822
        %v1844 = vunpack.c.l.b16 %v1823
        %v1845 = vpack.c.b16 %v1838, %v1837
        %v1846 = vpack.c.b16 %v1840, %v1839
        %v1847 = vpack.c.b16 %v1842, %v1841
        %v1848 = vpack.c.b16 %v1844, %v1843
        %v1854 = vsel %vm810, %v1814, 0
        %1856 = vmatpush.bf16.msra.mxu0 0
        %1857 = vmatpush.bf16.msra.mxu0 0
        %1858 = vmatpush.bf16.msra.mxu0 0
        %1859 = vmatpush.bf16.msra.mxu0 0
        %1860 = vmatpush.bf16.msra.mxu0 %v1848
        %1861 = vmatpush.bf16.msra.mxu0 %v1847
        %1862 = vmatpush.bf16.msra.mxu0 %v1846
        %1863 = vmatpush.bf16.msra.mxu0 %v1845
        %1864 = vmatmul.bf16.gmra.mxu0 %v1854
        %v1865 = vpop.f32.mrf.mxu0
        %v1866 = vadd.f32 %v1827, %v1865
        %v1867 = vpop.f32.mrf.mxu0
        %1868 = vdwg.mxu0
        %v1869 = vadd.f32 %v1606, %v1866
        %s1870 = scalar_lea.vmem %s7, 2
        %v1871 = vld [vmem:[%s1870] sm:$0x1]
        %s1872 = scalar_lea.vmem %s8, 2
        %v1873 = vld [vmem:[%s1872] sm:$0x1]
        %v1874 = vsel %vm810, %v1869, 0.0
        %1875 = vadd.xlane.f32.xlu0 %v1874
        %v1876 = vpop.xlane.xlu0 %1875
        %v1877 = vmul.f32 %v1876, %v1028
        %v1878 = vsub.f32 %v1869, %v1877
        %v1879 = vmul.f32 %v1878, %v1878
        %v1880 = vsel %vm810, %v1879, 0.0
        %1881 = vadd.xlane.f32.xlu0 %v1880
        %v1882 = vpop.xlane.xlu0 %1881
        %v1883 = vmul.f32 %v1882, %v1028
        %v1884 = vadd.f32 %v1883, 1e-05
        %v1885 = vrsqrt.pop %v1884
        %v1886 = vmul.f32 %v1885, %v1884
        %v1887 = vmul.f32 %v1886, %v1885
        %v1888 = vmul.f32 0.5, %v1887
        %v1889 = vsub.f32 1.5, %v1888
        %v1890 = vmul.f32 %v1885, %v1889
        %vm1891 = vweird.f32 %v1884
        %vm1892 = vweird.f32 %v1885
        %vm1893 = vmor %vm1891, %vm1892
        %v1894 = vsel %vm1893, %v1885, %v1890
        %v1895 = vmul.f32 %v1878, %v1894
        %v1897 = vperm.slane %v1871, 0
        %v1899 = vmul.f32 %v1895, %v1897
        %v1901 = vperm.slane %v1873, 0
        %v1903 = vadd.f32 %v1899, %v1901
        %v1904 = vpack.c.bf16 %v1903, %v1903
        %s1905 = scalar_lea.vmem %s11, 64
        %v1906 = vld [vmem:[%s1905] sm:$0xf]
        %v1907 = vld [vmem:[%s1905 + $0x4] sm:$0xf]
        %v1908 = vld [vmem:[%s1905 + $0x8] sm:$0xf]
        %v1909 = vld [vmem:[%s1905 + $0xc] sm:$0xf]
        %v1910 = vld [vmem:[%s1905 + $0x10] sm:$0xf]
        %v1911 = vld [vmem:[%s1905 + $0x14] sm:$0xf]
        %v1912 = vld [vmem:[%s1905 + $0x18] sm:$0xf]
        %v1913 = vld [vmem:[%s1905 + $0x1c] sm:$0xf]
        %s1914 = scalar_lea.vmem [#allocation6], 2
        %v1915 = vld [vmem:[%s1914] sm:$0x1]
        %v1917 = vperm.slane %v1915, 0
        %v1927 = vunpack.c.l.b16 %v1906
        %v1928 = vunpack.c.l.b16 %v1907
        %v1929 = vunpack.c.l.b16 %v1908
        %v1930 = vunpack.c.l.b16 %v1909
        %v1931 = vunpack.c.l.b16 %v1910
        %v1932 = vunpack.c.l.b16 %v1911
        %v1933 = vunpack.c.l.b16 %v1912
        %v1934 = vunpack.c.l.b16 %v1913
        %v1935 = vpack.c.b16 %v1928, %v1927
        %v1936 = vpack.c.b16 %v1930, %v1929
        %v1937 = vpack.c.b16 %v1932, %v1931
        %v1938 = vpack.c.b16 %v1934, %v1933
        %v1944 = vsel %vm810, %v1904, 0
        %1946 = vmatpush.bf16.msra.mxu0 0
        %1947 = vmatpush.bf16.msra.mxu0 0
        %1948 = vmatpush.bf16.msra.mxu0 0
        %1949 = vmatpush.bf16.msra.mxu0 0
        %1950 = vmatpush.bf16.msra.mxu0 %v1938
        %1951 = vmatpush.bf16.msra.mxu0 %v1937
        %1952 = vmatpush.bf16.msra.mxu0 %v1936
        %1953 = vmatpush.bf16.msra.mxu0 %v1935
        %1954 = vmatmul.bf16.gmra.mxu0 %v1944
        %v1955 = vpop.f32.mrf.mxu0
        %v1956 = vadd.f32 %v1917, %v1955
        %v1957 = vpop.f32.mrf.mxu0
        %1958 = vdwg.mxu0
        %v1959 = vmax.f32 %v1956, 0.0
        %v1960 = vpack.c.bf16 %v1959, %v1959
        %s1961 = scalar_lea.vmem %s13, 32
        %v1962 = vld [vmem:[%s1961] sm:$0xf]
        %v1963 = vld [vmem:[%s1961 + $0x4] sm:$0xf]
        %v1964 = vld [vmem:[%s1961 + $0x8] sm:$0xf]
        %v1965 = vld [vmem:[%s1961 + $0xc] sm:$0xf]
        %s1966 = scalar_lea.vmem [#allocation7], 2
        %v1967 = vld [vmem:[%s1966] sm:$0x1]
        %v1969 = vperm.slane %v1967, 0
        %v1975 = vunpack.c.l.b16 %v1962
        %v1976 = vunpack.c.l.b16 %v1963
        %v1977 = vunpack.c.l.b16 %v1964
        %v1978 = vunpack.c.l.b16 %v1965
        %v1979 = vpack.c.b16 %v1976, %v1975
        %v1980 = vpack.c.b16 %v1978, %v1977
        %v1984 = vsel %vm738, %v1960, 0
        %1986 = vmatpush.bf16.msra.mxu0 0
        %1987 = vmatpush.bf16.msra.mxu0 0
        %1988 = vmatpush.bf16.msra.mxu0 0
        %1989 = vmatpush.bf16.msra.mxu0 0
        %1990 = vmatpush.bf16.msra.mxu0 0
        %1991 = vmatpush.bf16.msra.mxu0 0
        %1992 = vmatpush.bf16.msra.mxu0 %v1980
        %1993 = vmatpush.bf16.msra.mxu0 %v1979
        %1994 = vmatmul.bf16.gmra.mxu0 %v1984
        %v1995 = vpop.f32.mrf.mxu0
        %v1996 = vadd.f32 %v1969, %v1995
        %v1997 = vpop.f32.mrf.mxu0
        %1998 = vdwg.mxu0
        %v1999 = vadd.f32 %v1903, %v1996
        %s2000 = scalar_lea.vmem %s9, 2
        %v2001 = vld [vmem:[%s2000] sm:$0x1]
        %s2002 = scalar_lea.vmem [#allocation4], 2
        %v2003 = vld [vmem:[%s2002] sm:$0x1]
        %v2004 = vsel %vm810, %v1999, 0.0
        %2005 = vadd.xlane.f32.xlu0 %v2004
        %v2006 = vpop.xlane.xlu0 %2005
        %v2007 = vmul.f32 %v2006, %v1028
        %v2008 = vsub.f32 %v1999, %v2007
        %v2009 = vmul.f32 %v2008, %v2008
        %v2010 = vsel %vm810, %v2009, 0.0
        %2011 = vadd.xlane.f32.xlu0 %v2010
        %v2012 = vpop.xlane.xlu0 %2011
        %v2013 = vmul.f32 %v2012, %v1028
        %v2014 = vadd.f32 %v2013, 1e-05
        %v2015 = vrsqrt.pop %v2014
        %v2016 = vmul.f32 %v2015, %v2014
        %v2017 = vmul.f32 %v2016, %v2015
        %v2018 = vmul.f32 0.5, %v2017
        %v2019 = vsub.f32 1.5, %v2018
        %v2020 = vmul.f32 %v2015, %v2019
        %vm2021 = vweird.f32 %v2014
        %vm2022 = vweird.f32 %v2015
        %vm2023 = vmor %vm2021, %vm2022
        %v2024 = vsel %vm2023, %v2015, %v2020
        %v2025 = vmul.f32 %v2008, %v2024
        %v2027 = vperm.slane %v2001, 0
        %v2029 = vmul.f32 %v2025, %v2027
        %v2031 = vperm.slane %v2003, 0
        %v2033 = vadd.f32 %v2029, %v2031
        %v2034 = vpack.c.bf16 %v2033, %v2033
        %s2035 = scalar_lea.vmem %s3, 192
        %v2036 = vld [vmem:[%s2035] sm:$0xff]
        %v2037 = vld [vmem:[%s2035 + $0x8] sm:$0xff]
        %v2038 = vld [vmem:[%s2035 + $0x10] sm:$0xff]
        %v2039 = vld [vmem:[%s2035 + $0x18] sm:$0xff]
        %v2040 = vld [vmem:[%s2035 + $0x20] sm:$0xff]
        %v2041 = vld [vmem:[%s2035 + $0x28] sm:$0xff]
        %v2042 = vld [vmem:[%s2035 + $0x30] sm:$0xff]
        %v2043 = vld [vmem:[%s2035 + $0x38] sm:$0xff]
        %s2044 = scalar_lea.vmem %s4, 6
        %v2045 = vld [vmem:[%s2044] sm:$0x3]
        %v2047 = vperm.slane %v2045, 0
        %v2048 = vperm.slane %v2045, 1
        %v2059 = vunpack.c.l.b16 %v2036
        %v2060 = vunpack.c.h.b16 %v2036
        %v2061 = vunpack.c.l.b16 %v2037
        %v2062 = vunpack.c.h.b16 %v2037
        %v2063 = vunpack.c.l.b16 %v2038
        %v2064 = vunpack.c.h.b16 %v2038
        %v2065 = vunpack.c.l.b16 %v2039
        %v2066 = vunpack.c.h.b16 %v2039
        %v2067 = vunpack.c.l.b16 %v2040
        %v2068 = vunpack.c.h.b16 %v2040
        %v2069 = vunpack.c.l.b16 %v2041
        %v2070 = vunpack.c.h.b16 %v2041
        %v2071 = vunpack.c.l.b16 %v2042
        %v2072 = vunpack.c.h.b16 %v2042
        %v2073 = vunpack.c.l.b16 %v2043
        %v2074 = vunpack.c.h.b16 %v2043
        %v2075 = vpack.c.b16 %v2061, %v2059
        %v2076 = vpack.c.b16 %v2062, %v2060
        %v2077 = vpack.c.b16 %v2065, %v2063
        %v2078 = vpack.c.b16 %v2066, %v2064
        %v2079 = vpack.c.b16 %v2069, %v2067
        %v2080 = vpack.c.b16 %v2070, %v2068
        %v2081 = vpack.c.b16 %v2073, %v2071
        %v2082 = vpack.c.b16 %v2074, %v2072
        %v2092 = vsel %vm810, %v2034, 0
        %2094 = vmatpush.bf16.msra.mxu0 0
        %2095 = vmatpush.bf16.msra.mxu0 0
        %2096 = vmatpush.bf16.msra.mxu0 0
        %2097 = vmatpush.bf16.msra.mxu0 0
        %2098 = vmatpush.bf16.msra.mxu0 %v2081
        %2099 = vmatpush.bf16.msra.mxu0 %v2079
        %2100 = vmatpush.bf16.msra.mxu0 %v2077
        %2101 = vmatpush.bf16.msra.mxu0 %v2075
        %2102 = vmatmul.bf16.gmra.mxu0 %v2092
        %v2103 = vpop.f32.mrf.mxu0
        %v2104 = vadd.f32 %v2047, %v2103
        %v2105 = vpop.f32.mrf.mxu0
        %2106 = vdwg.mxu0
        %2107 = vmatpush.bf16.msra.mxu0 0
        %2108 = vmatpush.bf16.msra.mxu0 0
        %2109 = vmatpush.bf16.msra.mxu0 0
        %2110 = vmatpush.bf16.msra.mxu0 0
        %2111 = vmatpush.bf16.msra.mxu0 %v2082
        %2112 = vmatpush.bf16.msra.mxu0 %v2080
        %2113 = vmatpush.bf16.msra.mxu0 %v2078
        %2114 = vmatpush.bf16.msra.mxu0 %v2076
        %2115 = vmatmul.bf16.gmra.mxu0 %v2092
        %v2116 = vpop.f32.mrf.mxu0
        %v2117 = vadd.f32 %v2048, %v2116
        %v2118 = vpop.f32.mrf.mxu0
        %2119 = vdwg.mxu0
        %v2120 = vpack.c.bf16 %v2104, %v2104
        %v2121 = vpack.c.bf16 %v2117, %v2117
        %v2123 = vunpack.c.l.b16 %v2120
        %v2124 = vpack.c.b16 %v2123, %v2123
        %2125 = vrot.lane.b32.xlu0 %v2124, 64
        %v2126 = vpop.permute.xlu0 %2125
        %v2128 = vsel %vm738, %v2120, 0
        %v2131 = vsel %vm738, %v2126, 0
        %2133 = vmatpush.bf16.xpose.msra.mxu0 0
        %2134 = vmatpush.bf16.xpose.msra.mxu0 0
        %2135 = vmatpush.bf16.xpose.msra.mxu0 0
        %2136 = vmatpush.bf16.xpose.msra.mxu0 0
        %2137 = vmatpush.bf16.xpose.msra.mxu0 0
        %2138 = vmatpush.bf16.xpose.msra.mxu0 0
        %2139 = vmatpush.bf16.xpose.msra.mxu0 0
        %2140 = vmatpush.bf16.xpose.msra.mxu0 %v2131
        %2141 = vmatmul.bf16.gmra.mxu0 %v2128
        %v2142 = vpop.f32.mrf.mxu0
        %v2143 = vadd.f32 0.0, %v2142
        %v2144 = vpop.f32.mrf.mxu0
        %2145 = vdwg.mxu0
        %v2146 = vsel %vm866, %v2143, -inf
        %2147 = vmax.xlane.f32.xlu0 %v2146
        %v2148 = vpop.xlane.xlu0 %2147
        %v2149 = vsub.f32 %v2143, %v2148
        %v2150 = vmul.f32 %v2149, 1.442695
        %v2151 = vpow.pop %v2150
        %v2152 = vsel %vm866, %v2151, 0.0
        %2153 = vadd.xlane.f32.xlu0 %v2152
        %v2154 = vpop.xlane.xlu0 %2153
        %v2155 = vrcp.pop %v2154
        %v2156 = vmul.f32 %v2151, %v2155
        %v2157 = vpack.c.bf16 %v2156, %v2156
        %v2159 = vsel %vm866, %v2157, 0
        %v2162 = vsel %vm882, %v2121, 0
        %2164 = vmatpush.bf16.msra.mxu0 0
        %2165 = vmatpush.bf16.msra.mxu0 0
        %2166 = vmatpush.bf16.msra.mxu0 0
        %2167 = vmatpush.bf16.msra.mxu0 0
        %2168 = vmatpush.bf16.msra.mxu0 0
        %2169 = vmatpush.bf16.msra.mxu0 0
        %2170 = vmatpush.bf16.msra.mxu0 0
        %2171 = vmatpush.bf16.msra.mxu0 %v2162
        %2172 = vmatmul.bf16.gmra.mxu0 %v2159
        %v2173 = vpop.f32.mrf.mxu0
        %v2174 = vadd.f32 0.0, %v2173
        %v2175 = vpop.f32.mrf.mxu0
        %2176 = vdwg.mxu0
        %2177 = vrot.lane.b32.xlu0 %v2124, 96
        %v2178 = vpop.permute.xlu0 %2177
        %2179 = vrot.lane.b32.xlu0 %v2124, 32
        %v2180 = vpop.permute.xlu0 %2179
        %v2182 = vsel %vm738, %v2178, 0
        %v2185 = vsel %vm738, %v2180, 0
        %2187 = vmatpush.bf16.xpose.msra.mxu0 0
        %2188 = vmatpush.bf16.xpose.msra.mxu0 0
        %2189 = vmatpush.bf16.xpose.msra.mxu0 0
        %2190 = vmatpush.bf16.xpose.msra.mxu0 0
        %2191 = vmatpush.bf16.xpose.msra.mxu0 0
        %2192 = vmatpush.bf16.xpose.msra.mxu0 0
        %2193 = vmatpush.bf16.xpose.msra.mxu0 0
        %2194 = vmatpush.bf16.xpose.msra.mxu0 %v2185
        %2195 = vmatmul.bf16.gmra.mxu0 %v2182
        %v2196 = vpop.f32.mrf.mxu0
        %v2197 = vadd.f32 0.0, %v2196
        %v2198 = vpop.f32.mrf.mxu0
        %2199 = vdwg.mxu0
        %v2200 = vsel %vm866, %v2197, -inf
        %2201 = vmax.xlane.f32.xlu0 %v2200
        %v2202 = vpop.xlane.xlu0 %2201
        %v2203 = vsub.f32 %v2197, %v2202
        %v2204 = vmul.f32 %v2203, 1.442695
        %v2205 = vpow.pop %v2204
        %v2206 = vsel %vm866, %v2205, 0.0
        %2207 = vadd.xlane.f32.xlu0 %v2206
        %v2208 = vpop.xlane.xlu0 %2207
        %v2209 = vrcp.pop %v2208
        %v2210 = vmul.f32 %v2205, %v2209
        %v2211 = vpack.c.bf16 %v2210, %v2210
        %v2213 = vunpack.c.l.b16 %v2121
        %v2214 = vpack.c.b16 %v2213, %v2213
        %2215 = vrot.lane.b32.xlu0 %v2214, 96
        %v2216 = vpop.permute.xlu0 %2215
        %v2218 = vsel %vm866, %v2211, 0
        %v2221 = vsel %vm882, %v2216, 0
        %2223 = vmatpush.bf16.msra.mxu0 0
        %2224 = vmatpush.bf16.msra.mxu0 0
        %2225 = vmatpush.bf16.msra.mxu0 0
        %2226 = vmatpush.bf16.msra.mxu0 0
        %2227 = vmatpush.bf16.msra.mxu0 0
        %2228 = vmatpush.bf16.msra.mxu0 0
        %2229 = vmatpush.bf16.msra.mxu0 0
        %2230 = vmatpush.bf16.msra.mxu0 %v2221
        %2231 = vmatmul.bf16.gmra.mxu0 %v2218
        %v2232 = vpop.f32.mrf.mxu0
        %v2233 = vadd.f32 0.0, %v2232
        %v2234 = vpop.f32.mrf.mxu0
        %2235 = vdwg.mxu0
        %2237 = vrot.lane.b32.xlu0 %v2233, 32
        %v2238 = vpop.permute.xlu0 %2237
        %v2240 = vsel %vm738, %v2174, %v2238
        %v2241 = vpack.c.bf16 %v2240, %v2240
        %s2242 = scalar_lea.vmem [#allocation2], 96
        %v2243 = vld [vmem:[%s2242] sm:$0xf]
        %v2244 = vld [vmem:[%s2242 + $0x4] sm:$0xf]
        %v2245 = vld [vmem:[%s2242 + $0x8] sm:$0xf]
        %v2246 = vld [vmem:[%s2242 + $0xc] sm:$0xf]
        %v2247 = vld [vmem:[%s2242 + $0x10] sm:$0xf]
        %v2248 = vld [vmem:[%s2242 + $0x14] sm:$0xf]
        %v2249 = vld [vmem:[%s2242 + $0x18] sm:$0xf]
        %v2250 = vld [vmem:[%s2242 + $0x1c] sm:$0xf]
        %s2251 = scalar_lea.vmem %s6, 3
        %v2252 = vld [vmem:[%s2251] sm:$0x1]
        %v2254 = vperm.slane %v2252, 0
        %v2264 = vunpack.c.l.b16 %v2243
        %v2265 = vunpack.c.l.b16 %v2244
        %v2266 = vunpack.c.l.b16 %v2245
        %v2267 = vunpack.c.l.b16 %v2246
        %v2268 = vunpack.c.l.b16 %v2247
        %v2269 = vunpack.c.l.b16 %v2248
        %v2270 = vunpack.c.l.b16 %v2249
        %v2271 = vunpack.c.l.b16 %v2250
        %v2272 = vpack.c.b16 %v2265, %v2264
        %v2273 = vpack.c.b16 %v2267, %v2266
        %v2274 = vpack.c.b16 %v2269, %v2268
        %v2275 = vpack.c.b16 %v2271, %v2270
        %v2281 = vsel %vm810, %v2241, 0
        %2283 = vmatpush.bf16.msra.mxu0 0
        %2284 = vmatpush.bf16.msra.mxu0 0
        %2285 = vmatpush.bf16.msra.mxu0 0
        %2286 = vmatpush.bf16.msra.mxu0 0
        %2287 = vmatpush.bf16.msra.mxu0 %v2275
        %2288 = vmatpush.bf16.msra.mxu0 %v2274
        %2289 = vmatpush.bf16.msra.mxu0 %v2273
        %2290 = vmatpush.bf16.msra.mxu0 %v2272
        %2291 = vmatmul.bf16.gmra.mxu0 %v2281
        %v2292 = vpop.f32.mrf.mxu0
        %v2293 = vadd.f32 %v2254, %v2292
        %v2294 = vpop.f32.mrf.mxu0
        %2295 = vdwg.mxu0
        %v2296 = vadd.f32 %v2033, %v2293
        %s2297 = scalar_lea.vmem %s7, 3
        %v2298 = vld [vmem:[%s2297] sm:$0x1]
        %s2299 = scalar_lea.vmem %s8, 3
        %v2300 = vld [vmem:[%s2299] sm:$0x1]
        %v2301 = vsel %vm810, %v2296, 0.0
        %2302 = vadd.xlane.f32.xlu0 %v2301
        %v2303 = vpop.xlane.xlu0 %2302
        %v2304 = vmul.f32 %v2303, %v1028
        %v2305 = vsub.f32 %v2296, %v2304
        %v2306 = vmul.f32 %v2305, %v2305
        %v2307 = vsel %vm810, %v2306, 0.0
        %2308 = vadd.xlane.f32.xlu0 %v2307
        %v2309 = vpop.xlane.xlu0 %2308
        %v2310 = vmul.f32 %v2309, %v1028
        %v2311 = vadd.f32 %v2310, 1e-05
        %v2312 = vrsqrt.pop %v2311
        %v2313 = vmul.f32 %v2312, %v2311
        %v2314 = vmul.f32 %v2313, %v2312
        %v2315 = vmul.f32 0.5, %v2314
        %v2316 = vsub.f32 1.5, %v2315
        %v2317 = vmul.f32 %v2312, %v2316
        %vm2318 = vweird.f32 %v2311
        %vm2319 = vweird.f32 %v2312
        %vm2320 = vmor %vm2318, %vm2319
        %v2321 = vsel %vm2320, %v2312, %v2317
        %v2322 = vmul.f32 %v2305, %v2321
        %v2324 = vperm.slane %v2298, 0
        %v2326 = vmul.f32 %v2322, %v2324
        %v2328 = vperm.slane %v2300, 0
        %v2330 = vadd.f32 %v2326, %v2328
        %v2331 = vpack.c.bf16 %v2330, %v2330
        %s2332 = scalar_lea.vmem %s11, 96
        %v2333 = vld [vmem:[%s2332] sm:$0xf]
        %v2334 = vld [vmem:[%s2332 + $0x4] sm:$0xf]
        %v2335 = vld [vmem:[%s2332 + $0x8] sm:$0xf]
        %v2336 = vld [vmem:[%s2332 + $0xc] sm:$0xf]
        %v2337 = vld [vmem:[%s2332 + $0x10] sm:$0xf]
        %v2338 = vld [vmem:[%s2332 + $0x14] sm:$0xf]
        %v2339 = vld [vmem:[%s2332 + $0x18] sm:$0xf]
        %v2340 = vld [vmem:[%s2332 + $0x1c] sm:$0xf]
        %s2341 = scalar_lea.vmem [#allocation6], 3
        %v2342 = vld [vmem:[%s2341] sm:$0x1]
        %v2344 = vperm.slane %v2342, 0
        %v2354 = vunpack.c.l.b16 %v2333
        %v2355 = vunpack.c.l.b16 %v2334
        %v2356 = vunpack.c.l.b16 %v2335
        %v2357 = vunpack.c.l.b16 %v2336
        %v2358 = vunpack.c.l.b16 %v2337
        %v2359 = vunpack.c.l.b16 %v2338
        %v2360 = vunpack.c.l.b16 %v2339
        %v2361 = vunpack.c.l.b16 %v2340
        %v2362 = vpack.c.b16 %v2355, %v2354
        %v2363 = vpack.c.b16 %v2357, %v2356
        %v2364 = vpack.c.b16 %v2359, %v2358
        %v2365 = vpack.c.b16 %v2361, %v2360
        %v2371 = vsel %vm810, %v2331, 0
        %2373 = vmatpush.bf16.msra.mxu0 0
        %2374 = vmatpush.bf16.msra.mxu0 0
        %2375 = vmatpush.bf16.msra.mxu0 0
        %2376 = vmatpush.bf16.msra.mxu0 0
        %2377 = vmatpush.bf16.msra.mxu0 %v2365
        %2378 = vmatpush.bf16.msra.mxu0 %v2364
        %2379 = vmatpush.bf16.msra.mxu0 %v2363
        %2380 = vmatpush.bf16.msra.mxu0 %v2362
        %2381 = vmatmul.bf16.gmra.mxu0 %v2371
        %v2382 = vpop.f32.mrf.mxu0
        %v2383 = vadd.f32 %v2344, %v2382
        %v2384 = vpop.f32.mrf.mxu0
        %2385 = vdwg.mxu0
        %v2386 = vmax.f32 %v2383, 0.0
        %v2387 = vpack.c.bf16 %v2386, %v2386
        %s2388 = scalar_lea.vmem %s13, 48
        %v2389 = vld [vmem:[%s2388] sm:$0xf]
        %v2390 = vld [vmem:[%s2388 + $0x4] sm:$0xf]
        %v2391 = vld [vmem:[%s2388 + $0x8] sm:$0xf]
        %v2392 = vld [vmem:[%s2388 + $0xc] sm:$0xf]
        %s2393 = scalar_lea.vmem [#allocation7], 3
        %v2394 = vld [vmem:[%s2393] sm:$0x1]
        %v2396 = vperm.slane %v2394, 0
        %v2402 = vunpack.c.l.b16 %v2389
        %v2403 = vunpack.c.l.b16 %v2390
        %v2404 = vunpack.c.l.b16 %v2391
        %v2405 = vunpack.c.l.b16 %v2392
        %v2406 = vpack.c.b16 %v2403, %v2402
        %v2407 = vpack.c.b16 %v2405, %v2404
        %v2411 = vsel %vm738, %v2387, 0
        %2413 = vmatpush.bf16.msra.mxu0 0
        %2414 = vmatpush.bf16.msra.mxu0 0
        %2415 = vmatpush.bf16.msra.mxu0 0
        %2416 = vmatpush.bf16.msra.mxu0 0
        %2417 = vmatpush.bf16.msra.mxu0 0
        %2418 = vmatpush.bf16.msra.mxu0 0
        %2419 = vmatpush.bf16.msra.mxu0 %v2407
        %2420 = vmatpush.bf16.msra.mxu0 %v2406
        %2421 = vmatmul.bf16.gmra.mxu0 %v2411
        %v2422 = vpop.f32.mrf.mxu0
        %v2423 = vadd.f32 %v2396, %v2422
        %v2424 = vpop.f32.mrf.mxu0
        %2425 = vdwg.mxu0
        %v2426 = vadd.f32 %v2330, %v2423
        %s2427 = scalar_lea.vmem %s9, 3
        %v2428 = vld [vmem:[%s2427] sm:$0x1]
        %s2429 = scalar_lea.vmem [#allocation4], 3
        %v2430 = vld [vmem:[%s2429] sm:$0x1]
        %v2431 = vsel %vm810, %v2426, 0.0
        %2432 = vadd.xlane.f32.xlu0 %v2431
        %v2433 = vpop.xlane.xlu0 %2432
        %v2434 = vmul.f32 %v2433, %v1028
        %v2435 = vsub.f32 %v2426, %v2434
        %v2436 = vmul.f32 %v2435, %v2435
        %v2437 = vsel %vm810, %v2436, 0.0
        %2438 = vadd.xlane.f32.xlu0 %v2437
        %v2439 = vpop.xlane.xlu0 %2438
        %v2440 = vmul.f32 %v2439, %v1028
        %v2441 = vadd.f32 %v2440, 1e-05
        %v2442 = vrsqrt.pop %v2441
        %v2443 = vmul.f32 %v2442, %v2441
        %v2444 = vmul.f32 %v2443, %v2442
        %v2445 = vmul.f32 0.5, %v2444
        %v2446 = vsub.f32 1.5, %v2445
        %v2447 = vmul.f32 %v2442, %v2446
        %vm2448 = vweird.f32 %v2441
        %vm2449 = vweird.f32 %v2442
        %vm2450 = vmor %vm2448, %vm2449
        %v2451 = vsel %vm2450, %v2442, %v2447
        %v2452 = vmul.f32 %v2435, %v2451
        %v2454 = vperm.slane %v2428, 0
        %v2456 = vmul.f32 %v2452, %v2454
        %v2458 = vperm.slane %v2430, 0
        %v2460 = vadd.f32 %v2456, %v2458
        %v2461 = vld [vmem:[%s15] sm:$0x1]
        %v2462 = vld [vmem:[#allocation9] sm:$0x1]
        %v2463 = vsel %vm810, %v2460, 0.0
        %2464 = vadd.xlane.f32.xlu0 %v2463
        %v2465 = vpop.xlane.xlu0 %2464
        %v2466 = vmul.f32 %v2465, %v1028
        %v2467 = vsub.f32 %v2460, %v2466
        %v2468 = vmul.f32 %v2467, %v2467
        %v2469 = vsel %vm810, %v2468, 0.0
        %2470 = vadd.xlane.f32.xlu0 %v2469
        %v2471 = vpop.xlane.xlu0 %2470
        %v2472 = vmul.f32 %v2471, %v1028
        %v2473 = vadd.f32 %v2472, 1e-05
        %v2474 = vrsqrt.pop %v2473
        %v2475 = vmul.f32 %v2474, %v2473
        %v2476 = vmul.f32 %v2475, %v2474
        %v2477 = vmul.f32 0.5, %v2476
        %v2478 = vsub.f32 1.5, %v2477
        %v2479 = vmul.f32 %v2474, %v2478
        %vm2480 = vweird.f32 %v2473
        %vm2481 = vweird.f32 %v2474
        %vm2482 = vmor %vm2480, %vm2481
        %v2483 = vsel %vm2482, %v2474, %v2479
        %v2484 = vmul.f32 %v2467, %v2483
        %v2486 = vperm.slane %v2461, 0
        %v2488 = vmul.f32 %v2484, %v2486
        %v2490 = vperm.slane %v2462, 0
        %v2492 = vadd.f32 %v2488, %v2490
        %v2493 = vpack.c.bf16 %v2492, %v2492
        %v2494 = vld [vmem:[#allocation10] sm:$0xf]
        %v2495 = vld [vmem:[#allocation10 + $0x4] sm:$0xf]
        %v2496 = vld [vmem:[#allocation10 + $0x8] sm:$0xf]
        %v2497 = vld [vmem:[#allocation10 + $0xc] sm:$0xf]
        %v2498 = vld [vmem:[#allocation10 + $0x10] sm:$0xf]
        %v2499 = vld [vmem:[#allocation10 + $0x14] sm:$0xf]
        %v2500 = vld [vmem:[#allocation10 + $0x18] sm:$0xf]
        %v2501 = vld [vmem:[#allocation10 + $0x1c] sm:$0xf]
        %v2502 = vld [vmem:[#allocation12] sm:$0x1]
        %v2504 = vperm.slane %v2502, 0
        %v2514 = vunpack.c.l.b16 %v2494
        %v2515 = vunpack.c.l.b16 %v2495
        %v2516 = vunpack.c.l.b16 %v2496
        %v2517 = vunpack.c.l.b16 %v2497
        %v2518 = vunpack.c.l.b16 %v2498
        %v2519 = vunpack.c.l.b16 %v2499
        %v2520 = vunpack.c.l.b16 %v2500
        %v2521 = vunpack.c.l.b16 %v2501
        %v2522 = vpack.c.b16 %v2515, %v2514
        %v2523 = vpack.c.b16 %v2517, %v2516
        %v2524 = vpack.c.b16 %v2519, %v2518
        %v2525 = vpack.c.b16 %v2521, %v2520
        %v2531 = vsel %vm810, %v2493, 0
        %2533 = vmatpush.bf16.msra.mxu0 0
        %2534 = vmatpush.bf16.msra.mxu0 0
        %2535 = vmatpush.bf16.msra.mxu0 0
        %2536 = vmatpush.bf16.msra.mxu0 0
        %2537 = vmatpush.bf16.msra.mxu0 %v2525
        %2538 = vmatpush.bf16.msra.mxu0 %v2524
        %2539 = vmatpush.bf16.msra.mxu0 %v2523
        %2540 = vmatpush.bf16.msra.mxu0 %v2522
        %2541 = vmatmul.bf16.gmra.mxu0 %v2531
        %v2542 = vpop.f32.mrf.mxu0
        %v2543 = vadd.f32 %v2504, %v2542
        %v2544 = vpop.f32.mrf.mxu0
        %2545 = vdwg.mxu0
        %2546 = vst [vmem:[%s709] sm:$0xff] %v2543
        %p2547 = scmp.lt.s32.totalorder %s34, 1
        %s2548 = scalar_select %p2547, %s34, 1
        %s2549 = smul.addr %s2548, 8
        %s2550 = scalar_lea.vmem %s19, %s2549
        // Predicated region
        $region125: #{protein_transformer_forward.1} parent=95 // pred_check
          %p2551 = pneg %p456
        $region126: #{protein_transformer_forward.1} parent=95 // pred_check_branch
          %2553 = sbr.rel (%p2551) target = $region128
        $region127: #{protein_transformer_forward.1} parent=95 // pred_region
          _
        $region128: #{protein_transformer_forward.1} parent=95 // pred_fallthru
          _
      $region96: #{protein_transformer_forward.1} parent=5 // pred_fallthru
        _
      %p2554 = scmp.le.s32.totalorder 2, %s29
      // Predicated region
      $region129: #{protein_transformer_forward.1} parent=5 // pred_check
        %p2555 = pneg %p2554
      $region130: #{protein_transformer_forward.1} parent=5 // pred_check_branch
        %2557 = sbr.rel (%p2555) target = $region132
      $region131: #{protein_transformer_forward.1} parent=5 // pred_region
        %s2558 = ssub.s32 %s29, 2
        // Predicated region
        $region133: #{protein_transformer_forward.1} parent=131 // pred_check
          %p2559 = pneg %p462
        $region134: #{protein_transformer_forward.1} parent=131 // pred_check_branch
          %2561 = sbr.rel (%p2559) target = $region136
        $region135: #{protein_transformer_forward.1} parent=131 // pred_region
          %p2562 = scmp.lt.s32.totalorder %s35, 1
          %s2563 = scalar_select %p2562, %s35, 1
          %s2564 = smul.addr %s2563, 8
          %s2565 = scalar_lea.vmem %s19, %s2564
        $region136: #{protein_transformer_forward.1} parent=131 // pred_fallthru
          _
      $region132: #{protein_transformer_forward.1} parent=5 // pred_fallthru
        _
    $region6: #{protein_transformer_forward.1} parent=1 // loop_footer
      %s33 = sadd.s32 1, %s29
    $region7: #{protein_transformer_forward.1} parent=1 // loop_footer_branch
      %28 = sbr.rel target = $region3
    $region8: #{protein_transformer_forward.1} parent=1 // loop_exit
      _
    %2566 = vsyncpa [#allocation3], 1
    %s2567 = scalar_lea.sflag [#allocation3], 1
    %2568 = vsyncpa %s2567, 1
    %2569 = vsyncpa [#allocation5], 1
    %2570 = vsyncpa [#allocation8], 1
    %2571 = vsyncpa [#allocation11], 1

</llo_original>
